<compile_context>
chip_gen: v7x
topology: tpu7x:2x2x1
jax: 0.10.0
libtpu: 0.0.40
codegen_flags: <defaults>
</compile_context>

<pallas_src>
import numpy as np
import jax
import jax.numpy as jnp
from jax.experimental import pallas as pl
from jax.experimental.pallas import tpu as pltpu

LATENT_DIMS = 16
IN_CH = 4
COND_DIM = 4
IMG = 16
FEAT_CH = 64
FEAT_SP = IMG // 4          # 4x4 bottleneck feature map
FLAT = FEAT_CH * FEAT_SP * FEAT_SP   # 1024


# ---------------------------------------------------------------------------
# Parameters (PyTorch layout) and one-time conversion to the kernel layout
# ---------------------------------------------------------------------------
def init_params(key):
    ks = jax.random.split(key, 6)
    s = 0.05
    return {
        "enc_conv1_w": s * jax.random.normal(ks[0], (32, IN_CH, 3, 3), jnp.float32),
        "enc_conv1_b": jnp.zeros((32,), jnp.float32),
        "enc_conv2_w": s * jax.random.normal(ks[1], (FEAT_CH, 32, 3, 3), jnp.float32),
        "enc_conv2_b": jnp.zeros((FEAT_CH,), jnp.float32),
        "enc_fc_w": s * jax.random.normal(ks[2], (FLAT + COND_DIM, LATENT_DIMS), jnp.float32),
        "enc_fc_b": jnp.zeros((LATENT_DIMS,), jnp.float32),
        "dec_fc_w": s * jax.random.normal(ks[3], (LATENT_DIMS + COND_DIM, FLAT), jnp.float32),
        "dec_fc_b": jnp.zeros((FLAT,), jnp.float32),
        "dec_deconv1_w": s * jax.random.normal(ks[4], (FEAT_CH, 32, 3, 3), jnp.float32),
        "dec_deconv1_b": jnp.zeros((32,), jnp.float32),
        "dec_deconv2_w": s * jax.random.normal(ks[5], (32, IN_CH, 3, 3), jnp.float32),
        "dec_deconv2_b": jnp.zeros((IN_CH,), jnp.float32),
    }


def _conv_row_toeplitz(w_oihw, win, stride, pad):
    """Per-kernel-row (di) Toeplitz of a Conv2d weight: (3, Win*Cin, Wout*Cout).
    The W axis (incl. stride / zero padding) is folded into the matmul."""
    cout, cin, kh, kw = w_oihw.shape
    wout = (win + 2 * pad - kw) // stride + 1
    t = np.zeros((kh, win * cin, wout * cout), np.float32)
    for di in range(kh):
        for wo in range(wout):
            for dj in range(kw):
                wi = stride * wo + dj - pad
                if 0 <= wi < win:
                    t[di, wi * cin:(wi + 1) * cin, wo * cout:(wo + 1) * cout] = \
                        w_oihw[:, :, di, dj].T
    return t


def _convT_row_toeplitz(w_iohw, win, stride, pad, outpad):
    """Per-kernel-row Toeplitz of a ConvTranspose2d weight (stride-2 upsample in
    W folded into the matmul): (3, Win*Cin, Wout*Cout)."""
    cin, cout, kh, kw = w_iohw.shape
    wout = (win - 1) * stride - 2 * pad + kw + outpad
    t = np.zeros((kh, win * cin, wout * cout), np.float32)
    for di in range(kh):
        for wi in range(win):
            for dj in range(kw):
                wo = stride * wi + dj - pad
                if 0 <= wo < wout:
                    t[di, wi * cin:(wi + 1) * cin, wo * cout:(wo + 1) * cout] = \
                        w_iohw[:, :, di, dj]
    return t


def prepare_params(params):
    """One-time layout conversion (outside the jitted forward): bf16 Toeplitz
    weight matrices, (h,w,c)-permuted FC weights, lane-tiled f32 biases."""
    f32, bf16 = jnp.float32, jnp.bfloat16
    w1 = np.asarray(params["enc_conv1_w"], np.float32)
    w2 = np.asarray(params["enc_conv2_w"], np.float32)
    wd1 = np.asarray(params["dec_deconv1_w"], np.float32)
    wd2 = np.asarray(params["dec_deconv2_w"], np.float32)
    wfc = np.asarray(params["enc_fc_w"], np.float32)      # (1028, 16)
    wdf = np.asarray(params["dec_fc_w"], np.float32)      # (20, 1024)

    t1 = _conv_row_toeplitz(w1, win=16, stride=2, pad=1)            # (3, 64, 256)
    t2 = _conv_row_toeplitz(w2, win=8, stride=2, pad=1)             # (3, 256, 256)
    u1 = _convT_row_toeplitz(wd1, win=4, stride=2, pad=1, outpad=1)  # (3, 256, 256)
    u2 = _convT_row_toeplitz(wd2, win=8, stride=2, pad=1, outpad=1)  # (3, 256, 64)

    # enc_fc rows: PyTorch flatten order (c,h,w)  ->  kernel order (h,w,c)
    wfc_sp = wfc[:FLAT].reshape(64, 4, 4, 16).transpose(1, 2, 0, 3).reshape(FLAT, 16)
    wfc_c = wfc[FLAT:]
    # dec_fc cols: PyTorch .view(B,64,4,4) order (c,h,w) -> kernel order (h,w,c)
    wdf_p = wdf.reshape(20, 64, 4, 4).transpose(0, 2, 3, 1).reshape(20, FLAT)
    bd_p = np.asarray(params["dec_fc_b"], np.float32).reshape(64, 4, 4) \
             .transpose(1, 2, 0).reshape(1, FLAT)

    def tile_bias(b, wout):
        return jnp.asarray(np.tile(np.asarray(b, np.float32), wout).reshape(1, -1), f32)

    return {
        "T1": jnp.asarray(t1, bf16), "b1": tile_bias(params["enc_conv1_b"], 8),
        "T2": jnp.asarray(t2, bf16), "b2": tile_bias(params["enc_conv2_b"], 4),
        "Wfc": jnp.asarray(wfc_sp, bf16), "Wfcc": jnp.asarray(wfc_c, bf16),
        "bfc": jnp.asarray(np.asarray(params["enc_fc_b"]).reshape(1, 16), f32),
        "Wdz": jnp.asarray(wdf_p[:LATENT_DIMS], bf16),
        "Wdc": jnp.asarray(wdf_p[LATENT_DIMS:], bf16),
        "bd": jnp.asarray(bd_p, f32),
        "U1": jnp.asarray(u1, bf16), "bu1": tile_bias(params["dec_deconv1_b"], 8),
        "U2": jnp.asarray(u2, bf16), "bu2": tile_bias(params["dec_deconv2_b"], 16),
    }


# ---------------------------------------------------------------------------
# The single fused kernel (one grid step == one batch element)
# ---------------------------------------------------------------------------
def _cae_kernel(x_ref, c_ref, t1_ref, b1_ref, t2_ref, b2_ref,
                wfc_ref, wfcc_ref, bfc_ref, wdz_ref, wdc_ref, bd_ref,
                u1_ref, bu1_ref, u2_ref, bu2_ref, out_ref, asm_ref):
    f32 = jnp.float32
    bf16 = jnp.bfloat16
    b = pl.program_id(0)

    def mm(a, w):  # bf16 MXU matmul, f32 accumulation
        return jnp.dot(a.astype(bf16), w, preferred_element_type=f32)

    # ---- encoder conv1 (3x3, stride 2, pad 1, 4->32, relu) -----------------
    # x rows are grouped by (h mod 4): R_r[m] = image row 4m+r, cols = (w, c).
    r0 = x_ref[pl.ds(0, 4), :]
    r1 = x_ref[pl.ds(4, 4), :]
    r2 = x_ref[pl.ds(8, 4), :]
    r3 = x_ref[pl.ds(12, 4), :]
    # shifted block [zero; R3[0:3]]  == image rows -1, 3, 7, 11
    asm_ref[pl.ds(0, 1), pl.ds(0, 64)] = jnp.zeros((1, 64), f32)
    asm_ref[pl.ds(1, 3), pl.ds(0, 64)] = r3[0:3, :].astype(f32)
    s = asm_ref[pl.ds(0, 4), pl.ds(0, 64)]
    b1 = b1_ref[...]
    # parity-split conv1 outputs: E1 rows ho=0,2,4,6 ; O1 rows ho=1,3,5,7
    e1 = jnp.maximum(mm(s, t1_ref[0]) + mm(r0, t1_ref[1]) + mm(r1, t1_ref[2]) + b1, 0.0)
    o1 = jnp.maximum(mm(r1, t1_ref[0]) + mm(r2, t1_ref[1]) + mm(r3, t1_ref[2]) + b1, 0.0)

    # ---- encoder conv2 (3x3, stride 2, pad 1, 32->64, relu) ----------------
    asm_ref[pl.ds(0, 1), :] = jnp.zeros((1, 256), f32)
    asm_ref[pl.ds(1, 3), :] = o1[0:3, :]
    so = asm_ref[pl.ds(0, 4), :]                 # [zero; O1[0:3]]
    a2 = jnp.maximum(mm(so, t2_ref[0]) + mm(e1, t2_ref[1]) + mm(o1, t2_ref[2])
                     + b2_ref[...], 0.0)          # (4, 256) rows h, cols (w, c)

    # ---- encoder FC (flatten + condition vector), linear -------------------
    cvec = c_ref[pl.ds(b, 1), :]                 # (1, 4)
    z = bfc_ref[...] + mm(cvec, wfcc_ref[...])
    for h in range(4):
        z = z + mm(a2[h:h + 1, :], wfc_ref[pl.ds(h * 256, 256), :])

    # ---- decoder FC (relu), rows re-assembled as (4, 256) = (h, (w, c)) ----
    d = jnp.maximum(mm(z, wdz_ref[...]) + mm(cvec, wdc_ref[...]) + bd_ref[...], 0.0)
    for h in range(4):
        asm_ref[pl.ds(h, 1), :] = d[:, h * 256:(h + 1) * 256]
    asm_ref[pl.ds(4, 1), :] = jnp.zeros((1, 256), f32)
    dblk = asm_ref[pl.ds(0, 4), :]               # rows h = 0..3
    dup = asm_ref[pl.ds(1, 4), :]                # rows h = 1..3, zero

    # ---- deconv1 (3x3, stride 2, pad 1, out_pad 1, 64->32, relu) -----------
    bu1 = bu1_ref[...]
    e2 = jnp.maximum(mm(dblk, u1_ref[1]) + bu1, 0.0)                       # h' = 0,2,4,6
    o2 = jnp.maximum(mm(dblk, u1_ref[2]) + mm(dup, u1_ref[0]) + bu1, 0.0)  # h' = 1,3,5,7

    # ---- deconv2 (3x3, stride 2, pad 1, out_pad 1, 32->4, sigmoid) ---------
    asm_ref[pl.ds(0, 4), :] = e2
    asm_ref[pl.ds(4, 1), :] = jnp.zeros((1, 256), f32)
    e2u = asm_ref[pl.ds(1, 4), :]                # [E2[1:4]; zero]
    bu2 = bu2_ref[...]
    g0 = jax.nn.sigmoid(mm(e2, u2_ref[1]) + bu2)                      # h'' = 4m
    g1 = jax.nn.sigmoid(mm(e2, u2_ref[2]) + mm(o2, u2_ref[0]) + bu2)  # h'' = 4m+1
    g2 = jax.nn.sigmoid(mm(o2, u2_ref[1]) + bu2)                      # h'' = 4m+2
    g3 = jax.nn.sigmoid(mm(o2, u2_ref[2]) + mm(e2u, u2_ref[0]) + bu2)  # h'' = 4m+3
    out_ref[pl.ds(0, 4), :] = g0
    out_ref[pl.ds(4, 4), :] = g1
    out_ref[pl.ds(8, 4), :] = g2
    out_ref[pl.ds(12, 4), :] = g3


def cae_forward(prep, x_nchw, c):
    """Full forward pass; one fused pallas_call plus cheap input/output layout."""
    B = x_nchw.shape[0]
    assert x_nchw.shape[1:] == (IN_CH, IMG, IMG)

    # input layout: rows = (b, h mod 4, h div 4), cols = (w, c); bf16 operands
    xh = jnp.transpose(x_nchw, (0, 2, 3, 1)).reshape(B, IMG, IMG * IN_CH)
    xg = xh.reshape(B, 4, 4, IMG * IN_CH).transpose(0, 2, 1, 3)
    xg = xg.reshape(B * IMG, IMG * IN_CH).astype(jnp.bfloat16)
    cf = c.astype(jnp.float32)

    out2d = pl.pallas_call(
        _cae_kernel,
        out_shape=jax.ShapeDtypeStruct((B * 16, IMG * IN_CH), jnp.float32),
        grid=(B,),
        in_specs=[
            pl.BlockSpec((16, IMG * IN_CH), lambda i: (i, 0)),       # x (per batch)
            pl.BlockSpec((B, COND_DIM), lambda i: (0, 0)),           # c (resident)
            pl.BlockSpec((3, 64, 256), lambda i: (0, 0, 0)),         # T1
            pl.BlockSpec((1, 256), lambda i: (0, 0)),                # b1
            pl.BlockSpec((3, 256, 256), lambda i: (0, 0, 0)),        # T2
            pl.BlockSpec((1, 256), lambda i: (0, 0)),                # b2
            pl.BlockSpec((FLAT, 16), lambda i: (0, 0)),              # Wfc
            pl.BlockSpec((COND_DIM, 16), lambda i: (0, 0)),          # Wfc (cond)
            pl.BlockSpec((1, 16), lambda i: (0, 0)),                 # bfc
            pl.BlockSpec((LATENT_DIMS, FLAT), lambda i: (0, 0)),     # Wdz
            pl.BlockSpec((COND_DIM, FLAT), lambda i: (0, 0)),        # Wdc
            pl.BlockSpec((1, FLAT), lambda i: (0, 0)),               # bd
            pl.BlockSpec((3, 256, 256), lambda i: (0, 0, 0)),        # U1
            pl.BlockSpec((1, 256), lambda i: (0, 0)),                # bu1
            pl.BlockSpec((3, 256, 64), lambda i: (0, 0, 0)),         # U2
            pl.BlockSpec((1, 64), lambda i: (0, 0)),                 # bu2
        ],
        out_specs=pl.BlockSpec((16, IMG * IN_CH), lambda i: (i, 0)),
        scratch_shapes=[pltpu.VMEM((5, 256), jnp.float32)],
        compiler_params=pltpu.CompilerParams(
            dimension_semantics=("parallel",),
            vmem_limit_bytes=32 * 1024 * 1024),
        cost_estimate=pl.CostEstimate(flops=10_000_000,
                                      transcendentals=4096,
                                      bytes_accessed=1_200_000),
    )(xg, cf, prep["T1"], prep["b1"], prep["T2"], prep["b2"],
      prep["Wfc"], prep["Wfcc"], prep["bfc"], prep["Wdz"], prep["Wdc"],
      prep["bd"], prep["U1"], prep["bu1"], prep["U2"], prep["bu2"])

    # rows = (b, g, m) with output image row h = 4m + g; cols = (w, c) -> NCHW
    y = out2d.reshape(B, 4, 4, IMG, IN_CH)
    return jnp.transpose(y, (0, 4, 2, 1, 3)).reshape(B, IN_CH, IMG, IMG)


# ---------------------------------------------------------------------------
# Pure-JAX reference (previous, review-validated im2col implementation)
# ---------------------------------------------------------------------------
def _act(x, act):
    if act == "relu":
        return jnp.maximum(x, 0.0)
    if act == "sigmoid":
        return jax.nn.sigmoid(x)
    return x


def _im2col_ref(x, k, stride, pad):
    B, H, W, C = x.shape
    xp = jnp.pad(x, ((0, 0), (pad, pad), (pad, pad), (0, 0)))
    Ho = (H + 2 * pad - k) // stride + 1
    Wo = (W + 2 * pad - k) // stride + 1
    cols = [xp[:, di:di + stride * Ho:stride, dj:dj + stride * Wo:stride, :]
            for di in range(k) for dj in range(k)]
    col = jnp.stack(cols, axis=3)
    return col.reshape(B * Ho * Wo, k * k * C), Ho, Wo


def _conv2d_ref(x, w_pt, b, stride, pad, act):
    Cout, Cin, k, _ = w_pt.shape
    B = x.shape[0]
    col, Ho, Wo = _im2col_ref(x, k, stride, pad)
    w_mat = jnp.transpose(w_pt, (2, 3, 1, 0)).reshape(k * k * Cin, Cout)
    return _act(col @ w_mat + b, act).reshape(B, Ho, Wo, Cout)


def _convT2d_ref(x, w_pt, b, stride, pad, opad, act):
    B, H, W, Cin = x.shape
    _, Cout, k, _ = w_pt.shape
    Hd, Wd = (H - 1) * stride + 1, (W - 1) * stride + 1
    xd = jnp.zeros((B, Hd, Wd, Cin), x.dtype).at[:, ::stride, ::stride, :].set(x)
    p = k - 1 - pad
    xp = jnp.pad(xd, ((0, 0), (p, p + opad), (p, p + opad), (0, 0)))
    w_flip = jnp.flip(w_pt, axis=(2, 3))
    w_mat = jnp.transpose(w_flip, (2, 3, 0, 1)).reshape(k * k * Cin, Cout)
    col, Ho, Wo = _im2col_ref(xp, k, 1, 0)
    return _act(col @ w_mat + b, act).reshape(B, Ho, Wo, Cout)


def cae_forward_ref(params, x_nchw, c):
    x = jnp.transpose(x_nchw, (0, 2, 3, 1))
    h = _conv2d_ref(x, params["enc_conv1_w"], params["enc_conv1_b"], 2, 1, "relu")
    h = _conv2d_ref(h, params["enc_conv2_w"], params["enc_conv2_b"], 2, 1, "relu")
    B = x.shape[0]
    flat = jnp.transpose(h, (0, 3, 1, 2)).reshape(B, -1)
    z = jnp.concatenate([flat, c], axis=1) @ params["enc_fc_w"] + params["enc_fc_b"]
    d = _act(jnp.concatenate([z, c], axis=1) @ params["dec_fc_w"] + params["dec_fc_b"], "relu")
    d = jnp.transpose(d.reshape(B, FEAT_CH, FEAT_SP, FEAT_SP), (0, 2, 3, 1))
    u = _convT2d_ref(d, params["dec_deconv1_w"], params["dec_deconv1_b"], 2, 1, 1, "relu")
    u = _convT2d_ref(u, params["dec_deconv2_w"], params["dec_deconv2_b"], 2, 1, 1, "sigmoid")
    return jnp.transpose(u, (0, 3, 1, 2))


# ---------------------------------------------------------------------------
if __name__ == "__main__":
    key = jax.random.PRNGKey(0)
    k_param, k_x, k_c = jax.random.split(key, 3)

    params = init_params(k_param)
    x = jax.random.normal(k_x, (2, IN_CH, IMG, IMG), jnp.float32)   # NCHW
    c = jax.random.normal(k_c, (2, COND_DIM), jnp.float32)

    prep = prepare_params(params)          # one-time layout / bf16 conversion
    fwd = jax.jit(cae_forward)
    out = fwd(prep, x, c)
    jax.block_until_ready(out)

    assert out.shape == (2, IN_CH, IMG, IMG), out.shape
    assert bool(jnp.all(jnp.isfinite(out)))

    ref = cae_forward_ref(params, x, c)
    err = float(jnp.max(jnp.abs(out - ref)))
    assert err < 5e-2, f"mismatch vs pure-JAX reference: {err}"
    print("KERNEL_OK")
</pallas_src>

<mosaic_0001>
module attributes {stable_mosaic.version = 11 : i64} {
  func.func @_cae_kernel(%arg0: i32, %arg1: memref<16x64xbf16, #tpu.memory_space<vmem>>, %arg2: memref<2x4xf32, #tpu.memory_space<vmem>>, %arg3: memref<3x64x256xbf16, #tpu.memory_space<vmem>>, %arg4: memref<1x256xf32, #tpu.memory_space<vmem>>, %arg5: memref<3x256x256xbf16, #tpu.memory_space<vmem>>, %arg6: memref<1x256xf32, #tpu.memory_space<vmem>>, %arg7: memref<1024x16xbf16, #tpu.memory_space<vmem>>, %arg8: memref<4x16xbf16, #tpu.memory_space<vmem>>, %arg9: memref<1x16xf32, #tpu.memory_space<vmem>>, %arg10: memref<16x1024xbf16, #tpu.memory_space<vmem>>, %arg11: memref<4x1024xbf16, #tpu.memory_space<vmem>>, %arg12: memref<1x1024xf32, #tpu.memory_space<vmem>>, %arg13: memref<3x256x256xbf16, #tpu.memory_space<vmem>>, %arg14: memref<1x256xf32, #tpu.memory_space<vmem>>, %arg15: memref<3x256x64xbf16, #tpu.memory_space<vmem>>, %arg16: memref<1x64xf32, #tpu.memory_space<vmem>>, %arg17: memref<16x64xf32, #tpu.memory_space<vmem>>, %arg18: memref<5x256xf32, #tpu.memory_space<vmem>>) attributes {dimension_semantics = [#tpu.dimension_semantics<parallel>], iteration_bounds = array<i64: 2>, scalar_prefetch = 0 : i64, scratch_operands = 1 : i64, tpu.core_type = #tpu.core_type<tc>, window_params = [{transform_indices = @transform_0, window_bounds = array<i64: 16, 64>}, {pipeline_mode = #tpu.pipeline_mode<synchronous>, transform_indices = @transform_1, window_bounds = array<i64: 2, 4>}, {pipeline_mode = #tpu.pipeline_mode<synchronous>, transform_indices = @transform_2, window_bounds = array<i64: 3, 64, 256>}, {pipeline_mode = #tpu.pipeline_mode<synchronous>, transform_indices = @transform_3, window_bounds = array<i64: 1, 256>}, {pipeline_mode = #tpu.pipeline_mode<synchronous>, transform_indices = @transform_4, window_bounds = array<i64: 3, 256, 256>}, {pipeline_mode = #tpu.pipeline_mode<synchronous>, transform_indices = @transform_5, window_bounds = array<i64: 1, 256>}, {pipeline_mode = #tpu.pipeline_mode<synchronous>, transform_indices = @transform_6, window_bounds = array<i64: 1024, 16>}, {pipeline_mode = #tpu.pipeline_mode<synchronous>, transform_indices = @transform_7, window_bounds = array<i64: 4, 16>}, {pipeline_mode = #tpu.pipeline_mode<synchronous>, transform_indices = @transform_8, window_bounds = array<i64: 1, 16>}, {pipeline_mode = #tpu.pipeline_mode<synchronous>, transform_indices = @transform_9, window_bounds = array<i64: 16, 1024>}, {pipeline_mode = #tpu.pipeline_mode<synchronous>, transform_indices = @transform_10, window_bounds = array<i64: 4, 1024>}, {pipeline_mode = #tpu.pipeline_mode<synchronous>, transform_indices = @transform_11, window_bounds = array<i64: 1, 1024>}, {pipeline_mode = #tpu.pipeline_mode<synchronous>, transform_indices = @transform_12, window_bounds = array<i64: 3, 256, 256>}, {pipeline_mode = #tpu.pipeline_mode<synchronous>, transform_indices = @transform_13, window_bounds = array<i64: 1, 256>}, {pipeline_mode = #tpu.pipeline_mode<synchronous>, transform_indices = @transform_14, window_bounds = array<i64: 3, 256, 64>}, {pipeline_mode = #tpu.pipeline_mode<synchronous>, transform_indices = @transform_15, window_bounds = array<i64: 1, 64>}, {transform_indices = @transform_16, window_bounds = array<i64: 16, 64>}]} {
    %c0 = arith.constant 0 : index
    %c0_0 = arith.constant 0 : index
    %0 = vector.load %arg1[%c0, %c0_0] : memref<16x64xbf16, #tpu.memory_space<vmem>>, vector<4x64xbf16>
    %c4 = arith.constant 4 : index
    %c0_1 = arith.constant 0 : index
    %1 = vector.load %arg1[%c4, %c0_1] : memref<16x64xbf16, #tpu.memory_space<vmem>>, vector<4x64xbf16>
    %c8 = arith.constant 8 : index
    %c0_2 = arith.constant 0 : index
    %2 = vector.load %arg1[%c8, %c0_2] : memref<16x64xbf16, #tpu.memory_space<vmem>>, vector<4x64xbf16>
    %c12 = arith.constant 12 : index
    %c0_3 = arith.constant 0 : index
    %3 = vector.load %arg1[%c12, %c0_3] : memref<16x64xbf16, #tpu.memory_space<vmem>>, vector<4x64xbf16>
    %cst = arith.constant 0.000000e+00 : f32
    %4 = vector.broadcast %cst : f32 to vector<1x64xf32>
    %c0_4 = arith.constant 0 : index
    %c0_5 = arith.constant 0 : index
    %5 = vector.load %arg18[%c0_4, %c0_5] : memref<5x256xf32, #tpu.memory_space<vmem>>, vector<1x64xf32>
    tpu.vector_store %arg18[%c0_4, %c0_5], %4 {strides = array<i32>} : memref<5x256xf32, #tpu.memory_space<vmem>>, vector<1x64xf32>,
    %6 = vector.extract_strided_slice %3 {offsets = [0, 0], sizes = [3, 64], strides = [1, 1]} : vector<4x64xbf16> to vector<3x64xbf16>
    %7 = arith.extf %6 : vector<3x64xbf16> to vector<3x64xf32>
    %c1 = arith.constant 1 : index
    %c0_6 = arith.constant 0 : index
    %8 = vector.load %arg18[%c1, %c0_6] : memref<5x256xf32, #tpu.memory_space<vmem>>, vector<3x64xf32>
    tpu.vector_store %arg18[%c1, %c0_6], %7 {strides = array<i32>} : memref<5x256xf32, #tpu.memory_space<vmem>>, vector<3x64xf32>,
    %c0_7 = arith.constant 0 : index
    %c0_8 = arith.constant 0 : index
    %9 = vector.load %arg18[%c0_7, %c0_8] : memref<5x256xf32, #tpu.memory_space<vmem>>, vector<4x64xf32>
    %c0_9 = arith.constant 0 : index
    %c0_10 = arith.constant 0 : index
    %10 = vector.load %arg4[%c0_9, %c0_10] : memref<1x256xf32, #tpu.memory_space<vmem>>, vector<1x256xf32>
    %c0_11 = arith.constant 0 : index
    %c0_12 = arith.constant 0 : index
    %c0_13 = arith.constant 0 : index
    %11 = vector.load %arg3[%c0_11, %c0_12, %c0_13] : memref<3x64x256xbf16, #tpu.memory_space<vmem>>, vector<1x64x256xbf16>
    %12 = vector.shape_cast %11 : vector<1x64x256xbf16> to vector<64x256xbf16>
    %13 = arith.truncf %9 : vector<4x64xf32> to vector<4x64xbf16>
    %cst_14 = arith.constant dense<0.000000e+00> : vector<4x256xf32>
    %14 = tpu.matmul %13, %12, %cst_14 {dimension_numbers = #tpu.dot_dimension_numbers<[1], [0], [0], [1], [0, 0, 1, 1], [], []>} : vector<4x64xbf16>, vector<64x256xbf16>, vector<4x256xf32> -> vector<4x256xf32>
    %c1_15 = arith.constant 1 : index
    %c0_16 = arith.constant 0 : index
    %c0_17 = arith.constant 0 : index
    %15 = vector.load %arg3[%c1_15, %c0_16, %c0_17] : memref<3x64x256xbf16, #tpu.memory_space<vmem>>, vector<1x64x256xbf16>
    %16 = vector.shape_cast %15 : vector<1x64x256xbf16> to vector<64x256xbf16>
    %cst_18 = arith.constant dense<0.000000e+00> : vector<4x256xf32>
    %17 = tpu.matmul %0, %16, %cst_18 {dimension_numbers = #tpu.dot_dimension_numbers<[1], [0], [0], [1], [0, 0, 1, 1], [], []>} : vector<4x64xbf16>, vector<64x256xbf16>, vector<4x256xf32> -> vector<4x256xf32>
    %18 = arith.addf %14, %17 : vector<4x256xf32>
    %c2 = arith.constant 2 : index
    %c0_19 = arith.constant 0 : index
    %c0_20 = arith.constant 0 : index
    %19 = vector.load %arg3[%c2, %c0_19, %c0_20] : memref<3x64x256xbf16, #tpu.memory_space<vmem>>, vector<1x64x256xbf16>
    %20 = vector.shape_cast %19 : vector<1x64x256xbf16> to vector<64x256xbf16>
    %cst_21 = arith.constant dense<0.000000e+00> : vector<4x256xf32>
    %21 = tpu.matmul %1, %20, %cst_21 {dimension_numbers = #tpu.dot_dimension_numbers<[1], [0], [0], [1], [0, 0, 1, 1], [], []>} : vector<4x64xbf16>, vector<64x256xbf16>, vector<4x256xf32> -> vector<4x256xf32>
    %22 = arith.addf %18, %21 : vector<4x256xf32>
    %23 = vector.broadcast %10 : vector<1x256xf32> to vector<4x256xf32>
    %24 = arith.addf %22, %23 : vector<4x256xf32>
    %cst_22 = arith.constant 0.000000e+00 : f32
    %25 = vector.broadcast %cst_22 : f32 to vector<4x256xf32>
    %26 = arith.maximumf %24, %25 : vector<4x256xf32>
    %c0_23 = arith.constant 0 : index
    %c0_24 = arith.constant 0 : index
    %c0_25 = arith.constant 0 : index
    %27 = vector.load %arg3[%c0_23, %c0_24, %c0_25] : memref<3x64x256xbf16, #tpu.memory_space<vmem>>, vector<1x64x256xbf16>
    %28 = vector.shape_cast %27 : vector<1x64x256xbf16> to vector<64x256xbf16>
    %cst_26 = arith.constant dense<0.000000e+00> : vector<4x256xf32>
    %29 = tpu.matmul %1, %28, %cst_26 {dimension_numbers = #tpu.dot_dimension_numbers<[1], [0], [0], [1], [0, 0, 1, 1], [], []>} : vector<4x64xbf16>, vector<64x256xbf16>, vector<4x256xf32> -> vector<4x256xf32>
    %c1_27 = arith.constant 1 : index
    %c0_28 = arith.constant 0 : index
    %c0_29 = arith.constant 0 : index
    %30 = vector.load %arg3[%c1_27, %c0_28, %c0_29] : memref<3x64x256xbf16, #tpu.memory_space<vmem>>, vector<1x64x256xbf16>
    %31 = vector.shape_cast %30 : vector<1x64x256xbf16> to vector<64x256xbf16>
    %cst_30 = arith.constant dense<0.000000e+00> : vector<4x256xf32>
    %32 = tpu.matmul %2, %31, %cst_30 {dimension_numbers = #tpu.dot_dimension_numbers<[1], [0], [0], [1], [0, 0, 1, 1], [], []>} : vector<4x64xbf16>, vector<64x256xbf16>, vector<4x256xf32> -> vector<4x256xf32>
    %33 = arith.addf %29, %32 : vector<4x256xf32>
    %c2_31 = arith.constant 2 : index
    %c0_32 = arith.constant 0 : index
    %c0_33 = arith.constant 0 : index
    %34 = vector.load %arg3[%c2_31, %c0_32, %c0_33] : memref<3x64x256xbf16, #tpu.memory_space<vmem>>, vector<1x64x256xbf16>
    %35 = vector.shape_cast %34 : vector<1x64x256xbf16> to vector<64x256xbf16>
    %cst_34 = arith.constant dense<0.000000e+00> : vector<4x256xf32>
    %36 = tpu.matmul %3, %35, %cst_34 {dimension_numbers = #tpu.dot_dimension_numbers<[1], [0], [0], [1], [0, 0, 1, 1], [], []>} : vector<4x64xbf16>, vector<64x256xbf16>, vector<4x256xf32> -> vector<4x256xf32>
    %37 = arith.addf %33, %36 : vector<4x256xf32>
    %38 = vector.broadcast %10 : vector<1x256xf32> to vector<4x256xf32>
    %39 = arith.addf %37, %38 : vector<4x256xf32>
    %cst_35 = arith.constant 0.000000e+00 : f32
    %40 = vector.broadcast %cst_35 : f32 to vector<4x256xf32>
    %41 = arith.maximumf %39, %40 : vector<4x256xf32>
    %cst_36 = arith.constant 0.000000e+00 : f32
    %42 = vector.broadcast %cst_36 : f32 to vector<1x256xf32>
    %c0_37 = arith.constant 0 : index
    %c0_38 = arith.constant 0 : index
    %43 = vector.load %arg18[%c0_37, %c0_38] : memref<5x256xf32, #tpu.memory_space<vmem>>, vector<1x256xf32>
    tpu.vector_store %arg18[%c0_37, %c0_38], %42 {strides = array<i32>} : memref<5x256xf32, #tpu.memory_space<vmem>>, vector<1x256xf32>,
    %44 = vector.extract_strided_slice %41 {offsets = [0, 0], sizes = [3, 256], strides = [1, 1]} : vector<4x256xf32> to vector<3x256xf32>
    %c1_39 = arith.constant 1 : index
    %c0_40 = arith.constant 0 : index
    %45 = vector.load %arg18[%c1_39, %c0_40] : memref<5x256xf32, #tpu.memory_space<vmem>>, vector<3x256xf32>
    tpu.vector_store %arg18[%c1_39, %c0_40], %44 {strides = array<i32>} : memref<5x256xf32, #tpu.memory_space<vmem>>, vector<3x256xf32>,
    %c0_41 = arith.constant 0 : index
    %c0_42 = arith.constant 0 : index
    %46 = vector.load %arg18[%c0_41, %c0_42] : memref<5x256xf32, #tpu.memory_space<vmem>>, vector<4x256xf32>
    %c0_43 = arith.constant 0 : index
    %c0_44 = arith.constant 0 : index
    %c0_45 = arith.constant 0 : index
    %47 = vector.load %arg5[%c0_43, %c0_44, %c0_45] : memref<3x256x256xbf16, #tpu.memory_space<vmem>>, vector<1x256x256xbf16>
    %48 = vector.shape_cast %47 : vector<1x256x256xbf16> to vector<256x256xbf16>
    %49 = arith.truncf %46 : vector<4x256xf32> to vector<4x256xbf16>
    %cst_46 = arith.constant dense<0.000000e+00> : vector<4x256xf32>
    %50 = tpu.matmul %49, %48, %cst_46 {dimension_numbers = #tpu.dot_dimension_numbers<[1], [0], [0], [1], [0, 0, 1, 1], [], []>} : vector<4x256xbf16>, vector<256x256xbf16>, vector<4x256xf32> -> vector<4x256xf32>
    %c1_47 = arith.constant 1 : index
    %c0_48 = arith.constant 0 : index
    %c0_49 = arith.constant 0 : index
    %51 = vector.load %arg5[%c1_47, %c0_48, %c0_49] : memref<3x256x256xbf16, #tpu.memory_space<vmem>>, vector<1x256x256xbf16>
    %52 = vector.shape_cast %51 : vector<1x256x256xbf16> to vector<256x256xbf16>
    %53 = arith.truncf %26 : vector<4x256xf32> to vector<4x256xbf16>
    %cst_50 = arith.constant dense<0.000000e+00> : vector<4x256xf32>
    %54 = tpu.matmul %53, %52, %cst_50 {dimension_numbers = #tpu.dot_dimension_numbers<[1], [0], [0], [1], [0, 0, 1, 1], [], []>} : vector<4x256xbf16>, vector<256x256xbf16>, vector<4x256xf32> -> vector<4x256xf32>
    %55 = arith.addf %50, %54 : vector<4x256xf32>
    %c2_51 = arith.constant 2 : index
    %c0_52 = arith.constant 0 : index
    %c0_53 = arith.constant 0 : index
    %56 = vector.load %arg5[%c2_51, %c0_52, %c0_53] : memref<3x256x256xbf16, #tpu.memory_space<vmem>>, vector<1x256x256xbf16>
    %57 = vector.shape_cast %56 : vector<1x256x256xbf16> to vector<256x256xbf16>
    %58 = arith.truncf %41 : vector<4x256xf32> to vector<4x256xbf16>
    %cst_54 = arith.constant dense<0.000000e+00> : vector<4x256xf32>
    %59 = tpu.matmul %58, %57, %cst_54 {dimension_numbers = #tpu.dot_dimension_numbers<[1], [0], [0], [1], [0, 0, 1, 1], [], []>} : vector<4x256xbf16>, vector<256x256xbf16>, vector<4x256xf32> -> vector<4x256xf32>
    %60 = arith.addf %55, %59 : vector<4x256xf32>
    %c0_55 = arith.constant 0 : index
    %c0_56 = arith.constant 0 : index
    %61 = vector.load %arg6[%c0_55, %c0_56] : memref<1x256xf32, #tpu.memory_space<vmem>>, vector<1x256xf32>
    %62 = vector.broadcast %61 : vector<1x256xf32> to vector<4x256xf32>
    %63 = arith.addf %60, %62 : vector<4x256xf32>
    %cst_57 = arith.constant 0.000000e+00 : f32
    %64 = vector.broadcast %cst_57 : f32 to vector<4x256xf32>
    %65 = arith.maximumf %63, %64 : vector<4x256xf32>
    %66 = arith.index_cast %arg0 : i32 to index
    %c0_58 = arith.constant 0 : index
    %67 = vector.load %arg2[%66, %c0_58] : memref<2x4xf32, #tpu.memory_space<vmem>>, vector<1x4xf32>
    %c0_59 = arith.constant 0 : index
    %c0_60 = arith.constant 0 : index
    %68 = vector.load %arg9[%c0_59, %c0_60] : memref<1x16xf32, #tpu.memory_space<vmem>>, vector<1x16xf32>
    %c0_61 = arith.constant 0 : index
    %c0_62 = arith.constant 0 : index
    %69 = vector.load %arg8[%c0_61, %c0_62] : memref<4x16xbf16, #tpu.memory_space<vmem>>, vector<4x16xbf16>
    %70 = arith.truncf %67 : vector<1x4xf32> to vector<1x4xbf16>
    %cst_63 = arith.constant dense<0.000000e+00> : vector<1x16xf32>
    %71 = tpu.matmul %70, %69, %cst_63 {dimension_numbers = #tpu.dot_dimension_numbers<[1], [0], [0], [1], [0, 0, 1, 1], [], []>} : vector<1x4xbf16>, vector<4x16xbf16>, vector<1x16xf32> -> vector<1x16xf32>
    %72 = arith.addf %68, %71 : vector<1x16xf32>
    %73 = vector.extract_strided_slice %65 {offsets = [0, 0], sizes = [1, 256], strides = [1, 1]} : vector<4x256xf32> to vector<1x256xf32>
    %c0_64 = arith.constant 0 : index
    %c0_65 = arith.constant 0 : index
    %74 = vector.load %arg7[%c0_64, %c0_65] : memref<1024x16xbf16, #tpu.memory_space<vmem>>, vector<256x16xbf16>
    %75 = arith.truncf %73 : vector<1x256xf32> to vector<1x256xbf16>
    %cst_66 = arith.constant dense<0.000000e+00> : vector<1x16xf32>
    %76 = tpu.matmul %75, %74, %cst_66 {dimension_numbers = #tpu.dot_dimension_numbers<[1], [0], [0], [1], [0, 0, 1, 1], [], []>} : vector<1x256xbf16>, vector<256x16xbf16>, vector<1x16xf32> -> vector<1x16xf32>
    %77 = arith.addf %72, %76 : vector<1x16xf32>
    %78 = vector.extract_strided_slice %65 {offsets = [1, 0], sizes = [1, 256], strides = [1, 1]} : vector<4x256xf32> to vector<1x256xf32>
    %c256 = arith.constant 256 : index
    %c0_67 = arith.constant 0 : index
    %79 = vector.load %arg7[%c256, %c0_67] : memref<1024x16xbf16, #tpu.memory_space<vmem>>, vector<256x16xbf16>
    %80 = arith.truncf %78 : vector<1x256xf32> to vector<1x256xbf16>
    %cst_68 = arith.constant dense<0.000000e+00> : vector<1x16xf32>
    %81 = tpu.matmul %80, %79, %cst_68 {dimension_numbers = #tpu.dot_dimension_numbers<[1], [0], [0], [1], [0, 0, 1, 1], [], []>} : vector<1x256xbf16>, vector<256x16xbf16>, vector<1x16xf32> -> vector<1x16xf32>
    %82 = arith.addf %77, %81 : vector<1x16xf32>
    %83 = vector.extract_strided_slice %65 {offsets = [2, 0], sizes = [1, 256], strides = [1, 1]} : vector<4x256xf32> to vector<1x256xf32>
    %c512 = arith.constant 512 : index
    %c0_69 = arith.constant 0 : index
    %84 = vector.load %arg7[%c512, %c0_69] : memref<1024x16xbf16, #tpu.memory_space<vmem>>, vector<256x16xbf16>
    %85 = arith.truncf %83 : vector<1x256xf32> to vector<1x256xbf16>
    %cst_70 = arith.constant dense<0.000000e+00> : vector<1x16xf32>
    %86 = tpu.matmul %85, %84, %cst_70 {dimension_numbers = #tpu.dot_dimension_numbers<[1], [0], [0], [1], [0, 0, 1, 1], [], []>} : vector<1x256xbf16>, vector<256x16xbf16>, vector<1x16xf32> -> vector<1x16xf32>
    %87 = arith.addf %82, %86 : vector<1x16xf32>
    %88 = vector.extract_strided_slice %65 {offsets = [3, 0], sizes = [1, 256], strides = [1, 1]} : vector<4x256xf32> to vector<1x256xf32>
    %c768 = arith.constant 768 : index
    %c0_71 = arith.constant 0 : index
    %89 = vector.load %arg7[%c768, %c0_71] : memref<1024x16xbf16, #tpu.memory_space<vmem>>, vector<256x16xbf16>
    %90 = arith.truncf %88 : vector<1x256xf32> to vector<1x256xbf16>
    %cst_72 = arith.constant dense<0.000000e+00> : vector<1x16xf32>
    %91 = tpu.matmul %90, %89, %cst_72 {dimension_numbers = #tpu.dot_dimension_numbers<[1], [0], [0], [1], [0, 0, 1, 1], [], []>} : vector<1x256xbf16>, vector<256x16xbf16>, vector<1x16xf32> -> vector<1x16xf32>
    %92 = arith.addf %87, %91 : vector<1x16xf32>
    %c0_73 = arith.constant 0 : index
    %c0_74 = arith.constant 0 : index
    %93 = vector.load %arg10[%c0_73, %c0_74] : memref<16x1024xbf16, #tpu.memory_space<vmem>>, vector<16x1024xbf16>
    %94 = arith.truncf %92 : vector<1x16xf32> to vector<1x16xbf16>
    %cst_75 = arith.constant dense<0.000000e+00> : vector<1x1024xf32>
    %95 = tpu.matmul %94, %93, %cst_75 {dimension_numbers = #tpu.dot_dimension_numbers<[1], [0], [0], [1], [0, 0, 1, 1], [], []>} : vector<1x16xbf16>, vector<16x1024xbf16>, vector<1x1024xf32> -> vector<1x1024xf32>
    %c0_76 = arith.constant 0 : index
    %c0_77 = arith.constant 0 : index
    %96 = vector.load %arg11[%c0_76, %c0_77] : memref<4x1024xbf16, #tpu.memory_space<vmem>>, vector<4x1024xbf16>
    %97 = arith.truncf %67 : vector<1x4xf32> to vector<1x4xbf16>
    %cst_78 = arith.constant dense<0.000000e+00> : vector<1x1024xf32>
    %98 = tpu.matmul %97, %96, %cst_78 {dimension_numbers = #tpu.dot_dimension_numbers<[1], [0], [0], [1], [0, 0, 1, 1], [], []>} : vector<1x4xbf16>, vector<4x1024xbf16>, vector<1x1024xf32> -> vector<1x1024xf32>
    %99 = arith.addf %95, %98 : vector<1x1024xf32>
    %c0_79 = arith.constant 0 : index
    %c0_80 = arith.constant 0 : index
    %100 = vector.load %arg12[%c0_79, %c0_80] : memref<1x1024xf32, #tpu.memory_space<vmem>>, vector<1x1024xf32>
    %101 = arith.addf %99, %100 : vector<1x1024xf32>
    %cst_81 = arith.constant 0.000000e+00 : f32
    %102 = vector.broadcast %cst_81 : f32 to vector<1x1024xf32>
    %103 = arith.maximumf %101, %102 : vector<1x1024xf32>
    %104 = vector.extract_strided_slice %103 {offsets = [0, 0], sizes = [1, 256], strides = [1, 1]} : vector<1x1024xf32> to vector<1x256xf32>
    %c0_82 = arith.constant 0 : index
    %c0_83 = arith.constant 0 : index
    %105 = vector.load %arg18[%c0_82, %c0_83] : memref<5x256xf32, #tpu.memory_space<vmem>>, vector<1x256xf32>
    tpu.vector_store %arg18[%c0_82, %c0_83], %104 {strides = array<i32>} : memref<5x256xf32, #tpu.memory_space<vmem>>, vector<1x256xf32>,
    %106 = vector.extract_strided_slice %103 {offsets = [0, 256], sizes = [1, 256], strides = [1, 1]} : vector<1x1024xf32> to vector<1x256xf32>
    %c1_84 = arith.constant 1 : index
    %c0_85 = arith.constant 0 : index
    %107 = vector.load %arg18[%c1_84, %c0_85] : memref<5x256xf32, #tpu.memory_space<vmem>>, vector<1x256xf32>
    tpu.vector_store %arg18[%c1_84, %c0_85], %106 {strides = array<i32>} : memref<5x256xf32, #tpu.memory_space<vmem>>, vector<1x256xf32>,
    %108 = vector.extract_strided_slice %103 {offsets = [0, 512], sizes = [1, 256], strides = [1, 1]} : vector<1x1024xf32> to vector<1x256xf32>
    %c2_86 = arith.constant 2 : index
    %c0_87 = arith.constant 0 : index
    %109 = vector.load %arg18[%c2_86, %c0_87] : memref<5x256xf32, #tpu.memory_space<vmem>>, vector<1x256xf32>
    tpu.vector_store %arg18[%c2_86, %c0_87], %108 {strides = array<i32>} : memref<5x256xf32, #tpu.memory_space<vmem>>, vector<1x256xf32>,
    %110 = vector.extract_strided_slice %103 {offsets = [0, 768], sizes = [1, 256], strides = [1, 1]} : vector<1x1024xf32> to vector<1x256xf32>
    %c3 = arith.constant 3 : index
    %c0_88 = arith.constant 0 : index
    %111 = vector.load %arg18[%c3, %c0_88] : memref<5x256xf32, #tpu.memory_space<vmem>>, vector<1x256xf32>
    tpu.vector_store %arg18[%c3, %c0_88], %110 {strides = array<i32>} : memref<5x256xf32, #tpu.memory_space<vmem>>, vector<1x256xf32>,
    %cst_89 = arith.constant 0.000000e+00 : f32
    %112 = vector.broadcast %cst_89 : f32 to vector<1x256xf32>
    %c4_90 = arith.constant 4 : index
    %c0_91 = arith.constant 0 : index
    %113 = vector.load %arg18[%c4_90, %c0_91] : memref<5x256xf32, #tpu.memory_space<vmem>>, vector<1x256xf32>
    tpu.vector_store %arg18[%c4_90, %c0_91], %112 {strides = array<i32>} : memref<5x256xf32, #tpu.memory_space<vmem>>, vector<1x256xf32>,
    %c0_92 = arith.constant 0 : index
    %c0_93 = arith.constant 0 : index
    %114 = vector.load %arg18[%c0_92, %c0_93] : memref<5x256xf32, #tpu.memory_space<vmem>>, vector<4x256xf32>
    %c1_94 = arith.constant 1 : index
    %c0_95 = arith.constant 0 : index
    %115 = vector.load %arg18[%c1_94, %c0_95] : memref<5x256xf32, #tpu.memory_space<vmem>>, vector<4x256xf32>
    %c0_96 = arith.constant 0 : index
    %c0_97 = arith.constant 0 : index
    %116 = vector.load %arg14[%c0_96, %c0_97] : memref<1x256xf32, #tpu.memory_space<vmem>>, vector<1x256xf32>
    %c1_98 = arith.constant 1 : index
    %c0_99 = arith.constant 0 : index
    %c0_100 = arith.constant 0 : index
    %117 = vector.load %arg13[%c1_98, %c0_99, %c0_100] : memref<3x256x256xbf16, #tpu.memory_space<vmem>>, vector<1x256x256xbf16>
    %118 = vector.shape_cast %117 : vector<1x256x256xbf16> to vector<256x256xbf16>
    %119 = arith.truncf %114 : vector<4x256xf32> to vector<4x256xbf16>
    %cst_101 = arith.constant dense<0.000000e+00> : vector<4x256xf32>
    %120 = tpu.matmul %119, %118, %cst_101 {dimension_numbers = #tpu.dot_dimension_numbers<[1], [0], [0], [1], [0, 0, 1, 1], [], []>} : vector<4x256xbf16>, vector<256x256xbf16>, vector<4x256xf32> -> vector<4x256xf32>
    %121 = vector.broadcast %116 : vector<1x256xf32> to vector<4x256xf32>
    %122 = arith.addf %120, %121 : vector<4x256xf32>
    %cst_102 = arith.constant 0.000000e+00 : f32
    %123 = vector.broadcast %cst_102 : f32 to vector<4x256xf32>
    %124 = arith.maximumf %122, %123 : vector<4x256xf32>
    %c2_103 = arith.constant 2 : index
    %c0_104 = arith.constant 0 : index
    %c0_105 = arith.constant 0 : index
    %125 = vector.load %arg13[%c2_103, %c0_104, %c0_105] : memref<3x256x256xbf16, #tpu.memory_space<vmem>>, vector<1x256x256xbf16>
    %126 = vector.shape_cast %125 : vector<1x256x256xbf16> to vector<256x256xbf16>
    %127 = arith.truncf %114 : vector<4x256xf32> to vector<4x256xbf16>
    %cst_106 = arith.constant dense<0.000000e+00> : vector<4x256xf32>
    %128 = tpu.matmul %127, %126, %cst_106 {dimension_numbers = #tpu.dot_dimension_numbers<[1], [0], [0], [1], [0, 0, 1, 1], [], []>} : vector<4x256xbf16>, vector<256x256xbf16>, vector<4x256xf32> -> vector<4x256xf32>
    %c0_107 = arith.constant 0 : index
    %c0_108 = arith.constant 0 : index
    %c0_109 = arith.constant 0 : index
    %129 = vector.load %arg13[%c0_107, %c0_108, %c0_109] : memref<3x256x256xbf16, #tpu.memory_space<vmem>>, vector<1x256x256xbf16>
    %130 = vector.shape_cast %129 : vector<1x256x256xbf16> to vector<256x256xbf16>
    %131 = arith.truncf %115 : vector<4x256xf32> to vector<4x256xbf16>
    %cst_110 = arith.constant dense<0.000000e+00> : vector<4x256xf32>
    %132 = tpu.matmul %131, %130, %cst_110 {dimension_numbers = #tpu.dot_dimension_numbers<[1], [0], [0], [1], [0, 0, 1, 1], [], []>} : vector<4x256xbf16>, vector<256x256xbf16>, vector<4x256xf32> -> vector<4x256xf32>
    %133 = arith.addf %128, %132 : vector<4x256xf32>
    %134 = vector.broadcast %116 : vector<1x256xf32> to vector<4x256xf32>
    %135 = arith.addf %133, %134 : vector<4x256xf32>
    %cst_111 = arith.constant 0.000000e+00 : f32
    %136 = vector.broadcast %cst_111 : f32 to vector<4x256xf32>
    %137 = arith.maximumf %135, %136 : vector<4x256xf32>
    %c0_112 = arith.constant 0 : index
    %c0_113 = arith.constant 0 : index
    %138 = vector.load %arg18[%c0_112, %c0_113] : memref<5x256xf32, #tpu.memory_space<vmem>>, vector<4x256xf32>
    tpu.vector_store %arg18[%c0_112, %c0_113], %124 {strides = array<i32>} : memref<5x256xf32, #tpu.memory_space<vmem>>, vector<4x256xf32>,
    %cst_114 = arith.constant 0.000000e+00 : f32
    %139 = vector.broadcast %cst_114 : f32 to vector<1x256xf32>
    %c4_115 = arith.constant 4 : index
    %c0_116 = arith.constant 0 : index
    %140 = vector.load %arg18[%c4_115, %c0_116] : memref<5x256xf32, #tpu.memory_space<vmem>>, vector<1x256xf32>
    tpu.vector_store %arg18[%c4_115, %c0_116], %139 {strides = array<i32>} : memref<5x256xf32, #tpu.memory_space<vmem>>, vector<1x256xf32>,
    %c1_117 = arith.constant 1 : index
    %c0_118 = arith.constant 0 : index
    %141 = vector.load %arg18[%c1_117, %c0_118] : memref<5x256xf32, #tpu.memory_space<vmem>>, vector<4x256xf32>
    %c0_119 = arith.constant 0 : index
    %c0_120 = arith.constant 0 : index
    %142 = vector.load %arg16[%c0_119, %c0_120] : memref<1x64xf32, #tpu.memory_space<vmem>>, vector<1x64xf32>
    %c1_121 = arith.constant 1 : index
    %c0_122 = arith.constant 0 : index
    %c0_123 = arith.constant 0 : index
    %143 = vector.load %arg15[%c1_121, %c0_122, %c0_123] : memref<3x256x64xbf16, #tpu.memory_space<vmem>>, vector<1x256x64xbf16>
    %144 = vector.shape_cast %143 : vector<1x256x64xbf16> to vector<256x64xbf16>
    %145 = arith.truncf %124 : vector<4x256xf32> to vector<4x256xbf16>
    %cst_124 = arith.constant dense<0.000000e+00> : vector<4x64xf32>
    %146 = tpu.matmul %145, %144, %cst_124 {dimension_numbers = #tpu.dot_dimension_numbers<[1], [0], [0], [1], [0, 0, 1, 1], [], []>} : vector<4x256xbf16>, vector<256x64xbf16>, vector<4x64xf32> -> vector<4x64xf32>
    %147 = vector.broadcast %142 : vector<1x64xf32> to vector<4x64xf32>
    %148 = arith.addf %146, %147 : vector<4x64xf32>
    %149 = arith.negf %148 : vector<4x64xf32>
    %150 = math.exp %149 : vector<4x64xf32>
    %cst_125 = arith.constant 1.000000e+00 : f32
    %151 = vector.broadcast %cst_125 : f32 to vector<4x64xf32>
    %152 = arith.addf %151, %150 : vector<4x64xf32>
    %153 = arith.divf %151, %152 : vector<4x64xf32>
    %c2_126 = arith.constant 2 : index
    %c0_127 = arith.constant 0 : index
    %c0_128 = arith.constant 0 : index
    %154 = vector.load %arg15[%c2_126, %c0_127, %c0_128] : memref<3x256x64xbf16, #tpu.memory_space<vmem>>, vector<1x256x64xbf16>
    %155 = vector.shape_cast %154 : vector<1x256x64xbf16> to vector<256x64xbf16>
    %156 = arith.truncf %124 : vector<4x256xf32> to vector<4x256xbf16>
    %cst_129 = arith.constant dense<0.000000e+00> : vector<4x64xf32>
    %157 = tpu.matmul %156, %155, %cst_129 {dimension_numbers = #tpu.dot_dimension_numbers<[1], [0], [0], [1], [0, 0, 1, 1], [], []>} : vector<4x256xbf16>, vector<256x64xbf16>, vector<4x64xf32> -> vector<4x64xf32>
    %c0_130 = arith.constant 0 : index
    %c0_131 = arith.constant 0 : index
    %c0_132 = arith.constant 0 : index
    %158 = vector.load %arg15[%c0_130, %c0_131, %c0_132] : memref<3x256x64xbf16, #tpu.memory_space<vmem>>, vector<1x256x64xbf16>
    %159 = vector.shape_cast %158 : vector<1x256x64xbf16> to vector<256x64xbf16>
    %160 = arith.truncf %137 : vector<4x256xf32> to vector<4x256xbf16>
    %cst_133 = arith.constant dense<0.000000e+00> : vector<4x64xf32>
    %161 = tpu.matmul %160, %159, %cst_133 {dimension_numbers = #tpu.dot_dimension_numbers<[1], [0], [0], [1], [0, 0, 1, 1], [], []>} : vector<4x256xbf16>, vector<256x64xbf16>, vector<4x64xf32> -> vector<4x64xf32>
    %162 = arith.addf %157, %161 : vector<4x64xf32>
    %163 = vector.broadcast %142 : vector<1x64xf32> to vector<4x64xf32>
    %164 = arith.addf %162, %163 : vector<4x64xf32>
    %165 = arith.negf %164 : vector<4x64xf32>
    %166 = math.exp %165 : vector<4x64xf32>
    %cst_134 = arith.constant 1.000000e+00 : f32
    %167 = vector.broadcast %cst_134 : f32 to vector<4x64xf32>
    %168 = arith.addf %167, %166 : vector<4x64xf32>
    %169 = arith.divf %167, %168 : vector<4x64xf32>
    %c1_135 = arith.constant 1 : index
    %c0_136 = arith.constant 0 : index
    %c0_137 = arith.constant 0 : index
    %170 = vector.load %arg15[%c1_135, %c0_136, %c0_137] : memref<3x256x64xbf16, #tpu.memory_space<vmem>>, vector<1x256x64xbf16>
    %171 = vector.shape_cast %170 : vector<1x256x64xbf16> to vector<256x64xbf16>
    %172 = arith.truncf %137 : vector<4x256xf32> to vector<4x256xbf16>
    %cst_138 = arith.constant dense<0.000000e+00> : vector<4x64xf32>
    %173 = tpu.matmul %172, %171, %cst_138 {dimension_numbers = #tpu.dot_dimension_numbers<[1], [0], [0], [1], [0, 0, 1, 1], [], []>} : vector<4x256xbf16>, vector<256x64xbf16>, vector<4x64xf32> -> vector<4x64xf32>
    %174 = vector.broadcast %142 : vector<1x64xf32> to vector<4x64xf32>
    %175 = arith.addf %173, %174 : vector<4x64xf32>
    %176 = arith.negf %175 : vector<4x64xf32>
    %177 = math.exp %176 : vector<4x64xf32>
    %cst_139 = arith.constant 1.000000e+00 : f32
    %178 = vector.broadcast %cst_139 : f32 to vector<4x64xf32>
    %179 = arith.addf %178, %177 : vector<4x64xf32>
    %180 = arith.divf %178, %179 : vector<4x64xf32>
    %c2_140 = arith.constant 2 : index
    %c0_141 = arith.constant 0 : index
    %c0_142 = arith.constant 0 : index
    %181 = vector.load %arg15[%c2_140, %c0_141, %c0_142] : memref<3x256x64xbf16, #tpu.memory_space<vmem>>, vector<1x256x64xbf16>
    %182 = vector.shape_cast %181 : vector<1x256x64xbf16> to vector<256x64xbf16>
    %183 = arith.truncf %137 : vector<4x256xf32> to vector<4x256xbf16>
    %cst_143 = arith.constant dense<0.000000e+00> : vector<4x64xf32>
    %184 = tpu.matmul %183, %182, %cst_143 {dimension_numbers = #tpu.dot_dimension_numbers<[1], [0], [0], [1], [0, 0, 1, 1], [], []>} : vector<4x256xbf16>, vector<256x64xbf16>, vector<4x64xf32> -> vector<4x64xf32>
    %c0_144 = arith.constant 0 : index
    %c0_145 = arith.constant 0 : index
    %c0_146 = arith.constant 0 : index
    %185 = vector.load %arg15[%c0_144, %c0_145, %c0_146] : memref<3x256x64xbf16, #tpu.memory_space<vmem>>, vector<1x256x64xbf16>
    %186 = vector.shape_cast %185 : vector<1x256x64xbf16> to vector<256x64xbf16>
    %187 = arith.truncf %141 : vector<4x256xf32> to vector<4x256xbf16>
    %cst_147 = arith.constant dense<0.000000e+00> : vector<4x64xf32>
    %188 = tpu.matmul %187, %186, %cst_147 {dimension_numbers = #tpu.dot_dimension_numbers<[1], [0], [0], [1], [0, 0, 1, 1], [], []>} : vector<4x256xbf16>, vector<256x64xbf16>, vector<4x64xf32> -> vector<4x64xf32>
    %189 = arith.addf %184, %188 : vector<4x64xf32>
    %190 = vector.broadcast %142 : vector<1x64xf32> to vector<4x64xf32>
    %191 = arith.addf %189, %190 : vector<4x64xf32>
    %192 = arith.negf %191 : vector<4x64xf32>
    %193 = math.exp %192 : vector<4x64xf32>
    %cst_148 = arith.constant 1.000000e+00 : f32
    %194 = vector.broadcast %cst_148 : f32 to vector<4x64xf32>
    %195 = arith.addf %194, %193 : vector<4x64xf32>
    %196 = arith.divf %194, %195 : vector<4x64xf32>
    %c0_149 = arith.constant 0 : index
    %c0_150 = arith.constant 0 : index
    %197 = vector.load %arg17[%c0_149, %c0_150] : memref<16x64xf32, #tpu.memory_space<vmem>>, vector<4x64xf32>
    tpu.vector_store %arg17[%c0_149, %c0_150], %153 {strides = array<i32>} : memref<16x64xf32, #tpu.memory_space<vmem>>, vector<4x64xf32>,
    %c4_151 = arith.constant 4 : index
    %c0_152 = arith.constant 0 : index
    %198 = vector.load %arg17[%c4_151, %c0_152] : memref<16x64xf32, #tpu.memory_space<vmem>>, vector<4x64xf32>
    tpu.vector_store %arg17[%c4_151, %c0_152], %169 {strides = array<i32>} : memref<16x64xf32, #tpu.memory_space<vmem>>, vector<4x64xf32>,
    %c8_153 = arith.constant 8 : index
    %c0_154 = arith.constant 0 : index
    %199 = vector.load %arg17[%c8_153, %c0_154] : memref<16x64xf32, #tpu.memory_space<vmem>>, vector<4x64xf32>
    tpu.vector_store %arg17[%c8_153, %c0_154], %180 {strides = array<i32>} : memref<16x64xf32, #tpu.memory_space<vmem>>, vector<4x64xf32>,
    %c12_155 = arith.constant 12 : index
    %c0_156 = arith.constant 0 : index
    %200 = vector.load %arg17[%c12_155, %c0_156] : memref<16x64xf32, #tpu.memory_space<vmem>>, vector<4x64xf32>
    tpu.vector_store %arg17[%c12_155, %c0_156], %196 {strides = array<i32>} : memref<16x64xf32, #tpu.memory_space<vmem>>, vector<4x64xf32>,
    return
  }
  func.func @transform_0(%arg0: i32) -> (i32, i32) {
    %c0_i32 = arith.constant 0 : i32
    %c0_i32_0 = arith.constant 0 : i32
    return %arg0, %c0_i32 : i32, i32
  }
  func.func @transform_1(%arg0: i32) -> (i32, i32) {
    %c0_i32 = arith.constant 0 : i32
    %c0_i32_0 = arith.constant 0 : i32
    %c0_i32_1 = arith.constant 0 : i32
    return %c0_i32, %c0_i32_0 : i32, i32
  }
  func.func @transform_2(%arg0: i32) -> (i32, i32, i32) {
    %c0_i32 = arith.constant 0 : i32
    %c0_i32_0 = arith.constant 0 : i32
    %c0_i32_1 = arith.constant 0 : i32
    %c0_i32_2 = arith.constant 0 : i32
    return %c0_i32, %c0_i32_0, %c0_i32_1 : i32, i32, i32
  }
  func.func @transform_3(%arg0: i32) -> (i32, i32) {
    %c0_i32 = arith.constant 0 : i32
    %c0_i32_0 = arith.constant 0 : i32
    %c0_i32_1 = arith.constant 0 : i32
    return %c0_i32, %c0_i32_0 : i32, i32
  }
  func.func @transform_4(%arg0: i32) -> (i32, i32, i32) {
    %c0_i32 = arith.constant 0 : i32
    %c0_i32_0 = arith.constant 0 : i32
    %c0_i32_1 = arith.constant 0 : i32
    %c0_i32_2 = arith.constant 0 : i32
    return %c0_i32, %c0_i32_0, %c0_i32_1 : i32, i32, i32
  }
  func.func @transform_5(%arg0: i32) -> (i32, i32) {
    %c0_i32 = arith.constant 0 : i32
    %c0_i32_0 = arith.constant 0 : i32
    %c0_i32_1 = arith.constant 0 : i32
    return %c0_i32, %c0_i32_0 : i32, i32
  }
  func.func @transform_6(%arg0: i32) -> (i32, i32) {
    %c0_i32 = arith.constant 0 : i32
    %c0_i32_0 = arith.constant 0 : i32
    %c0_i32_1 = arith.constant 0 : i32
    return %c0_i32, %c0_i32_0 : i32, i32
  }
  func.func @transform_7(%arg0: i32) -> (i32, i32) {
    %c0_i32 = arith.constant 0 : i32
    %c0_i32_0 = arith.constant 0 : i32
    %c0_i32_1 = arith.constant 0 : i32
    return %c0_i32, %c0_i32_0 : i32, i32
  }
  func.func @transform_8(%arg0: i32) -> (i32, i32) {
    %c0_i32 = arith.constant 0 : i32
    %c0_i32_0 = arith.constant 0 : i32
    %c0_i32_1 = arith.constant 0 : i32
    return %c0_i32, %c0_i32_0 : i32, i32
  }
  func.func @transform_9(%arg0: i32) -> (i32, i32) {
    %c0_i32 = arith.constant 0 : i32
    %c0_i32_0 = arith.constant 0 : i32
    %c0_i32_1 = arith.constant 0 : i32
    return %c0_i32, %c0_i32_0 : i32, i32
  }
  func.func @transform_10(%arg0: i32) -> (i32, i32) {
    %c0_i32 = arith.constant 0 : i32
    %c0_i32_0 = arith.constant 0 : i32
    %c0_i32_1 = arith.constant 0 : i32
    return %c0_i32, %c0_i32_0 : i32, i32
  }
  func.func @transform_11(%arg0: i32) -> (i32, i32) {
    %c0_i32 = arith.constant 0 : i32
    %c0_i32_0 = arith.constant 0 : i32
    %c0_i32_1 = arith.constant 0 : i32
    return %c0_i32, %c0_i32_0 : i32, i32
  }
  func.func @transform_12(%arg0: i32) -> (i32, i32, i32) {
    %c0_i32 = arith.constant 0 : i32
    %c0_i32_0 = arith.constant 0 : i32
    %c0_i32_1 = arith.constant 0 : i32
    %c0_i32_2 = arith.constant 0 : i32
    return %c0_i32, %c0_i32_0, %c0_i32_1 : i32, i32, i32
  }
  func.func @transform_13(%arg0: i32) -> (i32, i32) {
    %c0_i32 = arith.constant 0 : i32
    %c0_i32_0 = arith.constant 0 : i32
    %c0_i32_1 = arith.constant 0 : i32
    return %c0_i32, %c0_i32_0 : i32, i32
  }
  func.func @transform_14(%arg0: i32) -> (i32, i32, i32) {
    %c0_i32 = arith.constant 0 : i32
    %c0_i32_0 = arith.constant 0 : i32
    %c0_i32_1 = arith.constant 0 : i32
    %c0_i32_2 = arith.constant 0 : i32
    return %c0_i32, %c0_i32_0, %c0_i32_1 : i32, i32, i32
  }
  func.func @transform_15(%arg0: i32) -> (i32, i32) {
    %c0_i32 = arith.constant 0 : i32
    %c0_i32_0 = arith.constant 0 : i32
    %c0_i32_1 = arith.constant 0 : i32
    return %c0_i32, %c0_i32_0 : i32, i32
  }
  func.func @transform_16(%arg0: i32) -> (i32, i32) {
    %c0_i32 = arith.constant 0 : i32
    %c0_i32_0 = arith.constant 0 : i32
    return %arg0, %c0_i32 : i32, i32
  }
}

</mosaic_0001>

<llo_original>
// kernel: cae_forward.1
$region0: #{cae_forward.1}
  #allocation0 [shape = 'u32[]', space=smem, size = 0x4, offset = 0x4, fixed_abs, tag = 'smem constant byte address 0x4 - core index']
  #allocation1 [shape = 'u32[144,128]{1,0:T(1,128)}', space=vmem, size = 0x12000, scoped, tag = 'internal scratch']
  #allocation2 [shape = 'f32[5,256]{1,0:T(8,128)}', space=vmem, size = 0x2000, scoped, tag = 'scratch operand']
  %s0 = inlined_call_operand.vmem [shape: bf16[32,64], index: 0, kind: input, shape index: {}]
  %s1 = inlined_call_operand.vmem [shape: f32[2,4], index: 1, kind: input, shape index: {}]
  %s2 = inlined_call_operand.vmem [shape: bf16[3,64,256], index: 2, kind: input, shape index: {}]
  %s3 = inlined_call_operand.vmem [shape: f32[1,256], index: 3, kind: input, shape index: {}]
  %s4 = inlined_call_operand.vmem [shape: bf16[3,256,256], index: 4, kind: input, shape index: {}]
  %s5 = inlined_call_operand.vmem [shape: f32[1,256], index: 5, kind: input, shape index: {}]
  %s6 = inlined_call_operand.vmem [shape: bf16[1024,16], index: 6, kind: input, shape index: {}]
  %s7 = inlined_call_operand.hbm [shape: bf16[4,16], index: 7, kind: input, shape index: {}]
  %s8 = inlined_call_operand.hbm [shape: f32[1,16], index: 8, kind: input, shape index: {}]
  %s9 = inlined_call_operand.hbm [shape: bf16[16,1024], index: 9, kind: input, shape index: {}]
  %s10 = inlined_call_operand.hbm [shape: bf16[4,1024], index: 10, kind: input, shape index: {}]
  %s11 = inlined_call_operand.vmem [shape: f32[1,1024], index: 11, kind: input, shape index: {}]
  %s12 = inlined_call_operand.vmem [shape: bf16[3,256,256], index: 12, kind: input, shape index: {}]
  %s13 = inlined_call_operand.vmem [shape: f32[1,256], index: 13, kind: input, shape index: {}]
  %s14 = inlined_call_operand.vmem [shape: bf16[3,256,64], index: 14, kind: input, shape index: {}]
  %s15 = inlined_call_operand.vmem [shape: f32[1,64], index: 15, kind: input, shape index: {}]
  %s16 = inlined_call_operand.vmem [shape: f32[32,64], index: 16, kind: output, shape index: {}]
  %s17 = sld [smem:[#allocation0]]
  $region113: #{cae_forward.1} parent=0
    _
  %s19 = ssub.s32 1, %s17
  %s20 = scalar_select 0, %s19, %s17
  $region1: #{cae_forward.1} parent=0
    #allocation3 [shape = 'u8[1024]{0}', space=vmem, size = 0x400, scoped, tag = 'input window, operand 7, single buffered']
    #allocation4 [shape = 's32[2]{0}', space=sflag, size = 0x8, scoped, tag = 'scoped memory for cae_forward.1']
    #allocation5 [shape = 'u8[512]{0}', space=vmem, size = 0x400, scoped, tag = 'input window, operand 8, single buffered']
    #allocation6 [shape = 's32[1]{0}', space=sflag, size = 0x4, scoped, tag = 'scoped memory for cae_forward.1']
    #allocation7 [shape = 'u8[32768]{0}', space=vmem, size = 0x8000, scoped, tag = 'input window, operand 9, single buffered']
    #allocation8 [shape = 'u8[8192]{0}', space=vmem, size = 0x2000, scoped, tag = 'input window, operand 10, single buffered']
    #allocation9 [shape = 's32[1]{0}', space=sflag, size = 0x4, scoped, tag = 'scoped memory for cae_forward.1']
    %21 = vsyncpa [#allocation4], 0
    %22 = vsyncpa [#allocation6], 0
    %23 = vsyncpa [#allocation9], 0
    loop: start=0, step=1, limit=4
    $region2: #{cae_forward.1} parent=1 // loop_pre_header
      _
    $region3: #{cae_forward.1} parent=1 // loop_header
      %s25 = sphi 0, %s29
      %p26 = scmp.ge.s32.totalorder %s25, 4
      %s35 = sphi 0, %s37
      %s38 = sphi 0, %s35
      %s39 = sphi 0, %s38
      %s55 = sphi 0, %s39
      %s59 = sphi 0, %s59
      %s61 = sphi 0, %s59
      %s62 = sphi 0, %s61
      %s76 = sphi 0, %s62
      %s80 = sphi 0, %s80
      %s82 = sphi 0, %s80
      %s83 = sphi 0, %s82
      %s97 = sphi 0, %s83
      %s101 = sphi 0, %s101
      %s103 = sphi 0, %s101
      %s104 = sphi 0, %s103
      %s118 = sphi 0, %s104
      %s122 = sphi 0, %s122
      %s124 = sphi 0, %s122
      %s125 = sphi 0, %s124
      %s139 = sphi 0, %s125
      %s143 = sphi 0, %s143
      %s145 = sphi 0, %s143
      %s146 = sphi 0, %s145
      %s160 = sphi 0, %s146
      %s164 = sphi 0, %s164
      %s166 = sphi 0, %s164
      %s167 = sphi 0, %s166
      %s181 = sphi 0, %s167
      %s185 = sphi 0, %s185
      %s187 = sphi 0, %s185
      %s188 = sphi 0, %s187
      %s202 = sphi 0, %s188
      %s206 = sphi 0, %s206
      %s208 = sphi 0, %s206
      %s209 = sphi 0, %s208
      %s223 = sphi 0, %s209
      %s227 = sphi 0, %s227
      %s229 = sphi 0, %s227
      %s230 = sphi 0, %s229
      %s244 = sphi 0, %s230
      %s248 = sphi 0, %s248
      %s250 = sphi 0, %s248
      %s251 = sphi 0, %s250
      %s265 = sphi 0, %s251
      %s269 = sphi 0, %s269
      %s271 = sphi 0, %s269
      %s272 = sphi 0, %s271
      %s286 = sphi 0, %s272
      %s290 = sphi 0, %s290
      %s292 = sphi 0, %s290
      %s293 = sphi 0, %s292
      %s307 = sphi 0, %s293
      %s311 = sphi 0, %s311
      %s313 = sphi 0, %s311
      %s314 = sphi 0, %s313
      %s328 = sphi 0, %s314
      %s332 = sphi 0, %s332
      %s334 = sphi 0, %s332
      %s335 = sphi 0, %s334
      %s349 = sphi 0, %s335
      %s353 = sphi 0, %s353
      %s355 = sphi 0, %s353
      %s356 = sphi 0, %s355
      %s370 = sphi 0, %s356
      %s376 = sphi 0, %s378
      %s379 = sphi 0, %s376
      %s380 = sphi 0, %s379
      %s396 = sphi 0, %s380
    $region4: #{cae_forward.1} parent=1 // loop_header_branch
      %28 = sbr.rel (%p26) target = $region8
    $region5: #{cae_forward.1} parent=1 // loop_body
      %s30 = ssub.s32 %s25, 1
      %s31 = ssub.s32 %s25, 2
      %s32 = sadd.s32 %s25, 1
      %s33 = ssub.s32 %s25, %s32
      %p34 = scmp.eq.s32.totalorder %s33, 0
      %s36 = sadd.s32 %s35, 1
      %s37 = scalar_select %p34, %s35, %s36
      %p40 = pneg %p34
      %p41 = scmp.eq.s32.totalorder %s25, 1
      %p42 = por %p40, %p41
      %p43 = scmp.ne.s32.totalorder %s35, %s38
      %p44 = scmp.eq.s32.totalorder %s25, 0
      %p45 = por %p43, %p44
      %p46 = scmp.ne.s32.totalorder %s35, %s38
      %p47 = scmp.eq.s32.totalorder %s30, 1
      %p48 = por %p46, %p47
      %p49 = scmp.ne.s32.totalorder %s38, %s39
      %p50 = scmp.eq.s32.totalorder %s30, 0
      %p51 = por %p49, %p50
      %p52 = scmp.ne.s32.totalorder %s38, %s39
      %p53 = scmp.eq.s32.totalorder %s31, 1
      %p54 = por %p52, %p53
      %p56 = scmp.ne.s32.totalorder %s39, %s55
      %p57 = scmp.eq.s32.totalorder %s31, 0
      %p58 = por %p56, %p57
      %s60 = sadd.s32 %s59, 1
      %p63 = scmp.eq.s32.totalorder %s25, 1
      %p64 = scmp.ne.s32.totalorder %s59, %s61
      %p65 = scmp.eq.s32.totalorder %s25, 0
      %p66 = por %p64, %p65
      %p67 = scmp.ne.s32.totalorder %s59, %s61
      %p68 = scmp.eq.s32.totalorder %s30, 1
      %p69 = por %p67, %p68
      %p70 = scmp.ne.s32.totalorder %s61, %s62
      %p71 = scmp.eq.s32.totalorder %s30, 0
      %p72 = por %p70, %p71
      %p73 = scmp.ne.s32.totalorder %s61, %s62
      %p74 = scmp.eq.s32.totalorder %s31, 1
      %p75 = por %p73, %p74
      %p77 = scmp.ne.s32.totalorder %s62, %s76
      %p78 = scmp.eq.s32.totalorder %s31, 0
      %p79 = por %p77, %p78
      %s81 = sadd.s32 %s80, 1
      %p84 = scmp.eq.s32.totalorder %s25, 1
      %p85 = scmp.ne.s32.totalorder %s80, %s82
      %p86 = scmp.eq.s32.totalorder %s25, 0
      %p87 = por %p85, %p86
      %p88 = scmp.ne.s32.totalorder %s80, %s82
      %p89 = scmp.eq.s32.totalorder %s30, 1
      %p90 = por %p88, %p89
      %p91 = scmp.ne.s32.totalorder %s82, %s83
      %p92 = scmp.eq.s32.totalorder %s30, 0
      %p93 = por %p91, %p92
      %p94 = scmp.ne.s32.totalorder %s82, %s83
      %p95 = scmp.eq.s32.totalorder %s31, 1
      %p96 = por %p94, %p95
      %p98 = scmp.ne.s32.totalorder %s83, %s97
      %p99 = scmp.eq.s32.totalorder %s31, 0
      %p100 = por %p98, %p99
      %s102 = sadd.s32 %s101, 1
      %p105 = scmp.eq.s32.totalorder %s25, 1
      %p106 = scmp.ne.s32.totalorder %s101, %s103
      %p107 = scmp.eq.s32.totalorder %s25, 0
      %p108 = por %p106, %p107
      %p109 = scmp.ne.s32.totalorder %s101, %s103
      %p110 = scmp.eq.s32.totalorder %s30, 1
      %p111 = por %p109, %p110
      %p112 = scmp.ne.s32.totalorder %s103, %s104
      %p113 = scmp.eq.s32.totalorder %s30, 0
      %p114 = por %p112, %p113
      %p115 = scmp.ne.s32.totalorder %s103, %s104
      %p116 = scmp.eq.s32.totalorder %s31, 1
      %p117 = por %p115, %p116
      %p119 = scmp.ne.s32.totalorder %s104, %s118
      %p120 = scmp.eq.s32.totalorder %s31, 0
      %p121 = por %p119, %p120
      %s123 = sadd.s32 %s122, 1
      %p126 = scmp.eq.s32.totalorder %s25, 1
      %p127 = scmp.ne.s32.totalorder %s122, %s124
      %p128 = scmp.eq.s32.totalorder %s25, 0
      %p129 = por %p127, %p128
      %p130 = scmp.ne.s32.totalorder %s122, %s124
      %p131 = scmp.eq.s32.totalorder %s30, 1
      %p132 = por %p130, %p131
      %p133 = scmp.ne.s32.totalorder %s124, %s125
      %p134 = scmp.eq.s32.totalorder %s30, 0
      %p135 = por %p133, %p134
      %p136 = scmp.ne.s32.totalorder %s124, %s125
      %p137 = scmp.eq.s32.totalorder %s31, 1
      %p138 = por %p136, %p137
      %p140 = scmp.ne.s32.totalorder %s125, %s139
      %p141 = scmp.eq.s32.totalorder %s31, 0
      %p142 = por %p140, %p141
      %s144 = sadd.s32 %s143, 1
      %p147 = scmp.eq.s32.totalorder %s25, 1
      %p148 = scmp.ne.s32.totalorder %s143, %s145
      %p149 = scmp.eq.s32.totalorder %s25, 0
      %p150 = por %p148, %p149
      %p151 = scmp.ne.s32.totalorder %s143, %s145
      %p152 = scmp.eq.s32.totalorder %s30, 1
      %p153 = por %p151, %p152
      %p154 = scmp.ne.s32.totalorder %s145, %s146
      %p155 = scmp.eq.s32.totalorder %s30, 0
      %p156 = por %p154, %p155
      %p157 = scmp.ne.s32.totalorder %s145, %s146
      %p158 = scmp.eq.s32.totalorder %s31, 1
      %p159 = por %p157, %p158
      %p161 = scmp.ne.s32.totalorder %s146, %s160
      %p162 = scmp.eq.s32.totalorder %s31, 0
      %p163 = por %p161, %p162
      %s165 = sadd.s32 %s164, 1
      %p168 = scmp.eq.s32.totalorder %s25, 1
      %p169 = scmp.ne.s32.totalorder %s164, %s166
      %p170 = scmp.eq.s32.totalorder %s25, 0
      %p171 = por %p169, %p170
      %p172 = scmp.ne.s32.totalorder %s164, %s166
      %p173 = scmp.eq.s32.totalorder %s30, 1
      %p174 = por %p172, %p173
      %p175 = scmp.ne.s32.totalorder %s166, %s167
      %p176 = scmp.eq.s32.totalorder %s30, 0
      %p177 = por %p175, %p176
      %p178 = scmp.ne.s32.totalorder %s166, %s167
      %p179 = scmp.eq.s32.totalorder %s31, 1
      %p180 = por %p178, %p179
      %p182 = scmp.ne.s32.totalorder %s167, %s181
      %p183 = scmp.eq.s32.totalorder %s31, 0
      %p184 = por %p182, %p183
      %s186 = sadd.s32 %s185, 1
      %p189 = scmp.eq.s32.totalorder %s25, 1
      %p190 = scmp.ne.s32.totalorder %s185, %s187
      %p191 = scmp.eq.s32.totalorder %s25, 0
      %p192 = por %p190, %p191
      %p193 = scmp.ne.s32.totalorder %s185, %s187
      %p194 = scmp.eq.s32.totalorder %s30, 1
      %p195 = por %p193, %p194
      %p196 = scmp.ne.s32.totalorder %s187, %s188
      %p197 = scmp.eq.s32.totalorder %s30, 0
      %p198 = por %p196, %p197
      %p199 = scmp.ne.s32.totalorder %s187, %s188
      %p200 = scmp.eq.s32.totalorder %s31, 1
      %p201 = por %p199, %p200
      %p203 = scmp.ne.s32.totalorder %s188, %s202
      %p204 = scmp.eq.s32.totalorder %s31, 0
      %p205 = por %p203, %p204
      %s207 = sadd.s32 %s206, 1
      %p210 = scmp.eq.s32.totalorder %s25, 1
      %p211 = scmp.ne.s32.totalorder %s206, %s208
      %p212 = scmp.eq.s32.totalorder %s25, 0
      %p213 = por %p211, %p212
      %p214 = scmp.ne.s32.totalorder %s206, %s208
      %p215 = scmp.eq.s32.totalorder %s30, 1
      %p216 = por %p214, %p215
      %p217 = scmp.ne.s32.totalorder %s208, %s209
      %p218 = scmp.eq.s32.totalorder %s30, 0
      %p219 = por %p217, %p218
      %p220 = scmp.ne.s32.totalorder %s208, %s209
      %p221 = scmp.eq.s32.totalorder %s31, 1
      %p222 = por %p220, %p221
      %p224 = scmp.ne.s32.totalorder %s209, %s223
      %p225 = scmp.eq.s32.totalorder %s31, 0
      %p226 = por %p224, %p225
      %s228 = sadd.s32 %s227, 1
      %p231 = scmp.eq.s32.totalorder %s25, 1
      %p232 = scmp.ne.s32.totalorder %s227, %s229
      %p233 = scmp.eq.s32.totalorder %s25, 0
      %p234 = por %p232, %p233
      %p235 = scmp.ne.s32.totalorder %s227, %s229
      %p236 = scmp.eq.s32.totalorder %s30, 1
      %p237 = por %p235, %p236
      %p238 = scmp.ne.s32.totalorder %s229, %s230
      %p239 = scmp.eq.s32.totalorder %s30, 0
      %p240 = por %p238, %p239
      %p241 = scmp.ne.s32.totalorder %s229, %s230
      %p242 = scmp.eq.s32.totalorder %s31, 1
      %p243 = por %p241, %p242
      %p245 = scmp.ne.s32.totalorder %s230, %s244
      %p246 = scmp.eq.s32.totalorder %s31, 0
      %p247 = por %p245, %p246
      %s249 = sadd.s32 %s248, 1
      %p252 = scmp.eq.s32.totalorder %s25, 1
      %p253 = scmp.ne.s32.totalorder %s248, %s250
      %p254 = scmp.eq.s32.totalorder %s25, 0
      %p255 = por %p253, %p254
      %p256 = scmp.ne.s32.totalorder %s248, %s250
      %p257 = scmp.eq.s32.totalorder %s30, 1
      %p258 = por %p256, %p257
      %p259 = scmp.ne.s32.totalorder %s250, %s251
      %p260 = scmp.eq.s32.totalorder %s30, 0
      %p261 = por %p259, %p260
      %p262 = scmp.ne.s32.totalorder %s250, %s251
      %p263 = scmp.eq.s32.totalorder %s31, 1
      %p264 = por %p262, %p263
      %p266 = scmp.ne.s32.totalorder %s251, %s265
      %p267 = scmp.eq.s32.totalorder %s31, 0
      %p268 = por %p266, %p267
      %s270 = sadd.s32 %s269, 1
      %p273 = scmp.eq.s32.totalorder %s25, 1
      %p274 = scmp.ne.s32.totalorder %s269, %s271
      %p275 = scmp.eq.s32.totalorder %s25, 0
      %p276 = por %p274, %p275
      %p277 = scmp.ne.s32.totalorder %s269, %s271
      %p278 = scmp.eq.s32.totalorder %s30, 1
      %p279 = por %p277, %p278
      %p280 = scmp.ne.s32.totalorder %s271, %s272
      %p281 = scmp.eq.s32.totalorder %s30, 0
      %p282 = por %p280, %p281
      %p283 = scmp.ne.s32.totalorder %s271, %s272
      %p284 = scmp.eq.s32.totalorder %s31, 1
      %p285 = por %p283, %p284
      %p287 = scmp.ne.s32.totalorder %s272, %s286
      %p288 = scmp.eq.s32.totalorder %s31, 0
      %p289 = por %p287, %p288
      %s291 = sadd.s32 %s290, 1
      %p294 = scmp.eq.s32.totalorder %s25, 1
      %p295 = scmp.ne.s32.totalorder %s290, %s292
      %p296 = scmp.eq.s32.totalorder %s25, 0
      %p297 = por %p295, %p296
      %p298 = scmp.ne.s32.totalorder %s290, %s292
      %p299 = scmp.eq.s32.totalorder %s30, 1
      %p300 = por %p298, %p299
      %p301 = scmp.ne.s32.totalorder %s292, %s293
      %p302 = scmp.eq.s32.totalorder %s30, 0
      %p303 = por %p301, %p302
      %p304 = scmp.ne.s32.totalorder %s292, %s293
      %p305 = scmp.eq.s32.totalorder %s31, 1
      %p306 = por %p304, %p305
      %p308 = scmp.ne.s32.totalorder %s293, %s307
      %p309 = scmp.eq.s32.totalorder %s31, 0
      %p310 = por %p308, %p309
      %s312 = sadd.s32 %s311, 1
      %p315 = scmp.eq.s32.totalorder %s25, 1
      %p316 = scmp.ne.s32.totalorder %s311, %s313
      %p317 = scmp.eq.s32.totalorder %s25, 0
      %p318 = por %p316, %p317
      %p319 = scmp.ne.s32.totalorder %s311, %s313
      %p320 = scmp.eq.s32.totalorder %s30, 1
      %p321 = por %p319, %p320
      %p322 = scmp.ne.s32.totalorder %s313, %s314
      %p323 = scmp.eq.s32.totalorder %s30, 0
      %p324 = por %p322, %p323
      %p325 = scmp.ne.s32.totalorder %s313, %s314
      %p326 = scmp.eq.s32.totalorder %s31, 1
      %p327 = por %p325, %p326
      %p329 = scmp.ne.s32.totalorder %s314, %s328
      %p330 = scmp.eq.s32.totalorder %s31, 0
      %p331 = por %p329, %p330
      %s333 = sadd.s32 %s332, 1
      %p336 = scmp.eq.s32.totalorder %s25, 1
      %p337 = scmp.ne.s32.totalorder %s332, %s334
      %p338 = scmp.eq.s32.totalorder %s25, 0
      %p339 = por %p337, %p338
      %p340 = scmp.ne.s32.totalorder %s332, %s334
      %p341 = scmp.eq.s32.totalorder %s30, 1
      %p342 = por %p340, %p341
      %p343 = scmp.ne.s32.totalorder %s334, %s335
      %p344 = scmp.eq.s32.totalorder %s30, 0
      %p345 = por %p343, %p344
      %p346 = scmp.ne.s32.totalorder %s334, %s335
      %p347 = scmp.eq.s32.totalorder %s31, 1
      %p348 = por %p346, %p347
      %p350 = scmp.ne.s32.totalorder %s335, %s349
      %p351 = scmp.eq.s32.totalorder %s31, 0
      %p352 = por %p350, %p351
      %s354 = sadd.s32 %s353, 1
      %p357 = scmp.eq.s32.totalorder %s25, 1
      %p358 = scmp.ne.s32.totalorder %s353, %s355
      %p359 = scmp.eq.s32.totalorder %s25, 0
      %p360 = por %p358, %p359
      %p361 = scmp.ne.s32.totalorder %s353, %s355
      %p362 = scmp.eq.s32.totalorder %s30, 1
      %p363 = por %p361, %p362
      %p364 = scmp.ne.s32.totalorder %s355, %s356
      %p365 = scmp.eq.s32.totalorder %s30, 0
      %p366 = por %p364, %p365
      %p367 = scmp.ne.s32.totalorder %s355, %s356
      %p368 = scmp.eq.s32.totalorder %s31, 1
      %p369 = por %p367, %p368
      %p371 = scmp.ne.s32.totalorder %s356, %s370
      %p372 = scmp.eq.s32.totalorder %s31, 0
      %p373 = por %p371, %p372
      %s374 = ssub.s32 %s25, %s32
      %p375 = scmp.eq.s32.totalorder %s374, 0
      %s377 = sadd.s32 %s376, 1
      %s378 = scalar_select %p375, %s376, %s377
      %p381 = pneg %p375
      %p382 = scmp.eq.s32.totalorder %s25, 1
      %p383 = por %p381, %p382
      %p384 = scmp.ne.s32.totalorder %s376, %s379
      %p385 = scmp.eq.s32.totalorder %s25, 0
      %p386 = por %p384, %p385
      %p387 = scmp.ne.s32.totalorder %s376, %s379
      %p388 = scmp.eq.s32.totalorder %s30, 1
      %p389 = por %p387, %p388
      %p390 = scmp.ne.s32.totalorder %s379, %s380
      %p391 = scmp.eq.s32.totalorder %s30, 0
      %p392 = por %p390, %p391
      %p393 = scmp.ne.s32.totalorder %s379, %s380
      %p394 = scmp.eq.s32.totalorder %s31, 1
      %p395 = por %p393, %p394
      %p397 = scmp.ne.s32.totalorder %s380, %s396
      %p398 = scmp.eq.s32.totalorder %s31, 0
      %p399 = por %p397, %p398
      %p400 = scmp.le.s32.totalorder 1, %s25
      %p401 = scmp.lt.s32.totalorder %s25, 3
      %p402 = pnand %p400, %p401
      %p403 = pneg %p402
      // Predicated region
      $region9: #{cae_forward.1} parent=5 // pred_check
        _
      $region10: #{cae_forward.1} parent=5 // pred_check_branch
        %405 = sbr.rel (%p402) target = $region12
      $region11: #{cae_forward.1} parent=5 // pred_region
        %s406 = ssub.s32 %s25, 1
        // Predicated region
        $region13: #{cae_forward.1} parent=11 // pred_check
          %p407 = pneg %p72
        $region14: #{cae_forward.1} parent=11 // pred_check_branch
          %409 = sbr.rel (%p407) target = $region16
        $region15: #{cae_forward.1} parent=11 // pred_region
          _
        $region16: #{cae_forward.1} parent=11 // pred_fallthru
          _
        // Predicated region
        $region17: #{cae_forward.1} parent=11 // pred_check
          %p410 = pneg %p93
        $region18: #{cae_forward.1} parent=11 // pred_check_branch
          %412 = sbr.rel (%p410) target = $region20
        $region19: #{cae_forward.1} parent=11 // pred_region
          _
        $region20: #{cae_forward.1} parent=11 // pred_fallthru
          _
        // Predicated region
        $region21: #{cae_forward.1} parent=11 // pred_check
          %p413 = pneg %p114
        $region22: #{cae_forward.1} parent=11 // pred_check_branch
          %415 = sbr.rel (%p413) target = $region24
        $region23: #{cae_forward.1} parent=11 // pred_region
          _
        $region24: #{cae_forward.1} parent=11 // pred_fallthru
          _
        // Predicated region
        $region25: #{cae_forward.1} parent=11 // pred_check
          %p416 = pneg %p135
        $region26: #{cae_forward.1} parent=11 // pred_check_branch
          %418 = sbr.rel (%p416) target = $region28
        $region27: #{cae_forward.1} parent=11 // pred_region
          _
        $region28: #{cae_forward.1} parent=11 // pred_fallthru
          _
        // Predicated region
        $region29: #{cae_forward.1} parent=11 // pred_check
          %p419 = pneg %p156
        $region30: #{cae_forward.1} parent=11 // pred_check_branch
          %421 = sbr.rel (%p419) target = $region32
        $region31: #{cae_forward.1} parent=11 // pred_region
          _
        $region32: #{cae_forward.1} parent=11 // pred_fallthru
          _
        // Predicated region
        $region33: #{cae_forward.1} parent=11 // pred_check
          %p422 = pneg %p177
        $region34: #{cae_forward.1} parent=11 // pred_check_branch
          %424 = sbr.rel (%p422) target = $region36
        $region35: #{cae_forward.1} parent=11 // pred_region
          _
        $region36: #{cae_forward.1} parent=11 // pred_fallthru
          _
        // Predicated region
        $region37: #{cae_forward.1} parent=11 // pred_check
          %p425 = pneg %p198
        $region38: #{cae_forward.1} parent=11 // pred_check_branch
          %427 = sbr.rel (%p425) target = $region40
        $region39: #{cae_forward.1} parent=11 // pred_region
          %s429 = ssub.s32 32, 32
          %430 = vsyncadd [#allocation4], %s429
          %s432 = sshll.u32 [#allocation3], 4
          %s433 = int_to_ptr.vmem [resolvable:$true] %s432
          %435 = dma.hbm_to_vmem [thread:$0]  %s7, 32, %s433, [#allocation4]
        $region40: #{cae_forward.1} parent=11 // pred_fallthru
          _
        // Predicated region
        $region41: #{cae_forward.1} parent=11 // pred_check
          %p436 = pneg %p219
        $region42: #{cae_forward.1} parent=11 // pred_check_branch
          %438 = sbr.rel (%p436) target = $region44
        $region43: #{cae_forward.1} parent=11 // pred_region
          %s440 = ssub.s32 16, 16
          %441 = vsyncadd [#allocation6], %s440
          %s443 = sshll.u32 [#allocation5], 4
          %s444 = int_to_ptr.vmem [resolvable:$true] %s443
          %446 = dma.hbm_to_vmem [thread:$0]  %s8, 16, %s444, [#allocation6]
        $region44: #{cae_forward.1} parent=11 // pred_fallthru
          _
        // Predicated region
        $region45: #{cae_forward.1} parent=11 // pred_check
          %p447 = pneg %p240
        $region46: #{cae_forward.1} parent=11 // pred_check_branch
          %449 = sbr.rel (%p447) target = $region48
        $region47: #{cae_forward.1} parent=11 // pred_region
          %s451 = ssub.s32 1024, 1024
          %452 = vsyncadd [#allocation6], %s451
          %s453 = sshll.u32 [#allocation7], 4
          %s454 = int_to_ptr.vmem [resolvable:$true] %s453
          %459 = dma.hbm_to_vmem [thread:$0]  %s9, 1024, %s454, [#allocation6], 512, 512, 32
        $region48: #{cae_forward.1} parent=11 // pred_fallthru
          _
        // Predicated region
        $region49: #{cae_forward.1} parent=11 // pred_check
          %p460 = pneg %p261
        $region50: #{cae_forward.1} parent=11 // pred_check_branch
          %462 = sbr.rel (%p460) target = $region52
        $region51: #{cae_forward.1} parent=11 // pred_region
          %s464 = ssub.s32 256, 256
          %465 = vsyncadd [#allocation9], %s464
          %s467 = sshll.u32 [#allocation8], 4
          %s468 = int_to_ptr.vmem [resolvable:$true] %s467
          %470 = dma.hbm_to_vmem [thread:$0]  %s10, 256, %s468, [#allocation9]
        $region52: #{cae_forward.1} parent=11 // pred_fallthru
          _
        // Predicated region
        $region53: #{cae_forward.1} parent=11 // pred_check
          %p471 = pneg %p282
        $region54: #{cae_forward.1} parent=11 // pred_check_branch
          %473 = sbr.rel (%p471) target = $region56
        $region55: #{cae_forward.1} parent=11 // pred_region
          _
        $region56: #{cae_forward.1} parent=11 // pred_fallthru
          _
        // Predicated region
        $region57: #{cae_forward.1} parent=11 // pred_check
          %p474 = pneg %p303
        $region58: #{cae_forward.1} parent=11 // pred_check_branch
          %476 = sbr.rel (%p474) target = $region60
        $region59: #{cae_forward.1} parent=11 // pred_region
          _
        $region60: #{cae_forward.1} parent=11 // pred_fallthru
          _
        // Predicated region
        $region61: #{cae_forward.1} parent=11 // pred_check
          %p477 = pneg %p324
        $region62: #{cae_forward.1} parent=11 // pred_check_branch
          %479 = sbr.rel (%p477) target = $region64
        $region63: #{cae_forward.1} parent=11 // pred_region
          _
        $region64: #{cae_forward.1} parent=11 // pred_fallthru
          _
        // Predicated region
        $region65: #{cae_forward.1} parent=11 // pred_check
          %p480 = pneg %p345
        $region66: #{cae_forward.1} parent=11 // pred_check_branch
          %482 = sbr.rel (%p480) target = $region68
        $region67: #{cae_forward.1} parent=11 // pred_region
          _
        $region68: #{cae_forward.1} parent=11 // pred_fallthru
          _
        // Predicated region
        $region69: #{cae_forward.1} parent=11 // pred_check
          %p483 = pneg %p366
        $region70: #{cae_forward.1} parent=11 // pred_check_branch
          %485 = sbr.rel (%p483) target = $region72
        $region71: #{cae_forward.1} parent=11 // pred_region
          _
        $region72: #{cae_forward.1} parent=11 // pred_fallthru
          _
      $region12: #{cae_forward.1} parent=5 // pred_fallthru
        _
      %p486 = scmp.lt.s32.totalorder %s25, 2
      // Predicated region
      $region73: #{cae_forward.1} parent=5 // pred_check
        %p487 = pneg %p486
      $region74: #{cae_forward.1} parent=5 // pred_check_branch
        %489 = sbr.rel (%p487) target = $region76
      $region75: #{cae_forward.1} parent=5 // pred_region
        // Predicated region
        $region77: #{cae_forward.1} parent=75 // pred_check
          %p490 = pneg %p45
        $region78: #{cae_forward.1} parent=75 // pred_check_branch
          %492 = sbr.rel (%p490) target = $region80
        $region79: #{cae_forward.1} parent=75 // pred_region
          %s493 = smul.u32 2, %s25
          %p494 = scmp.lt.s32.totalorder %s493, 3
          %s495 = scalar_select %p494, %s493, 3
          %s496 = smul.addr %s495, 4
          %s497 = scalar_lea.vmem %s0, %s496
          %s498 = smul.u32 2, %s25
        $region80: #{cae_forward.1} parent=75 // pred_fallthru
          _
      $region76: #{cae_forward.1} parent=5 // pred_fallthru
        _
      %p499 = scmp.le.s32.totalorder 1, %s25
      %p500 = scmp.lt.s32.totalorder %s25, 3
      %p501 = pnand %p499, %p500
      %p502 = pneg %p501
      // Predicated region
      $region81: #{cae_forward.1} parent=5 // pred_check
        _
      $region82: #{cae_forward.1} parent=5 // pred_check_branch
        %504 = sbr.rel (%p501) target = $region84
      $region83: #{cae_forward.1} parent=5 // pred_region
        %s505 = ssub.s32 %s25, 1
        // Predicated region
        $region85: #{cae_forward.1} parent=83 // pred_check
          %p506 = pneg %p198
        $region86: #{cae_forward.1} parent=83 // pred_check_branch
          %508 = sbr.rel (%p506) target = $region88
        $region87: #{cae_forward.1} parent=83 // pred_region
          %509 = dma.done [#allocation4], 32
        $region88: #{cae_forward.1} parent=83 // pred_fallthru
          _
        // Predicated region
        $region89: #{cae_forward.1} parent=83 // pred_check
          %p510 = pneg %p219
        $region90: #{cae_forward.1} parent=83 // pred_check_branch
          %512 = sbr.rel (%p510) target = $region92
        $region91: #{cae_forward.1} parent=83 // pred_region
          %513 = dma.done [#allocation6], 16
        $region92: #{cae_forward.1} parent=83 // pred_fallthru
          _
        // Predicated region
        $region93: #{cae_forward.1} parent=83 // pred_check
          %p514 = pneg %p240
        $region94: #{cae_forward.1} parent=83 // pred_check_branch
          %516 = sbr.rel (%p514) target = $region96
        $region95: #{cae_forward.1} parent=83 // pred_region
          %517 = dma.done [#allocation6], 1024
        $region96: #{cae_forward.1} parent=83 // pred_fallthru
          _
        // Predicated region
        $region97: #{cae_forward.1} parent=83 // pred_check
          %p518 = pneg %p261
        $region98: #{cae_forward.1} parent=83 // pred_check_branch
          %520 = sbr.rel (%p518) target = $region100
        $region99: #{cae_forward.1} parent=83 // pred_region
          %521 = dma.done [#allocation9], 256
        $region100: #{cae_forward.1} parent=83 // pred_fallthru
          _
        %s522 = smul.u32 2, %s30
        %p523 = scmp.lt.s32.totalorder %s522, 3
        %s524 = scalar_select %p523, %s522, 3
        %s525 = smul.addr %s524, 4
        %s526 = scalar_lea.vmem %s0, %s525
        %p527 = pneg %p51
        %p528 = pneg %p48
        %p529 = pneg %p72
        %p530 = pneg %p69
        %p531 = pneg %p93
        %p532 = pneg %p90
        %p533 = pneg %p114
        %p534 = pneg %p111
        %p535 = pneg %p135
        %p536 = pneg %p132
        %p537 = pneg %p156
        %p538 = pneg %p153
        %p539 = pneg %p177
        %p540 = pneg %p174
        %p541 = pneg %p198
        %p542 = pneg %p195
        %p543 = pneg %p219
        %p544 = pneg %p216
        %p545 = pneg %p240
        %p546 = pneg %p237
        %p547 = pneg %p261
        %p548 = pneg %p258
        %p549 = pneg %p282
        %p550 = pneg %p279
        %p551 = pneg %p303
        %p552 = pneg %p300
        %p553 = pneg %p324
        %p554 = pneg %p321
        %p555 = pneg %p345
        %p556 = pneg %p342
        %p557 = pneg %p366
        %p558 = pneg %p363
        %p559 = pneg %p392
        %p560 = pneg %p389
        %s561 = smul.u32 2, %s30
        %p562 = scmp.lt.s32.totalorder %s561, 3
        %s563 = scalar_select %p562, %s561, 3
        %s564 = smul.addr %s563, 8
        %s565 = scalar_lea.vmem %s16, %s564
        %s566 = smul.u32 2, %s30
        %p567 = scmp.lt.s32.totalorder %s566, 3
        %s568 = scalar_select %p567, %s566, 3
        %s569 = smul.addr %s568, 4
        %s570 = scalar_lea.vmem %s0, %s569
        %s571 = smul.u32 2, %s30
        %s572 = smul.u32 2, %s30
        %p573 = scmp.lt.s32.totalorder %s572, 3
        %s574 = scalar_select %p573, %s572, 3
        %s575 = smul.addr %s574, 8
        %s576 = scalar_lea.vmem %s16, %s575
        %s577 = smul.u32 2, %s30
        %v579 = vld [vmem:[%s570] sm:$0x3]
        %v580 = vld [vmem:[%s570] sm:$0xc]
        %v581 = vld [vmem:[%s570 + $0x4] sm:$0x3]
        %v582 = vld [vmem:[%s570 + $0x4] sm:$0xc]
        %vm583 = vcmask 516096
        %584 = vst.msk [vmem:[#allocation2] sm:$0x1] %vm583, 0.0
        %v585 = vunpack.c.l.bf16 %v582
        %v587 = vrot.slane %v585, 3
        %vm589 = vcmask 519169
        %590 = vst.msk [vmem:[#allocation2] sm:$0xe] %vm589, %v587
        %v591 = vld [vmem:[#allocation2] sm:$0xf]
        %v592 = vld [vmem:[%s3] sm:$0x3]
        %v593 = vld [vmem:[%s2] sm:$0xff]
        %v594 = vld [vmem:[%s2 + $0x8] sm:$0xff]
        %v595 = vld [vmem:[%s2 + $0x10] sm:$0xff]
        %v596 = vld [vmem:[%s2 + $0x18] sm:$0xff]
        %v597 = vld [vmem:[%s2 + $0x20] sm:$0xff]
        %v598 = vld [vmem:[%s2 + $0x28] sm:$0xff]
        %v599 = vld [vmem:[%s2 + $0x30] sm:$0xff]
        %v600 = vld [vmem:[%s2 + $0x38] sm:$0xff]
        %v601 = vpack.c.bf16 %v591, %v591
        %s602 = scalar_lea.vmem %s2, 64
        %v603 = vld [vmem:[%s602] sm:$0xff]
        %v604 = vld [vmem:[%s602 + $0x8] sm:$0xff]
        %v605 = vld [vmem:[%s602 + $0x10] sm:$0xff]
        %v606 = vld [vmem:[%s602 + $0x18] sm:$0xff]
        %v607 = vld [vmem:[%s602 + $0x20] sm:$0xff]
        %v608 = vld [vmem:[%s602 + $0x28] sm:$0xff]
        %v609 = vld [vmem:[%s602 + $0x30] sm:$0xff]
        %v610 = vld [vmem:[%s602 + $0x38] sm:$0xff]
        %v619 = vunpack.c.l.b16 %v603
        %v620 = vunpack.c.h.b16 %v603
        %v621 = vunpack.c.l.b16 %v604
        %v622 = vunpack.c.h.b16 %v604
        %v623 = vunpack.c.l.b16 %v605
        %v624 = vunpack.c.h.b16 %v605
        %v625 = vunpack.c.l.b16 %v606
        %v626 = vunpack.c.h.b16 %v606
        %v627 = vunpack.c.l.b16 %v607
        %v628 = vunpack.c.h.b16 %v607
        %v629 = vunpack.c.l.b16 %v608
        %v630 = vunpack.c.h.b16 %v608
        %v631 = vunpack.c.l.b16 %v609
        %v632 = vunpack.c.h.b16 %v609
        %v633 = vunpack.c.l.b16 %v610
        %v634 = vunpack.c.h.b16 %v610
        %v635 = vpack.c.b16 %v621, %v619
        %v636 = vpack.c.b16 %v622, %v620
        %v637 = vpack.c.b16 %v625, %v623
        %v638 = vpack.c.b16 %v626, %v624
        %v639 = vpack.c.b16 %v629, %v627
        %v640 = vpack.c.b16 %v630, %v628
        %v641 = vpack.c.b16 %v633, %v631
        %v642 = vpack.c.b16 %v634, %v632
        %vm651 = vcmask 523264
        %v653 = vsel %vm651, %v579, 0
        %655 = vmatprep.subr.bf16.mxu0 %v636
        %656 = vmatpush1.bf16.msra.mxu0 %v635
        %657 = vmatprep.subr.bf16.mxu0 %v638
        %658 = vmatpush1.bf16.msra.mxu0 %v637
        %659 = vmatprep.subr.bf16.mxu0 %v640
        %660 = vmatpush1.bf16.msra.mxu0 %v639
        %661 = vmatprep.subr.bf16.mxu0 %v642
        %662 = vmatpush1.bf16.msra.mxu0 %v641
        %663 = vmatprep.subr.bf16.mxu0 0
        %664 = vmatpush1.bf16.msra.mxu0 0
        %665 = vmatprep.subr.bf16.mxu0 0
        %666 = vmatpush1.bf16.msra.mxu0 0
        %667 = vmatprep.subr.bf16.mxu0 0
        %668 = vmatpush1.bf16.msra.mxu0 0
        %669 = vmatprep.subr.bf16.mxu0 0
        %670 = vmatpush1.bf16.msra.mxu0 0
        %671 = vmatprep.subr.bf16.mxu0 0
        %672 = vmatpush1.bf16.msra.mxu0 0
        %673 = vmatprep.subr.bf16.mxu0 0
        %674 = vmatpush1.bf16.msra.mxu0 0
        %675 = vmatprep.subr.bf16.mxu0 0
        %676 = vmatpush1.bf16.msra.mxu0 0
        %677 = vmatprep.subr.bf16.mxu0 0
        %678 = vmatpush1.bf16.msra.mxu0 0
        %679 = vmatprep.subr.bf16.mxu0 0
        %680 = vmatpush1.bf16.msra.mxu0 0
        %681 = vmatprep.subr.bf16.mxu0 0
        %682 = vmatpush1.bf16.msra.mxu0 0
        %683 = vmatprep.subr.bf16.mxu0 0
        %684 = vmatpush1.bf16.msra.mxu0 0
        %685 = vmatprep.subr.bf16.mxu0 0
        %686 = vmatpush1.bf16.msra.mxu0 0
        %687 = vmatprep.mubr.bf16.mxu0 0
        %688 = vmatmul.mubr.bf16.gmra.mrb[0].mxu0 %v653
        %v689 = vpop.f32.mrb[0].mxu0
        %v690 = vadd.f32 0.0, %v689
        %v691 = vpop.f32.mrb[0].mxu0
        %v692 = vadd.f32 0.0, %v691
        %v693 = vpop.f32.mrb[0].mxu0
        %v694 = vpop.f32.mrb[0].mxu0
        %695 = vdwg.mxu0
        %v704 = vunpack.c.l.b16 %v593
        %v705 = vunpack.c.h.b16 %v593
        %v706 = vunpack.c.l.b16 %v594
        %v707 = vunpack.c.h.b16 %v594
        %v708 = vunpack.c.l.b16 %v595
        %v709 = vunpack.c.h.b16 %v595
        %v710 = vunpack.c.l.b16 %v596
        %v711 = vunpack.c.h.b16 %v596
        %v712 = vunpack.c.l.b16 %v597
        %v713 = vunpack.c.h.b16 %v597
        %v714 = vunpack.c.l.b16 %v598
        %v715 = vunpack.c.h.b16 %v598
        %v716 = vunpack.c.l.b16 %v599
        %v717 = vunpack.c.h.b16 %v599
        %v718 = vunpack.c.l.b16 %v600
        %v719 = vunpack.c.h.b16 %v600
        %v720 = vpack.c.b16 %v706, %v704
        %v721 = vpack.c.b16 %v707, %v705
        %v722 = vpack.c.b16 %v710, %v708
        %v723 = vpack.c.b16 %v711, %v709
        %v724 = vpack.c.b16 %v714, %v712
        %v725 = vpack.c.b16 %v715, %v713
        %v726 = vpack.c.b16 %v718, %v716
        %v727 = vpack.c.b16 %v719, %v717
        %v737 = vsel %vm651, %v601, 0
        %739 = vmatprep.subr.bf16.mxu0 %v721
        %740 = vmatpush1.bf16.msra.mxu0 %v720
        %741 = vmatprep.subr.bf16.mxu0 %v723
        %742 = vmatpush1.bf16.msra.mxu0 %v722
        %743 = vmatprep.subr.bf16.mxu0 %v725
        %744 = vmatpush1.bf16.msra.mxu0 %v724
        %745 = vmatprep.subr.bf16.mxu0 %v727
        %746 = vmatpush1.bf16.msra.mxu0 %v726
        %747 = vmatprep.subr.bf16.mxu0 0
        %748 = vmatpush1.bf16.msra.mxu0 0
        %749 = vmatprep.subr.bf16.mxu0 0
        %750 = vmatpush1.bf16.msra.mxu0 0
        %751 = vmatprep.subr.bf16.mxu0 0
        %752 = vmatpush1.bf16.msra.mxu0 0
        %753 = vmatprep.subr.bf16.mxu0 0
        %754 = vmatpush1.bf16.msra.mxu0 0
        %755 = vmatprep.subr.bf16.mxu0 0
        %756 = vmatpush1.bf16.msra.mxu0 0
        %757 = vmatprep.subr.bf16.mxu0 0
        %758 = vmatpush1.bf16.msra.mxu0 0
        %759 = vmatprep.subr.bf16.mxu0 0
        %760 = vmatpush1.bf16.msra.mxu0 0
        %761 = vmatprep.subr.bf16.mxu0 0
        %762 = vmatpush1.bf16.msra.mxu0 0
        %763 = vmatprep.subr.bf16.mxu0 0
        %764 = vmatpush1.bf16.msra.mxu0 0
        %765 = vmatprep.subr.bf16.mxu0 0
        %766 = vmatpush1.bf16.msra.mxu0 0
        %767 = vmatprep.subr.bf16.mxu0 0
        %768 = vmatpush1.bf16.msra.mxu0 0
        %769 = vmatprep.subr.bf16.mxu0 0
        %770 = vmatpush1.bf16.msra.mxu0 0
        %771 = vmatprep.mubr.bf16.mxu0 0
        %772 = vmatmul.mubr.bf16.gmra.mrb[0].mxu0 %v737
        %v773 = vpop.f32.mrb[0].mxu0
        %v774 = vadd.f32 %v690, %v773
        %v775 = vpop.f32.mrb[0].mxu0
        %v776 = vadd.f32 %v692, %v775
        %v777 = vpop.f32.mrb[0].mxu0
        %v778 = vpop.f32.mrb[0].mxu0
        %779 = vdwg.mxu0
        %s780 = scalar_lea.vmem %s2, 128
        %v781 = vld [vmem:[%s780] sm:$0xff]
        %v782 = vld [vmem:[%s780 + $0x8] sm:$0xff]
        %v783 = vld [vmem:[%s780 + $0x10] sm:$0xff]
        %v784 = vld [vmem:[%s780 + $0x18] sm:$0xff]
        %v785 = vld [vmem:[%s780 + $0x20] sm:$0xff]
        %v786 = vld [vmem:[%s780 + $0x28] sm:$0xff]
        %v787 = vld [vmem:[%s780 + $0x30] sm:$0xff]
        %v788 = vld [vmem:[%s780 + $0x38] sm:$0xff]
        %v790 = vunpack.c.l.b16 %v580
        %v791 = vpack.c.b16 %v790, %v790
        %v792 = vrot.slane %v791, 2
        %v801 = vunpack.c.l.b16 %v781
        %v802 = vunpack.c.h.b16 %v781
        %v803 = vunpack.c.l.b16 %v782
        %v804 = vunpack.c.h.b16 %v782
        %v805 = vunpack.c.l.b16 %v783
        %v806 = vunpack.c.h.b16 %v783
        %v807 = vunpack.c.l.b16 %v784
        %v808 = vunpack.c.h.b16 %v784
        %v809 = vunpack.c.l.b16 %v785
        %v810 = vunpack.c.h.b16 %v785
        %v811 = vunpack.c.l.b16 %v786
        %v812 = vunpack.c.h.b16 %v786
        %v813 = vunpack.c.l.b16 %v787
        %v814 = vunpack.c.h.b16 %v787
        %v815 = vunpack.c.l.b16 %v788
        %v816 = vunpack.c.h.b16 %v788
        %v817 = vpack.c.b16 %v803, %v801
        %v818 = vpack.c.b16 %v804, %v802
        %v819 = vpack.c.b16 %v807, %v805
        %v820 = vpack.c.b16 %v808, %v806
        %v821 = vpack.c.b16 %v811, %v809
        %v822 = vpack.c.b16 %v812, %v810
        %v823 = vpack.c.b16 %v815, %v813
        %v824 = vpack.c.b16 %v816, %v814
        %v834 = vsel %vm651, %v792, 0
        %836 = vmatprep.subr.bf16.mxu0 %v818
        %837 = vmatpush1.bf16.msra.mxu0 %v817
        %838 = vmatprep.subr.bf16.mxu0 %v820
        %839 = vmatpush1.bf16.msra.mxu0 %v819
        %840 = vmatprep.subr.bf16.mxu0 %v822
        %841 = vmatpush1.bf16.msra.mxu0 %v821
        %842 = vmatprep.subr.bf16.mxu0 %v824
        %843 = vmatpush1.bf16.msra.mxu0 %v823
        %844 = vmatprep.subr.bf16.mxu0 0
        %845 = vmatpush1.bf16.msra.mxu0 0
        %846 = vmatprep.subr.bf16.mxu0 0
        %847 = vmatpush1.bf16.msra.mxu0 0
        %848 = vmatprep.subr.bf16.mxu0 0
        %849 = vmatpush1.bf16.msra.mxu0 0
        %850 = vmatprep.subr.bf16.mxu0 0
        %851 = vmatpush1.bf16.msra.mxu0 0
        %852 = vmatprep.subr.bf16.mxu0 0
        %853 = vmatpush1.bf16.msra.mxu0 0
        %854 = vmatprep.subr.bf16.mxu0 0
        %855 = vmatpush1.bf16.msra.mxu0 0
        %856 = vmatprep.subr.bf16.mxu0 0
        %857 = vmatpush1.bf16.msra.mxu0 0
        %858 = vmatprep.subr.bf16.mxu0 0
        %859 = vmatpush1.bf16.msra.mxu0 0
        %860 = vmatprep.subr.bf16.mxu0 0
        %861 = vmatpush1.bf16.msra.mxu0 0
        %862 = vmatprep.subr.bf16.mxu0 0
        %863 = vmatpush1.bf16.msra.mxu0 0
        %864 = vmatprep.subr.bf16.mxu0 0
        %865 = vmatpush1.bf16.msra.mxu0 0
        %866 = vmatprep.subr.bf16.mxu0 0
        %867 = vmatpush1.bf16.msra.mxu0 0
        %868 = vmatprep.mubr.bf16.mxu0 0
        %869 = vmatmul.mubr.bf16.gmra.mrb[0].mxu0 %v834
        %v870 = vpop.f32.mrb[0].mxu0
        %v871 = vadd.f32 0.0, %v870
        %v872 = vpop.f32.mrb[0].mxu0
        %v873 = vadd.f32 0.0, %v872
        %v874 = vpop.f32.mrb[0].mxu0
        %v875 = vpop.f32.mrb[0].mxu0
        %876 = vdwg.mxu0
        %v877 = vadd.f32 %v774, %v871
        %v878 = vadd.f32 %v776, %v873
        %v880 = vlaneseq
        %v881 = vshrl.u32 %v880, 7
        %v882 = vsub.s32 0, %v881
        %v883 = vrot.slane %v592, %v882
        %v884 = vlaneseq
        %v885 = vshrl.u32 %v884, 7
        %v886 = vsub.s32 1, %v885
        %v887 = vrot.slane %v592, %v886
        %v890 = vadd.f32 %v877, %v883
        %v891 = vadd.f32 %v878, %v887
        %v892 = vmax.f32 %v890, 0.0
        %v893 = vmax.f32 %v891, 0.0
        %v895 = vsel %vm651, %v581, 0
        %897 = vmatprep.subr.bf16.mxu0 %v636
        %898 = vmatpush1.bf16.msra.mxu0 %v635
        %899 = vmatprep.subr.bf16.mxu0 %v638
        %900 = vmatpush1.bf16.msra.mxu0 %v637
        %901 = vmatprep.subr.bf16.mxu0 %v640
        %902 = vmatpush1.bf16.msra.mxu0 %v639
        %903 = vmatprep.subr.bf16.mxu0 %v642
        %904 = vmatpush1.bf16.msra.mxu0 %v641
        %905 = vmatprep.subr.bf16.mxu0 0
        %906 = vmatpush1.bf16.msra.mxu0 0
        %907 = vmatprep.subr.bf16.mxu0 0
        %908 = vmatpush1.bf16.msra.mxu0 0
        %909 = vmatprep.subr.bf16.mxu0 0
        %910 = vmatpush1.bf16.msra.mxu0 0
        %911 = vmatprep.subr.bf16.mxu0 0
        %912 = vmatpush1.bf16.msra.mxu0 0
        %913 = vmatprep.subr.bf16.mxu0 0
        %914 = vmatpush1.bf16.msra.mxu0 0
        %915 = vmatprep.subr.bf16.mxu0 0
        %916 = vmatpush1.bf16.msra.mxu0 0
        %917 = vmatprep.subr.bf16.mxu0 0
        %918 = vmatpush1.bf16.msra.mxu0 0
        %919 = vmatprep.subr.bf16.mxu0 0
        %920 = vmatpush1.bf16.msra.mxu0 0
        %921 = vmatprep.subr.bf16.mxu0 0
        %922 = vmatpush1.bf16.msra.mxu0 0
        %923 = vmatprep.subr.bf16.mxu0 0
        %924 = vmatpush1.bf16.msra.mxu0 0
        %925 = vmatprep.subr.bf16.mxu0 0
        %926 = vmatpush1.bf16.msra.mxu0 0
        %927 = vmatprep.subr.bf16.mxu0 0
        %928 = vmatpush1.bf16.msra.mxu0 0
        %929 = vmatprep.mubr.bf16.mxu0 0
        %930 = vmatmul.mubr.bf16.gmra.mrb[0].mxu0 %v895
        %v931 = vpop.f32.mrb[0].mxu0
        %v932 = vadd.f32 0.0, %v931
        %v933 = vpop.f32.mrb[0].mxu0
        %v934 = vadd.f32 0.0, %v933
        %v935 = vpop.f32.mrb[0].mxu0
        %v936 = vpop.f32.mrb[0].mxu0
        %937 = vdwg.mxu0
        %938 = vmatprep.subr.bf16.mxu0 %v721
        %939 = vmatpush1.bf16.msra.mxu0 %v720
        %940 = vmatprep.subr.bf16.mxu0 %v723
        %941 = vmatpush1.bf16.msra.mxu0 %v722
        %942 = vmatprep.subr.bf16.mxu0 %v725
        %943 = vmatpush1.bf16.msra.mxu0 %v724
        %944 = vmatprep.subr.bf16.mxu0 %v727
        %945 = vmatpush1.bf16.msra.mxu0 %v726
        %946 = vmatprep.subr.bf16.mxu0 0
        %947 = vmatpush1.bf16.msra.mxu0 0
        %948 = vmatprep.subr.bf16.mxu0 0
        %949 = vmatpush1.bf16.msra.mxu0 0
        %950 = vmatprep.subr.bf16.mxu0 0
        %951 = vmatpush1.bf16.msra.mxu0 0
        %952 = vmatprep.subr.bf16.mxu0 0
        %953 = vmatpush1.bf16.msra.mxu0 0
        %954 = vmatprep.subr.bf16.mxu0 0
        %955 = vmatpush1.bf16.msra.mxu0 0
        %956 = vmatprep.subr.bf16.mxu0 0
        %957 = vmatpush1.bf16.msra.mxu0 0
        %958 = vmatprep.subr.bf16.mxu0 0
        %959 = vmatpush1.bf16.msra.mxu0 0
        %960 = vmatprep.subr.bf16.mxu0 0
        %961 = vmatpush1.bf16.msra.mxu0 0
        %962 = vmatprep.subr.bf16.mxu0 0
        %963 = vmatpush1.bf16.msra.mxu0 0
        %964 = vmatprep.subr.bf16.mxu0 0
        %965 = vmatpush1.bf16.msra.mxu0 0
        %966 = vmatprep.subr.bf16.mxu0 0
        %967 = vmatpush1.bf16.msra.mxu0 0
        %968 = vmatprep.subr.bf16.mxu0 0
        %969 = vmatpush1.bf16.msra.mxu0 0
        %970 = vmatprep.mubr.bf16.mxu0 0
        %971 = vmatmul.mubr.bf16.gmra.mrb[0].mxu0 %v834
        %v972 = vpop.f32.mrb[0].mxu0
        %v973 = vadd.f32 %v932, %v972
        %v974 = vpop.f32.mrb[0].mxu0
        %v975 = vadd.f32 %v934, %v974
        %v976 = vpop.f32.mrb[0].mxu0
        %v977 = vpop.f32.mrb[0].mxu0
        %978 = vdwg.mxu0
        %v980 = vunpack.c.l.b16 %v582
        %v981 = vpack.c.b16 %v980, %v980
        %v982 = vrot.slane %v981, 2
        %v984 = vsel %vm651, %v982, 0
        %986 = vmatprep.subr.bf16.mxu0 %v818
        %987 = vmatpush1.bf16.msra.mxu0 %v817
        %988 = vmatprep.subr.bf16.mxu0 %v820
        %989 = vmatpush1.bf16.msra.mxu0 %v819
        %990 = vmatprep.subr.bf16.mxu0 %v822
        %991 = vmatpush1.bf16.msra.mxu0 %v821
        %992 = vmatprep.subr.bf16.mxu0 %v824
        %993 = vmatpush1.bf16.msra.mxu0 %v823
        %994 = vmatprep.subr.bf16.mxu0 0
        %995 = vmatpush1.bf16.msra.mxu0 0
        %996 = vmatprep.subr.bf16.mxu0 0
        %997 = vmatpush1.bf16.msra.mxu0 0
        %998 = vmatprep.subr.bf16.mxu0 0
        %999 = vmatpush1.bf16.msra.mxu0 0
        %1000 = vmatprep.subr.bf16.mxu0 0
        %1001 = vmatpush1.bf16.msra.mxu0 0
        %1002 = vmatprep.subr.bf16.mxu0 0
        %1003 = vmatpush1.bf16.msra.mxu0 0
        %1004 = vmatprep.subr.bf16.mxu0 0
        %1005 = vmatpush1.bf16.msra.mxu0 0
        %1006 = vmatprep.subr.bf16.mxu0 0
        %1007 = vmatpush1.bf16.msra.mxu0 0
        %1008 = vmatprep.subr.bf16.mxu0 0
        %1009 = vmatpush1.bf16.msra.mxu0 0
        %1010 = vmatprep.subr.bf16.mxu0 0
        %1011 = vmatpush1.bf16.msra.mxu0 0
        %1012 = vmatprep.subr.bf16.mxu0 0
        %1013 = vmatpush1.bf16.msra.mxu0 0
        %1014 = vmatprep.subr.bf16.mxu0 0
        %1015 = vmatpush1.bf16.msra.mxu0 0
        %1016 = vmatprep.subr.bf16.mxu0 0
        %1017 = vmatpush1.bf16.msra.mxu0 0
        %1018 = vmatprep.mubr.bf16.mxu0 0
        %1019 = vmatmul.mubr.bf16.gmra.mrb[0].mxu0 %v984
        %v1020 = vpop.f32.mrb[0].mxu0
        %v1021 = vadd.f32 0.0, %v1020
        %v1022 = vpop.f32.mrb[0].mxu0
        %v1023 = vadd.f32 0.0, %v1022
        %v1024 = vpop.f32.mrb[0].mxu0
        %v1025 = vpop.f32.mrb[0].mxu0
        %1026 = vdwg.mxu0
        %v1027 = vadd.f32 %v973, %v1021
        %v1028 = vadd.f32 %v975, %v1023
        %v1029 = vadd.f32 %v1027, %v883
        %v1030 = vadd.f32 %v1028, %v887
        %v1031 = vmax.f32 %v1029, 0.0
        %v1032 = vmax.f32 %v1030, 0.0
        %v1033 = vlaneseq
        %vm1034 = vcmp.ge.s32.totalorder %v1033, 0
        %vm1035 = vcmp.lt.s32.totalorder %v1033, 256
        %vm1036 = vmand %vm1034, %vm1035
        %1037 = vst.msk [vmem:[#allocation2] ss:$8 sm:$0x3] %vm1036, 0.0
        %1038 = vst.msk [vmem:[#allocation2] ss:$8 sm:$0x0] %vm1036, 0.0
        %v1041 = vrot.slane %v1031, 7
        %v1042 = vrot.slane %v1032, 7
        %1045 = vst [vmem:[#allocation2] sm:$0xe] %v1041
        %1046 = vst [vmem:[#allocation2 + $0x8] sm:$0xe] %v1042
        %v1047 = vld [vmem:[#allocation2] sm:$0xf]
        %v1048 = vld [vmem:[#allocation2 + $0x8] sm:$0xf]
        %v1049 = vld [vmem:[%s4] sm:$0xff]
        %v1050 = vld [vmem:[%s4 + $0x8] sm:$0xff]
        %v1051 = vld [vmem:[%s4 + $0x10] sm:$0xff]
        %v1052 = vld [vmem:[%s4 + $0x18] sm:$0xff]
        %v1053 = vld [vmem:[%s4 + $0x20] sm:$0xff]
        %v1054 = vld [vmem:[%s4 + $0x28] sm:$0xff]
        %v1055 = vld [vmem:[%s4 + $0x30] sm:$0xff]
        %v1056 = vld [vmem:[%s4 + $0x38] sm:$0xff]
        %v1057 = vld [vmem:[%s4 + $0x40] sm:$0xff]
        %v1058 = vld [vmem:[%s4 + $0x48] sm:$0xff]
        %v1059 = vld [vmem:[%s4 + $0x50] sm:$0xff]
        %v1060 = vld [vmem:[%s4 + $0x58] sm:$0xff]
        %v1061 = vld [vmem:[%s4 + $0x60] sm:$0xff]
        %v1062 = vld [vmem:[%s4 + $0x68] sm:$0xff]
        %v1063 = vld [vmem:[%s4 + $0x70] sm:$0xff]
        %v1064 = vld [vmem:[%s4 + $0x78] sm:$0xff]
        %v1065 = vld [vmem:[%s4 + $0x80] sm:$0xff]
        %v1066 = vld [vmem:[%s4 + $0x88] sm:$0xff]
        %v1067 = vld [vmem:[%s4 + $0x90] sm:$0xff]
        %v1068 = vld [vmem:[%s4 + $0x98] sm:$0xff]
        %v1069 = vld [vmem:[%s4 + $0xa0] sm:$0xff]
        %v1070 = vld [vmem:[%s4 + $0xa8] sm:$0xff]
        %v1071 = vld [vmem:[%s4 + $0xb0] sm:$0xff]
        %v1072 = vld [vmem:[%s4 + $0xb8] sm:$0xff]
        %v1073 = vld [vmem:[%s4 + $0xc0] sm:$0xff]
        %v1074 = vld [vmem:[%s4 + $0xc8] sm:$0xff]
        %v1075 = vld [vmem:[%s4 + $0xd0] sm:$0xff]
        %v1076 = vld [vmem:[%s4 + $0xd8] sm:$0xff]
        %v1077 = vld [vmem:[%s4 + $0xe0] sm:$0xff]
        %v1078 = vld [vmem:[%s4 + $0xe8] sm:$0xff]
        %v1079 = vld [vmem:[%s4 + $0xf0] sm:$0xff]
        %v1080 = vld [vmem:[%s4 + $0xf8] sm:$0xff]
        %v1081 = vpack.c.bf16 %v1047, %v1047
        %v1082 = vpack.c.bf16 %v1048, %v1048
        %s1083 = scalar_lea.vmem %s4, 256
        %v1084 = vld [vmem:[%s1083] sm:$0xff]
        %v1085 = vld [vmem:[%s1083 + $0x8] sm:$0xff]
        %v1086 = vld [vmem:[%s1083 + $0x10] sm:$0xff]
        %v1087 = vld [vmem:[%s1083 + $0x18] sm:$0xff]
        %v1088 = vld [vmem:[%s1083 + $0x20] sm:$0xff]
        %v1089 = vld [vmem:[%s1083 + $0x28] sm:$0xff]
        %v1090 = vld [vmem:[%s1083 + $0x30] sm:$0xff]
        %v1091 = vld [vmem:[%s1083 + $0x38] sm:$0xff]
        %v1092 = vld [vmem:[%s1083 + $0x40] sm:$0xff]
        %v1093 = vld [vmem:[%s1083 + $0x48] sm:$0xff]
        %v1094 = vld [vmem:[%s1083 + $0x50] sm:$0xff]
        %v1095 = vld [vmem:[%s1083 + $0x58] sm:$0xff]
        %v1096 = vld [vmem:[%s1083 + $0x60] sm:$0xff]
        %v1097 = vld [vmem:[%s1083 + $0x68] sm:$0xff]
        %v1098 = vld [vmem:[%s1083 + $0x70] sm:$0xff]
        %v1099 = vld [vmem:[%s1083 + $0x78] sm:$0xff]
        %v1100 = vld [vmem:[%s1083 + $0x80] sm:$0xff]
        %v1101 = vld [vmem:[%s1083 + $0x88] sm:$0xff]
        %v1102 = vld [vmem:[%s1083 + $0x90] sm:$0xff]
        %v1103 = vld [vmem:[%s1083 + $0x98] sm:$0xff]
        %v1104 = vld [vmem:[%s1083 + $0xa0] sm:$0xff]
        %v1105 = vld [vmem:[%s1083 + $0xa8] sm:$0xff]
        %v1106 = vld [vmem:[%s1083 + $0xb0] sm:$0xff]
        %v1107 = vld [vmem:[%s1083 + $0xb8] sm:$0xff]
        %v1108 = vld [vmem:[%s1083 + $0xc0] sm:$0xff]
        %v1109 = vld [vmem:[%s1083 + $0xc8] sm:$0xff]
        %v1110 = vld [vmem:[%s1083 + $0xd0] sm:$0xff]
        %v1111 = vld [vmem:[%s1083 + $0xd8] sm:$0xff]
        %v1112 = vld [vmem:[%s1083 + $0xe0] sm:$0xff]
        %v1113 = vld [vmem:[%s1083 + $0xe8] sm:$0xff]
        %v1114 = vld [vmem:[%s1083 + $0xf0] sm:$0xff]
        %v1115 = vld [vmem:[%s1083 + $0xf8] sm:$0xff]
        %v1116 = vpack.c.bf16 %v892, %v892
        %v1117 = vpack.c.bf16 %v893, %v893
        %v1150 = vunpack.c.l.b16 %v1084
        %v1151 = vunpack.c.h.b16 %v1084
        %v1152 = vunpack.c.l.b16 %v1085
        %v1153 = vunpack.c.h.b16 %v1085
        %v1154 = vunpack.c.l.b16 %v1086
        %v1155 = vunpack.c.h.b16 %v1086
        %v1156 = vunpack.c.l.b16 %v1087
        %v1157 = vunpack.c.h.b16 %v1087
        %v1158 = vunpack.c.l.b16 %v1088
        %v1159 = vunpack.c.h.b16 %v1088
        %v1160 = vunpack.c.l.b16 %v1089
        %v1161 = vunpack.c.h.b16 %v1089
        %v1162 = vunpack.c.l.b16 %v1090
        %v1163 = vunpack.c.h.b16 %v1090
        %v1164 = vunpack.c.l.b16 %v1091
        %v1165 = vunpack.c.h.b16 %v1091
        %v1166 = vunpack.c.l.b16 %v1092
        %v1167 = vunpack.c.h.b16 %v1092
        %v1168 = vunpack.c.l.b16 %v1093
        %v1169 = vunpack.c.h.b16 %v1093
        %v1170 = vunpack.c.l.b16 %v1094
        %v1171 = vunpack.c.h.b16 %v1094
        %v1172 = vunpack.c.l.b16 %v1095
        %v1173 = vunpack.c.h.b16 %v1095
        %v1174 = vunpack.c.l.b16 %v1096
        %v1175 = vunpack.c.h.b16 %v1096
        %v1176 = vunpack.c.l.b16 %v1097
        %v1177 = vunpack.c.h.b16 %v1097
        %v1178 = vunpack.c.l.b16 %v1098
        %v1179 = vunpack.c.h.b16 %v1098
        %v1180 = vunpack.c.l.b16 %v1099
        %v1181 = vunpack.c.h.b16 %v1099
        %v1182 = vunpack.c.l.b16 %v1100
        %v1183 = vunpack.c.h.b16 %v1100
        %v1184 = vunpack.c.l.b16 %v1101
        %v1185 = vunpack.c.h.b16 %v1101
        %v1186 = vunpack.c.l.b16 %v1102
        %v1187 = vunpack.c.h.b16 %v1102
        %v1188 = vunpack.c.l.b16 %v1103
        %v1189 = vunpack.c.h.b16 %v1103
        %v1190 = vunpack.c.l.b16 %v1104
        %v1191 = vunpack.c.h.b16 %v1104
        %v1192 = vunpack.c.l.b16 %v1105
        %v1193 = vunpack.c.h.b16 %v1105
        %v1194 = vunpack.c.l.b16 %v1106
        %v1195 = vunpack.c.h.b16 %v1106
        %v1196 = vunpack.c.l.b16 %v1107
        %v1197 = vunpack.c.h.b16 %v1107
        %v1198 = vunpack.c.l.b16 %v1108
        %v1199 = vunpack.c.h.b16 %v1108
        %v1200 = vunpack.c.l.b16 %v1109
        %v1201 = vunpack.c.h.b16 %v1109
        %v1202 = vunpack.c.l.b16 %v1110
        %v1203 = vunpack.c.h.b16 %v1110
        %v1204 = vunpack.c.l.b16 %v1111
        %v1205 = vunpack.c.h.b16 %v1111
        %v1206 = vunpack.c.l.b16 %v1112
        %v1207 = vunpack.c.h.b16 %v1112
        %v1208 = vunpack.c.l.b16 %v1113
        %v1209 = vunpack.c.h.b16 %v1113
        %v1210 = vunpack.c.l.b16 %v1114
        %v1211 = vunpack.c.h.b16 %v1114
        %v1212 = vunpack.c.l.b16 %v1115
        %v1213 = vunpack.c.h.b16 %v1115
        %v1214 = vpack.c.b16 %v1152, %v1150
        %v1215 = vpack.c.b16 %v1153, %v1151
        %v1216 = vpack.c.b16 %v1156, %v1154
        %v1217 = vpack.c.b16 %v1157, %v1155
        %v1218 = vpack.c.b16 %v1160, %v1158
        %v1219 = vpack.c.b16 %v1161, %v1159
        %v1220 = vpack.c.b16 %v1164, %v1162
        %v1221 = vpack.c.b16 %v1165, %v1163
        %v1222 = vpack.c.b16 %v1168, %v1166
        %v1223 = vpack.c.b16 %v1169, %v1167
        %v1224 = vpack.c.b16 %v1172, %v1170
        %v1225 = vpack.c.b16 %v1173, %v1171
        %v1226 = vpack.c.b16 %v1176, %v1174
        %v1227 = vpack.c.b16 %v1177, %v1175
        %v1228 = vpack.c.b16 %v1180, %v1178
        %v1229 = vpack.c.b16 %v1181, %v1179
        %v1230 = vpack.c.b16 %v1184, %v1182
        %v1231 = vpack.c.b16 %v1185, %v1183
        %v1232 = vpack.c.b16 %v1188, %v1186
        %v1233 = vpack.c.b16 %v1189, %v1187
        %v1234 = vpack.c.b16 %v1192, %v1190
        %v1235 = vpack.c.b16 %v1193, %v1191
        %v1236 = vpack.c.b16 %v1196, %v1194
        %v1237 = vpack.c.b16 %v1197, %v1195
        %v1238 = vpack.c.b16 %v1200, %v1198
        %v1239 = vpack.c.b16 %v1201, %v1199
        %v1240 = vpack.c.b16 %v1204, %v1202
        %v1241 = vpack.c.b16 %v1205, %v1203
        %v1242 = vpack.c.b16 %v1208, %v1206
        %v1243 = vpack.c.b16 %v1209, %v1207
        %v1244 = vpack.c.b16 %v1212, %v1210
        %v1245 = vpack.c.b16 %v1213, %v1211
        %1278 = vmatprep.subr.bf16.mxu0 %v1215
        %1279 = vmatpush1.bf16.msra.mxu0 %v1214
        %1280 = vmatprep.subr.bf16.mxu0 %v1217
        %1281 = vmatpush1.bf16.msra.mxu0 %v1216
        %1282 = vmatprep.subr.bf16.mxu0 %v1219
        %1283 = vmatpush1.bf16.msra.mxu0 %v1218
        %1284 = vmatprep.subr.bf16.mxu0 %v1221
        %1285 = vmatpush1.bf16.msra.mxu0 %v1220
        %1286 = vmatprep.subr.bf16.mxu0 %v1223
        %1287 = vmatpush1.bf16.msra.mxu0 %v1222
        %1288 = vmatprep.subr.bf16.mxu0 %v1225
        %1289 = vmatpush1.bf16.msra.mxu0 %v1224
        %1290 = vmatprep.subr.bf16.mxu0 %v1227
        %1291 = vmatpush1.bf16.msra.mxu0 %v1226
        %1292 = vmatprep.subr.bf16.mxu0 %v1229
        %1293 = vmatpush1.bf16.msra.mxu0 %v1228
        %1294 = vmatprep.subr.bf16.mxu0 %v1231
        %1295 = vmatpush1.bf16.msra.mxu0 %v1230
        %1296 = vmatprep.subr.bf16.mxu0 %v1233
        %1297 = vmatpush1.bf16.msra.mxu0 %v1232
        %1298 = vmatprep.subr.bf16.mxu0 %v1235
        %1299 = vmatpush1.bf16.msra.mxu0 %v1234
        %1300 = vmatprep.subr.bf16.mxu0 %v1237
        %1301 = vmatpush1.bf16.msra.mxu0 %v1236
        %1302 = vmatprep.subr.bf16.mxu0 %v1239
        %1303 = vmatpush1.bf16.msra.mxu0 %v1238
        %1304 = vmatprep.subr.bf16.mxu0 %v1241
        %1305 = vmatpush1.bf16.msra.mxu0 %v1240
        %1306 = vmatprep.subr.bf16.mxu0 %v1243
        %1307 = vmatpush1.bf16.msra.mxu0 %v1242
        %1308 = vmatprep.subr.bf16.mxu0 %v1245
        %1309 = vmatpush1.bf16.msra.mxu0 %v1244
        %1310 = vmatprep.mubr.bf16.mxu0 %v1117
        %1311 = vmatmul.mubr.bf16.gmra.mrb[0].mxu0 %v1116
        %v1312 = vpop.f32.mrb[0].mxu0
        %v1313 = vadd.f32 0.0, %v1312
        %v1314 = vpop.f32.mrb[0].mxu0
        %v1315 = vadd.f32 0.0, %v1314
        %v1316 = vpop.f32.mrb[0].mxu0
        %v1317 = vpop.f32.mrb[0].mxu0
        %1318 = vdwg.mxu0
        %v1351 = vunpack.c.l.b16 %v1049
        %v1352 = vunpack.c.h.b16 %v1049
        %v1353 = vunpack.c.l.b16 %v1050
        %v1354 = vunpack.c.h.b16 %v1050
        %v1355 = vunpack.c.l.b16 %v1051
        %v1356 = vunpack.c.h.b16 %v1051
        %v1357 = vunpack.c.l.b16 %v1052
        %v1358 = vunpack.c.h.b16 %v1052
        %v1359 = vunpack.c.l.b16 %v1053
        %v1360 = vunpack.c.h.b16 %v1053
        %v1361 = vunpack.c.l.b16 %v1054
        %v1362 = vunpack.c.h.b16 %v1054
        %v1363 = vunpack.c.l.b16 %v1055
        %v1364 = vunpack.c.h.b16 %v1055
        %v1365 = vunpack.c.l.b16 %v1056
        %v1366 = vunpack.c.h.b16 %v1056
        %v1367 = vunpack.c.l.b16 %v1057
        %v1368 = vunpack.c.h.b16 %v1057
        %v1369 = vunpack.c.l.b16 %v1058
        %v1370 = vunpack.c.h.b16 %v1058
        %v1371 = vunpack.c.l.b16 %v1059
        %v1372 = vunpack.c.h.b16 %v1059
        %v1373 = vunpack.c.l.b16 %v1060
        %v1374 = vunpack.c.h.b16 %v1060
        %v1375 = vunpack.c.l.b16 %v1061
        %v1376 = vunpack.c.h.b16 %v1061
        %v1377 = vunpack.c.l.b16 %v1062
        %v1378 = vunpack.c.h.b16 %v1062
        %v1379 = vunpack.c.l.b16 %v1063
        %v1380 = vunpack.c.h.b16 %v1063
        %v1381 = vunpack.c.l.b16 %v1064
        %v1382 = vunpack.c.h.b16 %v1064
        %v1383 = vunpack.c.l.b16 %v1065
        %v1384 = vunpack.c.h.b16 %v1065
        %v1385 = vunpack.c.l.b16 %v1066
        %v1386 = vunpack.c.h.b16 %v1066
        %v1387 = vunpack.c.l.b16 %v1067
        %v1388 = vunpack.c.h.b16 %v1067
        %v1389 = vunpack.c.l.b16 %v1068
        %v1390 = vunpack.c.h.b16 %v1068
        %v1391 = vunpack.c.l.b16 %v1069
        %v1392 = vunpack.c.h.b16 %v1069
        %v1393 = vunpack.c.l.b16 %v1070
        %v1394 = vunpack.c.h.b16 %v1070
        %v1395 = vunpack.c.l.b16 %v1071
        %v1396 = vunpack.c.h.b16 %v1071
        %v1397 = vunpack.c.l.b16 %v1072
        %v1398 = vunpack.c.h.b16 %v1072
        %v1399 = vunpack.c.l.b16 %v1073
        %v1400 = vunpack.c.h.b16 %v1073
        %v1401 = vunpack.c.l.b16 %v1074
        %v1402 = vunpack.c.h.b16 %v1074
        %v1403 = vunpack.c.l.b16 %v1075
        %v1404 = vunpack.c.h.b16 %v1075
        %v1405 = vunpack.c.l.b16 %v1076
        %v1406 = vunpack.c.h.b16 %v1076
        %v1407 = vunpack.c.l.b16 %v1077
        %v1408 = vunpack.c.h.b16 %v1077
        %v1409 = vunpack.c.l.b16 %v1078
        %v1410 = vunpack.c.h.b16 %v1078
        %v1411 = vunpack.c.l.b16 %v1079
        %v1412 = vunpack.c.h.b16 %v1079
        %v1413 = vunpack.c.l.b16 %v1080
        %v1414 = vunpack.c.h.b16 %v1080
        %v1415 = vpack.c.b16 %v1353, %v1351
        %v1416 = vpack.c.b16 %v1354, %v1352
        %v1417 = vpack.c.b16 %v1357, %v1355
        %v1418 = vpack.c.b16 %v1358, %v1356
        %v1419 = vpack.c.b16 %v1361, %v1359
        %v1420 = vpack.c.b16 %v1362, %v1360
        %v1421 = vpack.c.b16 %v1365, %v1363
        %v1422 = vpack.c.b16 %v1366, %v1364
        %v1423 = vpack.c.b16 %v1369, %v1367
        %v1424 = vpack.c.b16 %v1370, %v1368
        %v1425 = vpack.c.b16 %v1373, %v1371
        %v1426 = vpack.c.b16 %v1374, %v1372
        %v1427 = vpack.c.b16 %v1377, %v1375
        %v1428 = vpack.c.b16 %v1378, %v1376
        %v1429 = vpack.c.b16 %v1381, %v1379
        %v1430 = vpack.c.b16 %v1382, %v1380
        %v1431 = vpack.c.b16 %v1385, %v1383
        %v1432 = vpack.c.b16 %v1386, %v1384
        %v1433 = vpack.c.b16 %v1389, %v1387
        %v1434 = vpack.c.b16 %v1390, %v1388
        %v1435 = vpack.c.b16 %v1393, %v1391
        %v1436 = vpack.c.b16 %v1394, %v1392
        %v1437 = vpack.c.b16 %v1397, %v1395
        %v1438 = vpack.c.b16 %v1398, %v1396
        %v1439 = vpack.c.b16 %v1401, %v1399
        %v1440 = vpack.c.b16 %v1402, %v1400
        %v1441 = vpack.c.b16 %v1405, %v1403
        %v1442 = vpack.c.b16 %v1406, %v1404
        %v1443 = vpack.c.b16 %v1409, %v1407
        %v1444 = vpack.c.b16 %v1410, %v1408
        %v1445 = vpack.c.b16 %v1413, %v1411
        %v1446 = vpack.c.b16 %v1414, %v1412
        %1479 = vmatprep.subr.bf16.mxu0 %v1416
        %1480 = vmatpush1.bf16.msra.mxu0 %v1415
        %1481 = vmatprep.subr.bf16.mxu0 %v1418
        %1482 = vmatpush1.bf16.msra.mxu0 %v1417
        %1483 = vmatprep.subr.bf16.mxu0 %v1420
        %1484 = vmatpush1.bf16.msra.mxu0 %v1419
        %1485 = vmatprep.subr.bf16.mxu0 %v1422
        %1486 = vmatpush1.bf16.msra.mxu0 %v1421
        %1487 = vmatprep.subr.bf16.mxu0 %v1424
        %1488 = vmatpush1.bf16.msra.mxu0 %v1423
        %1489 = vmatprep.subr.bf16.mxu0 %v1426
        %1490 = vmatpush1.bf16.msra.mxu0 %v1425
        %1491 = vmatprep.subr.bf16.mxu0 %v1428
        %1492 = vmatpush1.bf16.msra.mxu0 %v1427
        %1493 = vmatprep.subr.bf16.mxu0 %v1430
        %1494 = vmatpush1.bf16.msra.mxu0 %v1429
        %1495 = vmatprep.subr.bf16.mxu0 %v1432
        %1496 = vmatpush1.bf16.msra.mxu0 %v1431
        %1497 = vmatprep.subr.bf16.mxu0 %v1434
        %1498 = vmatpush1.bf16.msra.mxu0 %v1433
        %1499 = vmatprep.subr.bf16.mxu0 %v1436
        %1500 = vmatpush1.bf16.msra.mxu0 %v1435
        %1501 = vmatprep.subr.bf16.mxu0 %v1438
        %1502 = vmatpush1.bf16.msra.mxu0 %v1437
        %1503 = vmatprep.subr.bf16.mxu0 %v1440
        %1504 = vmatpush1.bf16.msra.mxu0 %v1439
        %1505 = vmatprep.subr.bf16.mxu0 %v1442
        %1506 = vmatpush1.bf16.msra.mxu0 %v1441
        %1507 = vmatprep.subr.bf16.mxu0 %v1444
        %1508 = vmatpush1.bf16.msra.mxu0 %v1443
        %1509 = vmatprep.subr.bf16.mxu0 %v1446
        %1510 = vmatpush1.bf16.msra.mxu0 %v1445
        %1511 = vmatprep.mubr.bf16.mxu0 %v1082
        %1512 = vmatmul.mubr.bf16.gmra.mrb[0].mxu0 %v1081
        %v1513 = vpop.f32.mrb[0].mxu0
        %v1514 = vadd.f32 %v1313, %v1513
        %v1515 = vpop.f32.mrb[0].mxu0
        %v1516 = vadd.f32 %v1315, %v1515
        %v1517 = vpop.f32.mrb[0].mxu0
        %v1518 = vpop.f32.mrb[0].mxu0
        %1519 = vdwg.mxu0
        %s1520 = scalar_lea.vmem %s4, 512
        %v1521 = vld [vmem:[%s1520] sm:$0xff]
        %v1522 = vld [vmem:[%s1520 + $0x8] sm:$0xff]
        %v1523 = vld [vmem:[%s1520 + $0x10] sm:$0xff]
        %v1524 = vld [vmem:[%s1520 + $0x18] sm:$0xff]
        %v1525 = vld [vmem:[%s1520 + $0x20] sm:$0xff]
        %v1526 = vld [vmem:[%s1520 + $0x28] sm:$0xff]
        %v1527 = vld [vmem:[%s1520 + $0x30] sm:$0xff]
        %v1528 = vld [vmem:[%s1520 + $0x38] sm:$0xff]
        %v1529 = vld [vmem:[%s1520 + $0x40] sm:$0xff]
        %v1530 = vld [vmem:[%s1520 + $0x48] sm:$0xff]
        %v1531 = vld [vmem:[%s1520 + $0x50] sm:$0xff]
        %v1532 = vld [vmem:[%s1520 + $0x58] sm:$0xff]
        %v1533 = vld [vmem:[%s1520 + $0x60] sm:$0xff]
        %v1534 = vld [vmem:[%s1520 + $0x68] sm:$0xff]
        %v1535 = vld [vmem:[%s1520 + $0x70] sm:$0xff]
        %v1536 = vld [vmem:[%s1520 + $0x78] sm:$0xff]
        %v1537 = vld [vmem:[%s1520 + $0x80] sm:$0xff]
        %v1538 = vld [vmem:[%s1520 + $0x88] sm:$0xff]
        %v1539 = vld [vmem:[%s1520 + $0x90] sm:$0xff]
        %v1540 = vld [vmem:[%s1520 + $0x98] sm:$0xff]
        %v1541 = vld [vmem:[%s1520 + $0xa0] sm:$0xff]
        %v1542 = vld [vmem:[%s1520 + $0xa8] sm:$0xff]
        %v1543 = vld [vmem:[%s1520 + $0xb0] sm:$0xff]
        %v1544 = vld [vmem:[%s1520 + $0xb8] sm:$0xff]
        %v1545 = vld [vmem:[%s1520 + $0xc0] sm:$0xff]
        %v1546 = vld [vmem:[%s1520 + $0xc8] sm:$0xff]
        %v1547 = vld [vmem:[%s1520 + $0xd0] sm:$0xff]
        %v1548 = vld [vmem:[%s1520 + $0xd8] sm:$0xff]
        %v1549 = vld [vmem:[%s1520 + $0xe0] sm:$0xff]
        %v1550 = vld [vmem:[%s1520 + $0xe8] sm:$0xff]
        %v1551 = vld [vmem:[%s1520 + $0xf0] sm:$0xff]
        %v1552 = vld [vmem:[%s1520 + $0xf8] sm:$0xff]
        %v1553 = vpack.c.bf16 %v1031, %v1031
        %v1554 = vpack.c.bf16 %v1032, %v1032
        %v1587 = vunpack.c.l.b16 %v1521
        %v1588 = vunpack.c.h.b16 %v1521
        %v1589 = vunpack.c.l.b16 %v1522
        %v1590 = vunpack.c.h.b16 %v1522
        %v1591 = vunpack.c.l.b16 %v1523
        %v1592 = vunpack.c.h.b16 %v1523
        %v1593 = vunpack.c.l.b16 %v1524
        %v1594 = vunpack.c.h.b16 %v1524
        %v1595 = vunpack.c.l.b16 %v1525
        %v1596 = vunpack.c.h.b16 %v1525
        %v1597 = vunpack.c.l.b16 %v1526
        %v1598 = vunpack.c.h.b16 %v1526
        %v1599 = vunpack.c.l.b16 %v1527
        %v1600 = vunpack.c.h.b16 %v1527
        %v1601 = vunpack.c.l.b16 %v1528
        %v1602 = vunpack.c.h.b16 %v1528
        %v1603 = vunpack.c.l.b16 %v1529
        %v1604 = vunpack.c.h.b16 %v1529
        %v1605 = vunpack.c.l.b16 %v1530
        %v1606 = vunpack.c.h.b16 %v1530
        %v1607 = vunpack.c.l.b16 %v1531
        %v1608 = vunpack.c.h.b16 %v1531
        %v1609 = vunpack.c.l.b16 %v1532
        %v1610 = vunpack.c.h.b16 %v1532
        %v1611 = vunpack.c.l.b16 %v1533
        %v1612 = vunpack.c.h.b16 %v1533
        %v1613 = vunpack.c.l.b16 %v1534
        %v1614 = vunpack.c.h.b16 %v1534
        %v1615 = vunpack.c.l.b16 %v1535
        %v1616 = vunpack.c.h.b16 %v1535
        %v1617 = vunpack.c.l.b16 %v1536
        %v1618 = vunpack.c.h.b16 %v1536
        %v1619 = vunpack.c.l.b16 %v1537
        %v1620 = vunpack.c.h.b16 %v1537
        %v1621 = vunpack.c.l.b16 %v1538
        %v1622 = vunpack.c.h.b16 %v1538
        %v1623 = vunpack.c.l.b16 %v1539
        %v1624 = vunpack.c.h.b16 %v1539
        %v1625 = vunpack.c.l.b16 %v1540
        %v1626 = vunpack.c.h.b16 %v1540
        %v1627 = vunpack.c.l.b16 %v1541
        %v1628 = vunpack.c.h.b16 %v1541
        %v1629 = vunpack.c.l.b16 %v1542
        %v1630 = vunpack.c.h.b16 %v1542
        %v1631 = vunpack.c.l.b16 %v1543
        %v1632 = vunpack.c.h.b16 %v1543
        %v1633 = vunpack.c.l.b16 %v1544
        %v1634 = vunpack.c.h.b16 %v1544
        %v1635 = vunpack.c.l.b16 %v1545
        %v1636 = vunpack.c.h.b16 %v1545
        %v1637 = vunpack.c.l.b16 %v1546
        %v1638 = vunpack.c.h.b16 %v1546
        %v1639 = vunpack.c.l.b16 %v1547
        %v1640 = vunpack.c.h.b16 %v1547
        %v1641 = vunpack.c.l.b16 %v1548
        %v1642 = vunpack.c.h.b16 %v1548
        %v1643 = vunpack.c.l.b16 %v1549
        %v1644 = vunpack.c.h.b16 %v1549
        %v1645 = vunpack.c.l.b16 %v1550
        %v1646 = vunpack.c.h.b16 %v1550
        %v1647 = vunpack.c.l.b16 %v1551
        %v1648 = vunpack.c.h.b16 %v1551
        %v1649 = vunpack.c.l.b16 %v1552
        %v1650 = vunpack.c.h.b16 %v1552
        %v1651 = vpack.c.b16 %v1589, %v1587
        %v1652 = vpack.c.b16 %v1590, %v1588
        %v1653 = vpack.c.b16 %v1593, %v1591
        %v1654 = vpack.c.b16 %v1594, %v1592
        %v1655 = vpack.c.b16 %v1597, %v1595
        %v1656 = vpack.c.b16 %v1598, %v1596
        %v1657 = vpack.c.b16 %v1601, %v1599
        %v1658 = vpack.c.b16 %v1602, %v1600
        %v1659 = vpack.c.b16 %v1605, %v1603
        %v1660 = vpack.c.b16 %v1606, %v1604
        %v1661 = vpack.c.b16 %v1609, %v1607
        %v1662 = vpack.c.b16 %v1610, %v1608
        %v1663 = vpack.c.b16 %v1613, %v1611
        %v1664 = vpack.c.b16 %v1614, %v1612
        %v1665 = vpack.c.b16 %v1617, %v1615
        %v1666 = vpack.c.b16 %v1618, %v1616
        %v1667 = vpack.c.b16 %v1621, %v1619
        %v1668 = vpack.c.b16 %v1622, %v1620
        %v1669 = vpack.c.b16 %v1625, %v1623
        %v1670 = vpack.c.b16 %v1626, %v1624
        %v1671 = vpack.c.b16 %v1629, %v1627
        %v1672 = vpack.c.b16 %v1630, %v1628
        %v1673 = vpack.c.b16 %v1633, %v1631
        %v1674 = vpack.c.b16 %v1634, %v1632
        %v1675 = vpack.c.b16 %v1637, %v1635
        %v1676 = vpack.c.b16 %v1638, %v1636
        %v1677 = vpack.c.b16 %v1641, %v1639
        %v1678 = vpack.c.b16 %v1642, %v1640
        %v1679 = vpack.c.b16 %v1645, %v1643
        %v1680 = vpack.c.b16 %v1646, %v1644
        %v1681 = vpack.c.b16 %v1649, %v1647
        %v1682 = vpack.c.b16 %v1650, %v1648
        %1715 = vmatprep.subr.bf16.mxu0 %v1652
        %1716 = vmatpush1.bf16.msra.mxu0 %v1651
        %1717 = vmatprep.subr.bf16.mxu0 %v1654
        %1718 = vmatpush1.bf16.msra.mxu0 %v1653
        %1719 = vmatprep.subr.bf16.mxu0 %v1656
        %1720 = vmatpush1.bf16.msra.mxu0 %v1655
        %1721 = vmatprep.subr.bf16.mxu0 %v1658
        %1722 = vmatpush1.bf16.msra.mxu0 %v1657
        %1723 = vmatprep.subr.bf16.mxu0 %v1660
        %1724 = vmatpush1.bf16.msra.mxu0 %v1659
        %1725 = vmatprep.subr.bf16.mxu0 %v1662
        %1726 = vmatpush1.bf16.msra.mxu0 %v1661
        %1727 = vmatprep.subr.bf16.mxu0 %v1664
        %1728 = vmatpush1.bf16.msra.mxu0 %v1663
        %1729 = vmatprep.subr.bf16.mxu0 %v1666
        %1730 = vmatpush1.bf16.msra.mxu0 %v1665
        %1731 = vmatprep.subr.bf16.mxu0 %v1668
        %1732 = vmatpush1.bf16.msra.mxu0 %v1667
        %1733 = vmatprep.subr.bf16.mxu0 %v1670
        %1734 = vmatpush1.bf16.msra.mxu0 %v1669
        %1735 = vmatprep.subr.bf16.mxu0 %v1672
        %1736 = vmatpush1.bf16.msra.mxu0 %v1671
        %1737 = vmatprep.subr.bf16.mxu0 %v1674
        %1738 = vmatpush1.bf16.msra.mxu0 %v1673
        %1739 = vmatprep.subr.bf16.mxu0 %v1676
        %1740 = vmatpush1.bf16.msra.mxu0 %v1675
        %1741 = vmatprep.subr.bf16.mxu0 %v1678
        %1742 = vmatpush1.bf16.msra.mxu0 %v1677
        %1743 = vmatprep.subr.bf16.mxu0 %v1680
        %1744 = vmatpush1.bf16.msra.mxu0 %v1679
        %1745 = vmatprep.subr.bf16.mxu0 %v1682
        %1746 = vmatpush1.bf16.msra.mxu0 %v1681
        %1747 = vmatprep.mubr.bf16.mxu0 %v1554
        %1748 = vmatmul.mubr.bf16.gmra.mrb[0].mxu0 %v1553
        %v1749 = vpop.f32.mrb[0].mxu0
        %v1750 = vadd.f32 0.0, %v1749
        %v1751 = vpop.f32.mrb[0].mxu0
        %v1752 = vadd.f32 0.0, %v1751
        %v1753 = vpop.f32.mrb[0].mxu0
        %v1754 = vpop.f32.mrb[0].mxu0
        %1755 = vdwg.mxu0
        %v1756 = vadd.f32 %v1514, %v1750
        %v1757 = vadd.f32 %v1516, %v1752
        %v1758 = vld [vmem:[%s5] sm:$0x3]
        %v1760 = vlaneseq
        %v1761 = vshrl.u32 %v1760, 7
        %v1762 = vsub.s32 0, %v1761
        %v1763 = vrot.slane %v1758, %v1762
        %v1764 = vlaneseq
        %v1765 = vshrl.u32 %v1764, 7
        %v1766 = vsub.s32 1, %v1765
        %v1767 = vrot.slane %v1758, %v1766
        %v1770 = vadd.f32 %v1756, %v1763
        %v1771 = vadd.f32 %v1757, %v1767
        %v1772 = vmax.f32 %v1770, 0.0
        %v1773 = vmax.f32 %v1771, 0.0
        %s1774 = scalar_lea.vmem %s1, %s30
        %v1775 = vld [vmem:[%s1774] sm:$0x1]
        %v1776 = vld [vmem:[#allocation5] sm:$0x1]
        %v1777 = vld [vmem:[#allocation3] sm:$0x3]
        %v1778 = vpack.c.bf16 %v1775, %v1775
        %vm1779 = vcmask 31744
        %v1781 = vsel %vm1779, %v1778, 0
        %vm1783 = vcmask 1041408
        %v1785 = vsel %vm1783, %v1777, 0
        %1787 = vmatprep.subr.bf16.mxu0 0
        %1788 = vmatpush1.bf16.msra.mxu0 %v1785
        %1789 = vmatprep.subr.bf16.mxu0 0
        %1790 = vmatpush1.bf16.msra.mxu0 0
        %1791 = vmatprep.subr.bf16.mxu0 0
        %1792 = vmatpush1.bf16.msra.mxu0 0
        %1793 = vmatprep.subr.bf16.mxu0 0
        %1794 = vmatpush1.bf16.msra.mxu0 0
        %1795 = vmatprep.subr.bf16.mxu0 0
        %1796 = vmatpush1.bf16.msra.mxu0 0
        %1797 = vmatprep.subr.bf16.mxu0 0
        %1798 = vmatpush1.bf16.msra.mxu0 0
        %1799 = vmatprep.subr.bf16.mxu0 0
        %1800 = vmatpush1.bf16.msra.mxu0 0
        %1801 = vmatprep.subr.bf16.mxu0 0
        %1802 = vmatpush1.bf16.msra.mxu0 0
        %1803 = vmatprep.subr.bf16.mxu0 0
        %1804 = vmatpush1.bf16.msra.mxu0 0
        %1805 = vmatprep.subr.bf16.mxu0 0
        %1806 = vmatpush1.bf16.msra.mxu0 0
        %1807 = vmatprep.subr.bf16.mxu0 0
        %1808 = vmatpush1.bf16.msra.mxu0 0
        %1809 = vmatprep.subr.bf16.mxu0 0
        %1810 = vmatpush1.bf16.msra.mxu0 0
        %1811 = vmatprep.subr.bf16.mxu0 0
        %1812 = vmatpush1.bf16.msra.mxu0 0
        %1813 = vmatprep.subr.bf16.mxu0 0
        %1814 = vmatpush1.bf16.msra.mxu0 0
        %1815 = vmatprep.subr.bf16.mxu0 0
        %1816 = vmatpush1.bf16.msra.mxu0 0
        %1817 = vmatprep.subr.bf16.mxu0 0
        %1818 = vmatpush1.bf16.msra.mxu0 0
        %1819 = vmatprep.mubr.bf16.mxu0 0
        %1820 = vmatmul.mubr.bf16.gmra.mrb[0].mxu0 %v1781
        %v1821 = vpop.f32.mrb[0].mxu0
        %v1822 = vadd.f32 0.0, %v1821
        %v1823 = vpop.f32.mrb[0].mxu0
        %v1824 = vpop.f32.mrb[0].mxu0
        %v1825 = vpop.f32.mrb[0].mxu0
        %1826 = vdwg.mxu0
        %v1827 = vadd.f32 %v1776, %v1822
        %v1828 = vld [vmem:[%s6] sm:$0xf]
        %v1829 = vld [vmem:[%s6 + $0x4] sm:$0xf]
        %v1830 = vld [vmem:[%s6 + $0x8] sm:$0xf]
        %v1831 = vld [vmem:[%s6 + $0xc] sm:$0xf]
        %v1832 = vld [vmem:[%s6 + $0x10] sm:$0xf]
        %v1833 = vld [vmem:[%s6 + $0x14] sm:$0xf]
        %v1834 = vld [vmem:[%s6 + $0x18] sm:$0xf]
        %v1835 = vld [vmem:[%s6 + $0x1c] sm:$0xf]
        %v1836 = vld [vmem:[%s6 + $0x20] sm:$0xf]
        %v1837 = vld [vmem:[%s6 + $0x24] sm:$0xf]
        %v1838 = vld [vmem:[%s6 + $0x28] sm:$0xf]
        %v1839 = vld [vmem:[%s6 + $0x2c] sm:$0xf]
        %v1840 = vld [vmem:[%s6 + $0x30] sm:$0xf]
        %v1841 = vld [vmem:[%s6 + $0x34] sm:$0xf]
        %v1842 = vld [vmem:[%s6 + $0x38] sm:$0xf]
        %v1843 = vld [vmem:[%s6 + $0x3c] sm:$0xf]
        %v1844 = vld [vmem:[%s6 + $0x40] sm:$0xf]
        %v1845 = vld [vmem:[%s6 + $0x44] sm:$0xf]
        %v1846 = vld [vmem:[%s6 + $0x48] sm:$0xf]
        %v1847 = vld [vmem:[%s6 + $0x4c] sm:$0xf]
        %v1848 = vld [vmem:[%s6 + $0x50] sm:$0xf]
        %v1849 = vld [vmem:[%s6 + $0x54] sm:$0xf]
        %v1850 = vld [vmem:[%s6 + $0x58] sm:$0xf]
        %v1851 = vld [vmem:[%s6 + $0x5c] sm:$0xf]
        %v1852 = vld [vmem:[%s6 + $0x60] sm:$0xf]
        %v1853 = vld [vmem:[%s6 + $0x64] sm:$0xf]
        %v1854 = vld [vmem:[%s6 + $0x68] sm:$0xf]
        %v1855 = vld [vmem:[%s6 + $0x6c] sm:$0xf]
        %v1856 = vld [vmem:[%s6 + $0x70] sm:$0xf]
        %v1857 = vld [vmem:[%s6 + $0x74] sm:$0xf]
        %v1858 = vld [vmem:[%s6 + $0x78] sm:$0xf]
        %v1859 = vld [vmem:[%s6 + $0x7c] sm:$0xf]
        %v1860 = vpack.c.bf16 %v1772, %v1772
        %v1861 = vpack.c.bf16 %v1773, %v1773
        %v1894 = vunpack.c.l.b16 %v1828
        %v1895 = vunpack.c.l.b16 %v1829
        %v1896 = vunpack.c.l.b16 %v1830
        %v1897 = vunpack.c.l.b16 %v1831
        %v1898 = vunpack.c.l.b16 %v1832
        %v1899 = vunpack.c.l.b16 %v1833
        %v1900 = vunpack.c.l.b16 %v1834
        %v1901 = vunpack.c.l.b16 %v1835
        %v1902 = vunpack.c.l.b16 %v1836
        %v1903 = vunpack.c.l.b16 %v1837
        %v1904 = vunpack.c.l.b16 %v1838
        %v1905 = vunpack.c.l.b16 %v1839
        %v1906 = vunpack.c.l.b16 %v1840
        %v1907 = vunpack.c.l.b16 %v1841
        %v1908 = vunpack.c.l.b16 %v1842
        %v1909 = vunpack.c.l.b16 %v1843
        %v1910 = vunpack.c.l.b16 %v1844
        %v1911 = vunpack.c.l.b16 %v1845
        %v1912 = vunpack.c.l.b16 %v1846
        %v1913 = vunpack.c.l.b16 %v1847
        %v1914 = vunpack.c.l.b16 %v1848
        %v1915 = vunpack.c.l.b16 %v1849
        %v1916 = vunpack.c.l.b16 %v1850
        %v1917 = vunpack.c.l.b16 %v1851
        %v1918 = vunpack.c.l.b16 %v1852
        %v1919 = vunpack.c.l.b16 %v1853
        %v1920 = vunpack.c.l.b16 %v1854
        %v1921 = vunpack.c.l.b16 %v1855
        %v1922 = vunpack.c.l.b16 %v1856
        %v1923 = vunpack.c.l.b16 %v1857
        %v1924 = vunpack.c.l.b16 %v1858
        %v1925 = vunpack.c.l.b16 %v1859
        %v1926 = vpack.c.b16 %v1895, %v1894
        %v1927 = vpack.c.b16 %v1897, %v1896
        %v1928 = vpack.c.b16 %v1899, %v1898
        %v1929 = vpack.c.b16 %v1901, %v1900
        %v1930 = vpack.c.b16 %v1903, %v1902
        %v1931 = vpack.c.b16 %v1905, %v1904
        %v1932 = vpack.c.b16 %v1907, %v1906
        %v1933 = vpack.c.b16 %v1909, %v1908
        %v1934 = vpack.c.b16 %v1911, %v1910
        %v1935 = vpack.c.b16 %v1913, %v1912
        %v1936 = vpack.c.b16 %v1915, %v1914
        %v1937 = vpack.c.b16 %v1917, %v1916
        %v1938 = vpack.c.b16 %v1919, %v1918
        %v1939 = vpack.c.b16 %v1921, %v1920
        %v1940 = vpack.c.b16 %v1923, %v1922
        %v1941 = vpack.c.b16 %v1925, %v1924
        %1958 = vmatprep.subr.bf16.mxu0 0
        %1959 = vmatpush1.bf16.msra.mxu0 %v1926
        %1960 = vmatprep.subr.bf16.mxu0 0
        %1961 = vmatpush1.bf16.msra.mxu0 %v1927
        %1962 = vmatprep.subr.bf16.mxu0 0
        %1963 = vmatpush1.bf16.msra.mxu0 %v1928
        %1964 = vmatprep.subr.bf16.mxu0 0
        %1965 = vmatpush1.bf16.msra.mxu0 %v1929
        %1966 = vmatprep.subr.bf16.mxu0 0
        %1967 = vmatpush1.bf16.msra.mxu0 %v1930
        %1968 = vmatprep.subr.bf16.mxu0 0
        %1969 = vmatpush1.bf16.msra.mxu0 %v1931
        %1970 = vmatprep.subr.bf16.mxu0 0
        %1971 = vmatpush1.bf16.msra.mxu0 %v1932
        %1972 = vmatprep.subr.bf16.mxu0 0
        %1973 = vmatpush1.bf16.msra.mxu0 %v1933
        %1974 = vmatprep.subr.bf16.mxu0 0
        %1975 = vmatpush1.bf16.msra.mxu0 %v1934
        %1976 = vmatprep.subr.bf16.mxu0 0
        %1977 = vmatpush1.bf16.msra.mxu0 %v1935
        %1978 = vmatprep.subr.bf16.mxu0 0
        %1979 = vmatpush1.bf16.msra.mxu0 %v1936
        %1980 = vmatprep.subr.bf16.mxu0 0
        %1981 = vmatpush1.bf16.msra.mxu0 %v1937
        %1982 = vmatprep.subr.bf16.mxu0 0
        %1983 = vmatpush1.bf16.msra.mxu0 %v1938
        %1984 = vmatprep.subr.bf16.mxu0 0
        %1985 = vmatpush1.bf16.msra.mxu0 %v1939
        %1986 = vmatprep.subr.bf16.mxu0 0
        %1987 = vmatpush1.bf16.msra.mxu0 %v1940
        %1988 = vmatprep.subr.bf16.mxu0 0
        %1989 = vmatpush1.bf16.msra.mxu0 %v1941
        %1990 = vmatprep.mubr.bf16.mxu0 %v1861
        %1991 = vmatmul.mubr.bf16.gmra.mrb[0].mxu0 %v1860
        %v1992 = vpop.f32.mrb[0].mxu0
        %v1993 = vadd.f32 0.0, %v1992
        %v1994 = vpop.f32.mrb[0].mxu0
        %v1995 = vpop.f32.mrb[0].mxu0
        %v1996 = vpop.f32.mrb[0].mxu0
        %1997 = vdwg.mxu0
        %v1998 = vadd.f32 %v1827, %v1993
        %v1999 = vld [vmem:[%s6 + $0x80] sm:$0xf]
        %v2000 = vld [vmem:[%s6 + $0x84] sm:$0xf]
        %v2001 = vld [vmem:[%s6 + $0x88] sm:$0xf]
        %v2002 = vld [vmem:[%s6 + $0x8c] sm:$0xf]
        %v2003 = vld [vmem:[%s6 + $0x90] sm:$0xf]
        %v2004 = vld [vmem:[%s6 + $0x94] sm:$0xf]
        %v2005 = vld [vmem:[%s6 + $0x98] sm:$0xf]
        %v2006 = vld [vmem:[%s6 + $0x9c] sm:$0xf]
        %v2007 = vld [vmem:[%s6 + $0xa0] sm:$0xf]
        %v2008 = vld [vmem:[%s6 + $0xa4] sm:$0xf]
        %v2009 = vld [vmem:[%s6 + $0xa8] sm:$0xf]
        %v2010 = vld [vmem:[%s6 + $0xac] sm:$0xf]
        %v2011 = vld [vmem:[%s6 + $0xb0] sm:$0xf]
        %v2012 = vld [vmem:[%s6 + $0xb4] sm:$0xf]
        %v2013 = vld [vmem:[%s6 + $0xb8] sm:$0xf]
        %v2014 = vld [vmem:[%s6 + $0xbc] sm:$0xf]
        %v2015 = vld [vmem:[%s6 + $0xc0] sm:$0xf]
        %v2016 = vld [vmem:[%s6 + $0xc4] sm:$0xf]
        %v2017 = vld [vmem:[%s6 + $0xc8] sm:$0xf]
        %v2018 = vld [vmem:[%s6 + $0xcc] sm:$0xf]
        %v2019 = vld [vmem:[%s6 + $0xd0] sm:$0xf]
        %v2020 = vld [vmem:[%s6 + $0xd4] sm:$0xf]
        %v2021 = vld [vmem:[%s6 + $0xd8] sm:$0xf]
        %v2022 = vld [vmem:[%s6 + $0xdc] sm:$0xf]
        %v2023 = vld [vmem:[%s6 + $0xe0] sm:$0xf]
        %v2024 = vld [vmem:[%s6 + $0xe4] sm:$0xf]
        %v2025 = vld [vmem:[%s6 + $0xe8] sm:$0xf]
        %v2026 = vld [vmem:[%s6 + $0xec] sm:$0xf]
        %v2027 = vld [vmem:[%s6 + $0xf0] sm:$0xf]
        %v2028 = vld [vmem:[%s6 + $0xf4] sm:$0xf]
        %v2029 = vld [vmem:[%s6 + $0xf8] sm:$0xf]
        %v2030 = vld [vmem:[%s6 + $0xfc] sm:$0xf]
        %v2032 = vshrl.u32 %v1860, 16
        %v2035 = vshrl.u32 %v1861, 16
        %v2071 = vunpack.c.l.b16 %v1999
        %v2072 = vunpack.c.l.b16 %v2000
        %v2073 = vunpack.c.l.b16 %v2001
        %v2074 = vunpack.c.l.b16 %v2002
        %v2075 = vunpack.c.l.b16 %v2003
        %v2076 = vunpack.c.l.b16 %v2004
        %v2077 = vunpack.c.l.b16 %v2005
        %v2078 = vunpack.c.l.b16 %v2006
        %v2079 = vunpack.c.l.b16 %v2007
        %v2080 = vunpack.c.l.b16 %v2008
        %v2081 = vunpack.c.l.b16 %v2009
        %v2082 = vunpack.c.l.b16 %v2010
        %v2083 = vunpack.c.l.b16 %v2011
        %v2084 = vunpack.c.l.b16 %v2012
        %v2085 = vunpack.c.l.b16 %v2013
        %v2086 = vunpack.c.l.b16 %v2014
        %v2087 = vunpack.c.l.b16 %v2015
        %v2088 = vunpack.c.l.b16 %v2016
        %v2089 = vunpack.c.l.b16 %v2017
        %v2090 = vunpack.c.l.b16 %v2018
        %v2091 = vunpack.c.l.b16 %v2019
        %v2092 = vunpack.c.l.b16 %v2020
        %v2093 = vunpack.c.l.b16 %v2021
        %v2094 = vunpack.c.l.b16 %v2022
        %v2095 = vunpack.c.l.b16 %v2023
        %v2096 = vunpack.c.l.b16 %v2024
        %v2097 = vunpack.c.l.b16 %v2025
        %v2098 = vunpack.c.l.b16 %v2026
        %v2099 = vunpack.c.l.b16 %v2027
        %v2100 = vunpack.c.l.b16 %v2028
        %v2101 = vunpack.c.l.b16 %v2029
        %v2102 = vunpack.c.l.b16 %v2030
        %v2103 = vpack.c.b16 %v2072, %v2071
        %v2104 = vpack.c.b16 %v2074, %v2073
        %v2105 = vpack.c.b16 %v2076, %v2075
        %v2106 = vpack.c.b16 %v2078, %v2077
        %v2107 = vpack.c.b16 %v2080, %v2079
        %v2108 = vpack.c.b16 %v2082, %v2081
        %v2109 = vpack.c.b16 %v2084, %v2083
        %v2110 = vpack.c.b16 %v2086, %v2085
        %v2111 = vpack.c.b16 %v2088, %v2087
        %v2112 = vpack.c.b16 %v2090, %v2089
        %v2113 = vpack.c.b16 %v2092, %v2091
        %v2114 = vpack.c.b16 %v2094, %v2093
        %v2115 = vpack.c.b16 %v2096, %v2095
        %v2116 = vpack.c.b16 %v2098, %v2097
        %v2117 = vpack.c.b16 %v2100, %v2099
        %v2118 = vpack.c.b16 %v2102, %v2101
        %2135 = vmatprep.subr.bf16.mxu0 0
        %2136 = vmatpush1.bf16.msra.mxu0 %v2103
        %2137 = vmatprep.subr.bf16.mxu0 0
        %2138 = vmatpush1.bf16.msra.mxu0 %v2104
        %2139 = vmatprep.subr.bf16.mxu0 0
        %2140 = vmatpush1.bf16.msra.mxu0 %v2105
        %2141 = vmatprep.subr.bf16.mxu0 0
        %2142 = vmatpush1.bf16.msra.mxu0 %v2106
        %2143 = vmatprep.subr.bf16.mxu0 0
        %2144 = vmatpush1.bf16.msra.mxu0 %v2107
        %2145 = vmatprep.subr.bf16.mxu0 0
        %2146 = vmatpush1.bf16.msra.mxu0 %v2108
        %2147 = vmatprep.subr.bf16.mxu0 0
        %2148 = vmatpush1.bf16.msra.mxu0 %v2109
        %2149 = vmatprep.subr.bf16.mxu0 0
        %2150 = vmatpush1.bf16.msra.mxu0 %v2110
        %2151 = vmatprep.subr.bf16.mxu0 0
        %2152 = vmatpush1.bf16.msra.mxu0 %v2111
        %2153 = vmatprep.subr.bf16.mxu0 0
        %2154 = vmatpush1.bf16.msra.mxu0 %v2112
        %2155 = vmatprep.subr.bf16.mxu0 0
        %2156 = vmatpush1.bf16.msra.mxu0 %v2113
        %2157 = vmatprep.subr.bf16.mxu0 0
        %2158 = vmatpush1.bf16.msra.mxu0 %v2114
        %2159 = vmatprep.subr.bf16.mxu0 0
        %2160 = vmatpush1.bf16.msra.mxu0 %v2115
        %2161 = vmatprep.subr.bf16.mxu0 0
        %2162 = vmatpush1.bf16.msra.mxu0 %v2116
        %2163 = vmatprep.subr.bf16.mxu0 0
        %2164 = vmatpush1.bf16.msra.mxu0 %v2117
        %2165 = vmatprep.subr.bf16.mxu0 0
        %2166 = vmatpush1.bf16.msra.mxu0 %v2118
        %2167 = vmatprep.mubr.bf16.mxu0 %v2035
        %2168 = vmatmul.mubr.bf16.gmra.mrb[0].mxu0 %v2032
        %v2169 = vpop.f32.mrb[0].mxu0
        %v2170 = vadd.f32 0.0, %v2169
        %v2171 = vpop.f32.mrb[0].mxu0
        %v2172 = vpop.f32.mrb[0].mxu0
        %v2173 = vpop.f32.mrb[0].mxu0
        %2174 = vdwg.mxu0
        %v2175 = vadd.f32 %v1998, %v2170
        %v2176 = vld [vmem:[%s6 + $0x100] sm:$0xf]
        %v2177 = vld [vmem:[%s6 + $0x104] sm:$0xf]
        %v2178 = vld [vmem:[%s6 + $0x108] sm:$0xf]
        %v2179 = vld [vmem:[%s6 + $0x10c] sm:$0xf]
        %v2180 = vld [vmem:[%s6 + $0x110] sm:$0xf]
        %v2181 = vld [vmem:[%s6 + $0x114] sm:$0xf]
        %v2182 = vld [vmem:[%s6 + $0x118] sm:$0xf]
        %v2183 = vld [vmem:[%s6 + $0x11c] sm:$0xf]
        %v2184 = vld [vmem:[%s6 + $0x120] sm:$0xf]
        %v2185 = vld [vmem:[%s6 + $0x124] sm:$0xf]
        %v2186 = vld [vmem:[%s6 + $0x128] sm:$0xf]
        %v2187 = vld [vmem:[%s6 + $0x12c] sm:$0xf]
        %v2188 = vld [vmem:[%s6 + $0x130] sm:$0xf]
        %v2189 = vld [vmem:[%s6 + $0x134] sm:$0xf]
        %v2190 = vld [vmem:[%s6 + $0x138] sm:$0xf]
        %v2191 = vld [vmem:[%s6 + $0x13c] sm:$0xf]
        %v2192 = vld [vmem:[%s6 + $0x140] sm:$0xf]
        %v2193 = vld [vmem:[%s6 + $0x144] sm:$0xf]
        %v2194 = vld [vmem:[%s6 + $0x148] sm:$0xf]
        %v2195 = vld [vmem:[%s6 + $0x14c] sm:$0xf]
        %v2196 = vld [vmem:[%s6 + $0x150] sm:$0xf]
        %v2197 = vld [vmem:[%s6 + $0x154] sm:$0xf]
        %v2198 = vld [vmem:[%s6 + $0x158] sm:$0xf]
        %v2199 = vld [vmem:[%s6 + $0x15c] sm:$0xf]
        %v2200 = vld [vmem:[%s6 + $0x160] sm:$0xf]
        %v2201 = vld [vmem:[%s6 + $0x164] sm:$0xf]
        %v2202 = vld [vmem:[%s6 + $0x168] sm:$0xf]
        %v2203 = vld [vmem:[%s6 + $0x16c] sm:$0xf]
        %v2204 = vld [vmem:[%s6 + $0x170] sm:$0xf]
        %v2205 = vld [vmem:[%s6 + $0x174] sm:$0xf]
        %v2206 = vld [vmem:[%s6 + $0x178] sm:$0xf]
        %v2207 = vld [vmem:[%s6 + $0x17c] sm:$0xf]
        %v2210 = vrot.slane %v1860, 1
        %v2211 = vrot.slane %v1861, 1
        %v2246 = vunpack.c.l.b16 %v2176
        %v2247 = vunpack.c.l.b16 %v2177
        %v2248 = vunpack.c.l.b16 %v2178
        %v2249 = vunpack.c.l.b16 %v2179
        %v2250 = vunpack.c.l.b16 %v2180
        %v2251 = vunpack.c.l.b16 %v2181
        %v2252 = vunpack.c.l.b16 %v2182
        %v2253 = vunpack.c.l.b16 %v2183
        %v2254 = vunpack.c.l.b16 %v2184
        %v2255 = vunpack.c.l.b16 %v2185
        %v2256 = vunpack.c.l.b16 %v2186
        %v2257 = vunpack.c.l.b16 %v2187
        %v2258 = vunpack.c.l.b16 %v2188
        %v2259 = vunpack.c.l.b16 %v2189
        %v2260 = vunpack.c.l.b16 %v2190
        %v2261 = vunpack.c.l.b16 %v2191
        %v2262 = vunpack.c.l.b16 %v2192
        %v2263 = vunpack.c.l.b16 %v2193
        %v2264 = vunpack.c.l.b16 %v2194
        %v2265 = vunpack.c.l.b16 %v2195
        %v2266 = vunpack.c.l.b16 %v2196
        %v2267 = vunpack.c.l.b16 %v2197
        %v2268 = vunpack.c.l.b16 %v2198
        %v2269 = vunpack.c.l.b16 %v2199
        %v2270 = vunpack.c.l.b16 %v2200
        %v2271 = vunpack.c.l.b16 %v2201
        %v2272 = vunpack.c.l.b16 %v2202
        %v2273 = vunpack.c.l.b16 %v2203
        %v2274 = vunpack.c.l.b16 %v2204
        %v2275 = vunpack.c.l.b16 %v2205
        %v2276 = vunpack.c.l.b16 %v2206
        %v2277 = vunpack.c.l.b16 %v2207
        %v2278 = vpack.c.b16 %v2247, %v2246
        %v2279 = vpack.c.b16 %v2249, %v2248
        %v2280 = vpack.c.b16 %v2251, %v2250
        %v2281 = vpack.c.b16 %v2253, %v2252
        %v2282 = vpack.c.b16 %v2255, %v2254
        %v2283 = vpack.c.b16 %v2257, %v2256
        %v2284 = vpack.c.b16 %v2259, %v2258
        %v2285 = vpack.c.b16 %v2261, %v2260
        %v2286 = vpack.c.b16 %v2263, %v2262
        %v2287 = vpack.c.b16 %v2265, %v2264
        %v2288 = vpack.c.b16 %v2267, %v2266
        %v2289 = vpack.c.b16 %v2269, %v2268
        %v2290 = vpack.c.b16 %v2271, %v2270
        %v2291 = vpack.c.b16 %v2273, %v2272
        %v2292 = vpack.c.b16 %v2275, %v2274
        %v2293 = vpack.c.b16 %v2277, %v2276
        %2310 = vmatprep.subr.bf16.mxu0 0
        %2311 = vmatpush1.bf16.msra.mxu0 %v2278
        %2312 = vmatprep.subr.bf16.mxu0 0
        %2313 = vmatpush1.bf16.msra.mxu0 %v2279
        %2314 = vmatprep.subr.bf16.mxu0 0
        %2315 = vmatpush1.bf16.msra.mxu0 %v2280
        %2316 = vmatprep.subr.bf16.mxu0 0
        %2317 = vmatpush1.bf16.msra.mxu0 %v2281
        %2318 = vmatprep.subr.bf16.mxu0 0
        %2319 = vmatpush1.bf16.msra.mxu0 %v2282
        %2320 = vmatprep.subr.bf16.mxu0 0
        %2321 = vmatpush1.bf16.msra.mxu0 %v2283
        %2322 = vmatprep.subr.bf16.mxu0 0
        %2323 = vmatpush1.bf16.msra.mxu0 %v2284
        %2324 = vmatprep.subr.bf16.mxu0 0
        %2325 = vmatpush1.bf16.msra.mxu0 %v2285
        %2326 = vmatprep.subr.bf16.mxu0 0
        %2327 = vmatpush1.bf16.msra.mxu0 %v2286
        %2328 = vmatprep.subr.bf16.mxu0 0
        %2329 = vmatpush1.bf16.msra.mxu0 %v2287
        %2330 = vmatprep.subr.bf16.mxu0 0
        %2331 = vmatpush1.bf16.msra.mxu0 %v2288
        %2332 = vmatprep.subr.bf16.mxu0 0
        %2333 = vmatpush1.bf16.msra.mxu0 %v2289
        %2334 = vmatprep.subr.bf16.mxu0 0
        %2335 = vmatpush1.bf16.msra.mxu0 %v2290
        %2336 = vmatprep.subr.bf16.mxu0 0
        %2337 = vmatpush1.bf16.msra.mxu0 %v2291
        %2338 = vmatprep.subr.bf16.mxu0 0
        %2339 = vmatpush1.bf16.msra.mxu0 %v2292
        %2340 = vmatprep.subr.bf16.mxu0 0
        %2341 = vmatpush1.bf16.msra.mxu0 %v2293
        %2342 = vmatprep.mubr.bf16.mxu0 %v2211
        %2343 = vmatmul.mubr.bf16.gmra.mrb[0].mxu0 %v2210
        %v2344 = vpop.f32.mrb[0].mxu0
        %v2345 = vadd.f32 0.0, %v2344
        %v2346 = vpop.f32.mrb[0].mxu0
        %v2347 = vpop.f32.mrb[0].mxu0
        %v2348 = vpop.f32.mrb[0].mxu0
        %2349 = vdwg.mxu0
        %v2350 = vadd.f32 %v2175, %v2345
        %v2351 = vld [vmem:[%s6 + $0x180] sm:$0xf]
        %v2352 = vld [vmem:[%s6 + $0x184] sm:$0xf]
        %v2353 = vld [vmem:[%s6 + $0x188] sm:$0xf]
        %v2354 = vld [vmem:[%s6 + $0x18c] sm:$0xf]
        %v2355 = vld [vmem:[%s6 + $0x190] sm:$0xf]
        %v2356 = vld [vmem:[%s6 + $0x194] sm:$0xf]
        %v2357 = vld [vmem:[%s6 + $0x198] sm:$0xf]
        %v2358 = vld [vmem:[%s6 + $0x19c] sm:$0xf]
        %v2359 = vld [vmem:[%s6 + $0x1a0] sm:$0xf]
        %v2360 = vld [vmem:[%s6 + $0x1a4] sm:$0xf]
        %v2361 = vld [vmem:[%s6 + $0x1a8] sm:$0xf]
        %v2362 = vld [vmem:[%s6 + $0x1ac] sm:$0xf]
        %v2363 = vld [vmem:[%s6 + $0x1b0] sm:$0xf]
        %v2364 = vld [vmem:[%s6 + $0x1b4] sm:$0xf]
        %v2365 = vld [vmem:[%s6 + $0x1b8] sm:$0xf]
        %v2366 = vld [vmem:[%s6 + $0x1bc] sm:$0xf]
        %v2367 = vld [vmem:[%s6 + $0x1c0] sm:$0xf]
        %v2368 = vld [vmem:[%s6 + $0x1c4] sm:$0xf]
        %v2369 = vld [vmem:[%s6 + $0x1c8] sm:$0xf]
        %v2370 = vld [vmem:[%s6 + $0x1cc] sm:$0xf]
        %v2371 = vld [vmem:[%s6 + $0x1d0] sm:$0xf]
        %v2372 = vld [vmem:[%s6 + $0x1d4] sm:$0xf]
        %v2373 = vld [vmem:[%s6 + $0x1d8] sm:$0xf]
        %v2374 = vld [vmem:[%s6 + $0x1dc] sm:$0xf]
        %v2375 = vld [vmem:[%s6 + $0x1e0] sm:$0xf]
        %v2376 = vld [vmem:[%s6 + $0x1e4] sm:$0xf]
        %v2377 = vld [vmem:[%s6 + $0x1e8] sm:$0xf]
        %v2378 = vld [vmem:[%s6 + $0x1ec] sm:$0xf]
        %v2379 = vld [vmem:[%s6 + $0x1f0] sm:$0xf]
        %v2380 = vld [vmem:[%s6 + $0x1f4] sm:$0xf]
        %v2381 = vld [vmem:[%s6 + $0x1f8] sm:$0xf]
        %v2382 = vld [vmem:[%s6 + $0x1fc] sm:$0xf]
        %v2383 = vrot.slane %v2032, 1
        %v2384 = vrot.slane %v2035, 1
        %v2419 = vunpack.c.l.b16 %v2351
        %v2420 = vunpack.c.l.b16 %v2352
        %v2421 = vunpack.c.l.b16 %v2353
        %v2422 = vunpack.c.l.b16 %v2354
        %v2423 = vunpack.c.l.b16 %v2355
        %v2424 = vunpack.c.l.b16 %v2356
        %v2425 = vunpack.c.l.b16 %v2357
        %v2426 = vunpack.c.l.b16 %v2358
        %v2427 = vunpack.c.l.b16 %v2359
        %v2428 = vunpack.c.l.b16 %v2360
        %v2429 = vunpack.c.l.b16 %v2361
        %v2430 = vunpack.c.l.b16 %v2362
        %v2431 = vunpack.c.l.b16 %v2363
        %v2432 = vunpack.c.l.b16 %v2364
        %v2433 = vunpack.c.l.b16 %v2365
        %v2434 = vunpack.c.l.b16 %v2366
        %v2435 = vunpack.c.l.b16 %v2367
        %v2436 = vunpack.c.l.b16 %v2368
        %v2437 = vunpack.c.l.b16 %v2369
        %v2438 = vunpack.c.l.b16 %v2370
        %v2439 = vunpack.c.l.b16 %v2371
        %v2440 = vunpack.c.l.b16 %v2372
        %v2441 = vunpack.c.l.b16 %v2373
        %v2442 = vunpack.c.l.b16 %v2374
        %v2443 = vunpack.c.l.b16 %v2375
        %v2444 = vunpack.c.l.b16 %v2376
        %v2445 = vunpack.c.l.b16 %v2377
        %v2446 = vunpack.c.l.b16 %v2378
        %v2447 = vunpack.c.l.b16 %v2379
        %v2448 = vunpack.c.l.b16 %v2380
        %v2449 = vunpack.c.l.b16 %v2381
        %v2450 = vunpack.c.l.b16 %v2382
        %v2451 = vpack.c.b16 %v2420, %v2419
        %v2452 = vpack.c.b16 %v2422, %v2421
        %v2453 = vpack.c.b16 %v2424, %v2423
        %v2454 = vpack.c.b16 %v2426, %v2425
        %v2455 = vpack.c.b16 %v2428, %v2427
        %v2456 = vpack.c.b16 %v2430, %v2429
        %v2457 = vpack.c.b16 %v2432, %v2431
        %v2458 = vpack.c.b16 %v2434, %v2433
        %v2459 = vpack.c.b16 %v2436, %v2435
        %v2460 = vpack.c.b16 %v2438, %v2437
        %v2461 = vpack.c.b16 %v2440, %v2439
        %v2462 = vpack.c.b16 %v2442, %v2441
        %v2463 = vpack.c.b16 %v2444, %v2443
        %v2464 = vpack.c.b16 %v2446, %v2445
        %v2465 = vpack.c.b16 %v2448, %v2447
        %v2466 = vpack.c.b16 %v2450, %v2449
        %2483 = vmatprep.subr.bf16.mxu0 0
        %2484 = vmatpush1.bf16.msra.mxu0 %v2451
        %2485 = vmatprep.subr.bf16.mxu0 0
        %2486 = vmatpush1.bf16.msra.mxu0 %v2452
        %2487 = vmatprep.subr.bf16.mxu0 0
        %2488 = vmatpush1.bf16.msra.mxu0 %v2453
        %2489 = vmatprep.subr.bf16.mxu0 0
        %2490 = vmatpush1.bf16.msra.mxu0 %v2454
        %2491 = vmatprep.subr.bf16.mxu0 0
        %2492 = vmatpush1.bf16.msra.mxu0 %v2455
        %2493 = vmatprep.subr.bf16.mxu0 0
        %2494 = vmatpush1.bf16.msra.mxu0 %v2456
        %2495 = vmatprep.subr.bf16.mxu0 0
        %2496 = vmatpush1.bf16.msra.mxu0 %v2457
        %2497 = vmatprep.subr.bf16.mxu0 0
        %2498 = vmatpush1.bf16.msra.mxu0 %v2458
        %2499 = vmatprep.subr.bf16.mxu0 0
        %2500 = vmatpush1.bf16.msra.mxu0 %v2459
        %2501 = vmatprep.subr.bf16.mxu0 0
        %2502 = vmatpush1.bf16.msra.mxu0 %v2460
        %2503 = vmatprep.subr.bf16.mxu0 0
        %2504 = vmatpush1.bf16.msra.mxu0 %v2461
        %2505 = vmatprep.subr.bf16.mxu0 0
        %2506 = vmatpush1.bf16.msra.mxu0 %v2462
        %2507 = vmatprep.subr.bf16.mxu0 0
        %2508 = vmatpush1.bf16.msra.mxu0 %v2463
        %2509 = vmatprep.subr.bf16.mxu0 0
        %2510 = vmatpush1.bf16.msra.mxu0 %v2464
        %2511 = vmatprep.subr.bf16.mxu0 0
        %2512 = vmatpush1.bf16.msra.mxu0 %v2465
        %2513 = vmatprep.subr.bf16.mxu0 0
        %2514 = vmatpush1.bf16.msra.mxu0 %v2466
        %2515 = vmatprep.mubr.bf16.mxu0 %v2384
        %2516 = vmatmul.mubr.bf16.gmra.mrb[0].mxu0 %v2383
        %v2517 = vpop.f32.mrb[0].mxu0
        %v2518 = vadd.f32 0.0, %v2517
        %v2519 = vpop.f32.mrb[0].mxu0
        %v2520 = vpop.f32.mrb[0].mxu0
        %v2521 = vpop.f32.mrb[0].mxu0
        %2522 = vdwg.mxu0
        %v2523 = vadd.f32 %v2350, %v2518
        %v2524 = vld [vmem:[#allocation7] sm:$0xff]
        %v2525 = vld [vmem:[#allocation7 + $0x8] sm:$0xff]
        %v2526 = vld [vmem:[#allocation7 + $0x10] sm:$0xff]
        %v2527 = vld [vmem:[#allocation7 + $0x18] sm:$0xff]
        %v2528 = vld [vmem:[#allocation7 + $0x20] sm:$0xff]
        %v2529 = vld [vmem:[#allocation7 + $0x28] sm:$0xff]
        %v2530 = vld [vmem:[#allocation7 + $0x30] sm:$0xff]
        %v2531 = vld [vmem:[#allocation7 + $0x38] sm:$0xff]
        %v2532 = vpack.c.bf16 %v2523, %v2523
        %v2533 = vld [vmem:[#allocation8] sm:$0xff]
        %v2534 = vld [vmem:[#allocation8 + $0x8] sm:$0xff]
        %v2537 = vcombine.high %v2533, %v2533
        %v2539 = vunpack.c.l.s4 1983009808
        %v2540 = vunpack.c.0.s8 %v2539
        %v2541 = vlaneseq
        %v2542 = vshrl.u32 %v2541, 7
        %v2543 = vsub.s32 %v2540, %v2542
        %v2544 = vrot.slane %v2533, %v2543
        %v2546 = vunpack.c.l.s4 1983009808
        %v2547 = vunpack.c.0.s8 %v2546
        %v2548 = vlaneseq
        %v2549 = vshrl.u32 %v2548, 7
        %v2550 = vsub.s32 %v2547, %v2549
        %v2551 = vrot.slane %v2537, %v2550
        %v2552 = vcombine.high %v2544, %v2544
        %v2553 = vcombine.high %v2551, %v2551
        %v2554 = vcombine.high %v2534, %v2534
        %v2556 = vunpack.c.l.s4 1983009808
        %v2557 = vunpack.c.0.s8 %v2556
        %v2558 = vlaneseq
        %v2559 = vshrl.u32 %v2558, 7
        %v2560 = vsub.s32 %v2557, %v2559
        %v2561 = vrot.slane %v2534, %v2560
        %v2563 = vunpack.c.l.s4 1983009808
        %v2564 = vunpack.c.0.s8 %v2563
        %v2565 = vlaneseq
        %v2566 = vshrl.u32 %v2565, 7
        %v2567 = vsub.s32 %v2564, %v2566
        %v2568 = vrot.slane %v2554, %v2567
        %v2569 = vcombine.high %v2561, %v2561
        %v2570 = vcombine.high %v2568, %v2568
        %v2572 = vsel %vm1783, %v2544, 0
        %v2575 = vsel %vm1783, %v2552, 0
        %v2578 = vsel %vm1783, %v2551, 0
        %v2581 = vsel %vm1783, %v2553, 0
        %v2584 = vsel %vm1783, %v2561, 0
        %v2587 = vsel %vm1783, %v2569, 0
        %v2590 = vsel %vm1783, %v2568, 0
        %v2593 = vsel %vm1783, %v2570, 0
        %2595 = vmatprep.subr.bf16.mxu0 %v2575
        %2596 = vmatpush1.bf16.msra.mxu0 %v2572
        %2597 = vmatprep.subr.bf16.mxu0 0
        %2598 = vmatpush1.bf16.msra.mxu0 0
        %2599 = vmatprep.subr.bf16.mxu0 0
        %2600 = vmatpush1.bf16.msra.mxu0 0
        %2601 = vmatprep.subr.bf16.mxu0 0
        %2602 = vmatpush1.bf16.msra.mxu0 0
        %2603 = vmatprep.subr.bf16.mxu0 0
        %2604 = vmatpush1.bf16.msra.mxu0 0
        %2605 = vmatprep.subr.bf16.mxu0 0
        %2606 = vmatpush1.bf16.msra.mxu0 0
        %2607 = vmatprep.subr.bf16.mxu0 0
        %2608 = vmatpush1.bf16.msra.mxu0 0
        %2609 = vmatprep.subr.bf16.mxu0 0
        %2610 = vmatpush1.bf16.msra.mxu0 0
        %2611 = vmatprep.subr.bf16.mxu0 0
        %2612 = vmatpush1.bf16.msra.mxu0 0
        %2613 = vmatprep.subr.bf16.mxu0 0
        %2614 = vmatpush1.bf16.msra.mxu0 0
        %2615 = vmatprep.subr.bf16.mxu0 0
        %2616 = vmatpush1.bf16.msra.mxu0 0
        %2617 = vmatprep.subr.bf16.mxu0 0
        %2618 = vmatpush1.bf16.msra.mxu0 0
        %2619 = vmatprep.subr.bf16.mxu0 0
        %2620 = vmatpush1.bf16.msra.mxu0 0
        %2621 = vmatprep.subr.bf16.mxu0 0
        %2622 = vmatpush1.bf16.msra.mxu0 0
        %2623 = vmatprep.subr.bf16.mxu0 0
        %2624 = vmatpush1.bf16.msra.mxu0 0
        %2625 = vmatprep.subr.bf16.mxu0 0
        %2626 = vmatpush1.bf16.msra.mxu0 0
        %2627 = vmatprep.mubr.bf16.mxu0 0
        %2628 = vmatmul.mubr.bf16.gmra.mrb[0].mxu0 %v1781
        %v2629 = vpop.f32.mrb[0].mxu0
        %v2630 = vadd.f32 0.0, %v2629
        %v2631 = vpop.f32.mrb[0].mxu0
        %v2632 = vadd.f32 0.0, %v2631
        %v2633 = vpop.f32.mrb[0].mxu0
        %v2634 = vpop.f32.mrb[0].mxu0
        %2635 = vdwg.mxu0
        %2636 = vmatprep.subr.bf16.mxu0 %v2581
        %2637 = vmatpush1.bf16.msra.mxu0 %v2578
        %2638 = vmatprep.subr.bf16.mxu0 0
        %2639 = vmatpush1.bf16.msra.mxu0 0
        %2640 = vmatprep.subr.bf16.mxu0 0
        %2641 = vmatpush1.bf16.msra.mxu0 0
        %2642 = vmatprep.subr.bf16.mxu0 0
        %2643 = vmatpush1.bf16.msra.mxu0 0
        %2644 = vmatprep.subr.bf16.mxu0 0
        %2645 = vmatpush1.bf16.msra.mxu0 0
        %2646 = vmatprep.subr.bf16.mxu0 0
        %2647 = vmatpush1.bf16.msra.mxu0 0
        %2648 = vmatprep.subr.bf16.mxu0 0
        %2649 = vmatpush1.bf16.msra.mxu0 0
        %2650 = vmatprep.subr.bf16.mxu0 0
        %2651 = vmatpush1.bf16.msra.mxu0 0
        %2652 = vmatprep.subr.bf16.mxu0 0
        %2653 = vmatpush1.bf16.msra.mxu0 0
        %2654 = vmatprep.subr.bf16.mxu0 0
        %2655 = vmatpush1.bf16.msra.mxu0 0
        %2656 = vmatprep.subr.bf16.mxu0 0
        %2657 = vmatpush1.bf16.msra.mxu0 0
        %2658 = vmatprep.subr.bf16.mxu0 0
        %2659 = vmatpush1.bf16.msra.mxu0 0
        %2660 = vmatprep.subr.bf16.mxu0 0
        %2661 = vmatpush1.bf16.msra.mxu0 0
        %2662 = vmatprep.subr.bf16.mxu0 0
        %2663 = vmatpush1.bf16.msra.mxu0 0
        %2664 = vmatprep.subr.bf16.mxu0 0
        %2665 = vmatpush1.bf16.msra.mxu0 0
        %2666 = vmatprep.subr.bf16.mxu0 0
        %2667 = vmatpush1.bf16.msra.mxu0 0
        %2668 = vmatprep.mubr.bf16.mxu0 0
        %2669 = vmatmul.mubr.bf16.gmra.mrb[0].mxu0 %v1781
        %v2670 = vpop.f32.mrb[0].mxu0
        %v2671 = vadd.f32 0.0, %v2670
        %v2672 = vpop.f32.mrb[0].mxu0
        %v2673 = vadd.f32 0.0, %v2672
        %v2674 = vpop.f32.mrb[0].mxu0
        %v2675 = vpop.f32.mrb[0].mxu0
        %2676 = vdwg.mxu0
        %2677 = vmatprep.subr.bf16.mxu0 %v2587
        %2678 = vmatpush1.bf16.msra.mxu0 %v2584
        %2679 = vmatprep.subr.bf16.mxu0 0
        %2680 = vmatpush1.bf16.msra.mxu0 0
        %2681 = vmatprep.subr.bf16.mxu0 0
        %2682 = vmatpush1.bf16.msra.mxu0 0
        %2683 = vmatprep.subr.bf16.mxu0 0
        %2684 = vmatpush1.bf16.msra.mxu0 0
        %2685 = vmatprep.subr.bf16.mxu0 0
        %2686 = vmatpush1.bf16.msra.mxu0 0
        %2687 = vmatprep.subr.bf16.mxu0 0
        %2688 = vmatpush1.bf16.msra.mxu0 0
        %2689 = vmatprep.subr.bf16.mxu0 0
        %2690 = vmatpush1.bf16.msra.mxu0 0
        %2691 = vmatprep.subr.bf16.mxu0 0
        %2692 = vmatpush1.bf16.msra.mxu0 0
        %2693 = vmatprep.subr.bf16.mxu0 0
        %2694 = vmatpush1.bf16.msra.mxu0 0
        %2695 = vmatprep.subr.bf16.mxu0 0
        %2696 = vmatpush1.bf16.msra.mxu0 0
        %2697 = vmatprep.subr.bf16.mxu0 0
        %2698 = vmatpush1.bf16.msra.mxu0 0
        %2699 = vmatprep.subr.bf16.mxu0 0
        %2700 = vmatpush1.bf16.msra.mxu0 0
        %2701 = vmatprep.subr.bf16.mxu0 0
        %2702 = vmatpush1.bf16.msra.mxu0 0
        %2703 = vmatprep.subr.bf16.mxu0 0
        %2704 = vmatpush1.bf16.msra.mxu0 0
        %2705 = vmatprep.subr.bf16.mxu0 0
        %2706 = vmatpush1.bf16.msra.mxu0 0
        %2707 = vmatprep.subr.bf16.mxu0 0
        %2708 = vmatpush1.bf16.msra.mxu0 0
        %2709 = vmatprep.mubr.bf16.mxu0 0
        %2710 = vmatmul.mubr.bf16.gmra.mrb[0].mxu0 %v1781
        %v2711 = vpop.f32.mrb[0].mxu0
        %v2712 = vadd.f32 0.0, %v2711
        %v2713 = vpop.f32.mrb[0].mxu0
        %v2714 = vadd.f32 0.0, %v2713
        %v2715 = vpop.f32.mrb[0].mxu0
        %v2716 = vpop.f32.mrb[0].mxu0
        %2717 = vdwg.mxu0
        %2718 = vmatprep.subr.bf16.mxu0 %v2593
        %2719 = vmatpush1.bf16.msra.mxu0 %v2590
        %2720 = vmatprep.subr.bf16.mxu0 0
        %2721 = vmatpush1.bf16.msra.mxu0 0
        %2722 = vmatprep.subr.bf16.mxu0 0
        %2723 = vmatpush1.bf16.msra.mxu0 0
        %2724 = vmatprep.subr.bf16.mxu0 0
        %2725 = vmatpush1.bf16.msra.mxu0 0
        %2726 = vmatprep.subr.bf16.mxu0 0
        %2727 = vmatpush1.bf16.msra.mxu0 0
        %2728 = vmatprep.subr.bf16.mxu0 0
        %2729 = vmatpush1.bf16.msra.mxu0 0
        %2730 = vmatprep.subr.bf16.mxu0 0
        %2731 = vmatpush1.bf16.msra.mxu0 0
        %2732 = vmatprep.subr.bf16.mxu0 0
        %2733 = vmatpush1.bf16.msra.mxu0 0
        %2734 = vmatprep.subr.bf16.mxu0 0
        %2735 = vmatpush1.bf16.msra.mxu0 0
        %2736 = vmatprep.subr.bf16.mxu0 0
        %2737 = vmatpush1.bf16.msra.mxu0 0
        %2738 = vmatprep.subr.bf16.mxu0 0
        %2739 = vmatpush1.bf16.msra.mxu0 0
        %2740 = vmatprep.subr.bf16.mxu0 0
        %2741 = vmatpush1.bf16.msra.mxu0 0
        %2742 = vmatprep.subr.bf16.mxu0 0
        %2743 = vmatpush1.bf16.msra.mxu0 0
        %2744 = vmatprep.subr.bf16.mxu0 0
        %2745 = vmatpush1.bf16.msra.mxu0 0
        %2746 = vmatprep.subr.bf16.mxu0 0
        %2747 = vmatpush1.bf16.msra.mxu0 0
        %2748 = vmatprep.subr.bf16.mxu0 0
        %2749 = vmatpush1.bf16.msra.mxu0 0
        %2750 = vmatprep.mubr.bf16.mxu0 0
        %2751 = vmatmul.mubr.bf16.gmra.mrb[0].mxu0 %v1781
        %v2752 = vpop.f32.mrb[0].mxu0
        %v2753 = vadd.f32 0.0, %v2752
        %v2754 = vpop.f32.mrb[0].mxu0
        %v2755 = vadd.f32 0.0, %v2754
        %v2756 = vpop.f32.mrb[0].mxu0
        %v2757 = vpop.f32.mrb[0].mxu0
        %2758 = vdwg.mxu0
        %v2767 = vunpack.c.l.b16 %v2524
        %v2768 = vunpack.c.h.b16 %v2524
        %v2769 = vunpack.c.l.b16 %v2525
        %v2770 = vunpack.c.h.b16 %v2525
        %v2771 = vunpack.c.l.b16 %v2526
        %v2772 = vunpack.c.h.b16 %v2526
        %v2773 = vunpack.c.l.b16 %v2527
        %v2774 = vunpack.c.h.b16 %v2527
        %v2775 = vunpack.c.l.b16 %v2528
        %v2776 = vunpack.c.h.b16 %v2528
        %v2777 = vunpack.c.l.b16 %v2529
        %v2778 = vunpack.c.h.b16 %v2529
        %v2779 = vunpack.c.l.b16 %v2530
        %v2780 = vunpack.c.h.b16 %v2530
        %v2781 = vunpack.c.l.b16 %v2531
        %v2782 = vunpack.c.h.b16 %v2531
        %v2783 = vpack.c.b16 %v2775, %v2767
        %v2784 = vpack.c.b16 %v2776, %v2768
        %v2785 = vpack.c.b16 %v2777, %v2769
        %v2786 = vpack.c.b16 %v2778, %v2770
        %v2787 = vpack.c.b16 %v2779, %v2771
        %v2788 = vpack.c.b16 %v2780, %v2772
        %v2789 = vpack.c.b16 %v2781, %v2773
        %v2790 = vpack.c.b16 %v2782, %v2774
        %vm2799 = vcmask 130048
        %v2801 = vsel %vm2799, %v2532, 0
        %2803 = vmatprep.subr.bf16.mxu0 %v2784
        %2804 = vmatpush1.bf16.msra.mxu0 %v2783
        %2805 = vmatprep.subr.bf16.mxu0 0
        %2806 = vmatpush1.bf16.msra.mxu0 0
        %2807 = vmatprep.subr.bf16.mxu0 0
        %2808 = vmatpush1.bf16.msra.mxu0 0
        %2809 = vmatprep.subr.bf16.mxu0 0
        %2810 = vmatpush1.bf16.msra.mxu0 0
        %2811 = vmatprep.subr.bf16.mxu0 0
        %2812 = vmatpush1.bf16.msra.mxu0 0
        %2813 = vmatprep.subr.bf16.mxu0 0
        %2814 = vmatpush1.bf16.msra.mxu0 0
        %2815 = vmatprep.subr.bf16.mxu0 0
        %2816 = vmatpush1.bf16.msra.mxu0 0
        %2817 = vmatprep.subr.bf16.mxu0 0
        %2818 = vmatpush1.bf16.msra.mxu0 0
        %2819 = vmatprep.subr.bf16.mxu0 0
        %2820 = vmatpush1.bf16.msra.mxu0 0
        %2821 = vmatprep.subr.bf16.mxu0 0
        %2822 = vmatpush1.bf16.msra.mxu0 0
        %2823 = vmatprep.subr.bf16.mxu0 0
        %2824 = vmatpush1.bf16.msra.mxu0 0
        %2825 = vmatprep.subr.bf16.mxu0 0
        %2826 = vmatpush1.bf16.msra.mxu0 0
        %2827 = vmatprep.subr.bf16.mxu0 0
        %2828 = vmatpush1.bf16.msra.mxu0 0
        %2829 = vmatprep.subr.bf16.mxu0 0
        %2830 = vmatpush1.bf16.msra.mxu0 0
        %2831 = vmatprep.subr.bf16.mxu0 0
        %2832 = vmatpush1.bf16.msra.mxu0 0
        %2833 = vmatprep.subr.bf16.mxu0 0
        %2834 = vmatpush1.bf16.msra.mxu0 0
        %2835 = vmatprep.mubr.bf16.mxu0 0
        %2836 = vmatmul.mubr.bf16.gmra.mrb[0].mxu0 %v2801
        %v2837 = vpop.f32.mrb[0].mxu0
        %v2838 = vadd.f32 %v2630, %v2837
        %v2839 = vpop.f32.mrb[0].mxu0
        %v2840 = vadd.f32 %v2632, %v2839
        %v2841 = vpop.f32.mrb[0].mxu0
        %v2842 = vpop.f32.mrb[0].mxu0
        %2843 = vdwg.mxu0
        %2844 = vmatprep.subr.bf16.mxu0 %v2786
        %2845 = vmatpush1.bf16.msra.mxu0 %v2785
        %2846 = vmatprep.subr.bf16.mxu0 0
        %2847 = vmatpush1.bf16.msra.mxu0 0
        %2848 = vmatprep.subr.bf16.mxu0 0
        %2849 = vmatpush1.bf16.msra.mxu0 0
        %2850 = vmatprep.subr.bf16.mxu0 0
        %2851 = vmatpush1.bf16.msra.mxu0 0
        %2852 = vmatprep.subr.bf16.mxu0 0
        %2853 = vmatpush1.bf16.msra.mxu0 0
        %2854 = vmatprep.subr.bf16.mxu0 0
        %2855 = vmatpush1.bf16.msra.mxu0 0
        %2856 = vmatprep.subr.bf16.mxu0 0
        %2857 = vmatpush1.bf16.msra.mxu0 0
        %2858 = vmatprep.subr.bf16.mxu0 0
        %2859 = vmatpush1.bf16.msra.mxu0 0
        %2860 = vmatprep.subr.bf16.mxu0 0
        %2861 = vmatpush1.bf16.msra.mxu0 0
        %2862 = vmatprep.subr.bf16.mxu0 0
        %2863 = vmatpush1.bf16.msra.mxu0 0
        %2864 = vmatprep.subr.bf16.mxu0 0
        %2865 = vmatpush1.bf16.msra.mxu0 0
        %2866 = vmatprep.subr.bf16.mxu0 0
        %2867 = vmatpush1.bf16.msra.mxu0 0
        %2868 = vmatprep.subr.bf16.mxu0 0
        %2869 = vmatpush1.bf16.msra.mxu0 0
        %2870 = vmatprep.subr.bf16.mxu0 0
        %2871 = vmatpush1.bf16.msra.mxu0 0
        %2872 = vmatprep.subr.bf16.mxu0 0
        %2873 = vmatpush1.bf16.msra.mxu0 0
        %2874 = vmatprep.subr.bf16.mxu0 0
        %2875 = vmatpush1.bf16.msra.mxu0 0
        %2876 = vmatprep.mubr.bf16.mxu0 0
        %2877 = vmatmul.mubr.bf16.gmra.mrb[0].mxu0 %v2801
        %v2878 = vpop.f32.mrb[0].mxu0
        %v2879 = vadd.f32 %v2671, %v2878
        %v2880 = vpop.f32.mrb[0].mxu0
        %v2881 = vadd.f32 %v2673, %v2880
        %v2882 = vpop.f32.mrb[0].mxu0
        %v2883 = vpop.f32.mrb[0].mxu0
        %2884 = vdwg.mxu0
        %2885 = vmatprep.subr.bf16.mxu0 %v2788
        %2886 = vmatpush1.bf16.msra.mxu0 %v2787
        %2887 = vmatprep.subr.bf16.mxu0 0
        %2888 = vmatpush1.bf16.msra.mxu0 0
        %2889 = vmatprep.subr.bf16.mxu0 0
        %2890 = vmatpush1.bf16.msra.mxu0 0
        %2891 = vmatprep.subr.bf16.mxu0 0
        %2892 = vmatpush1.bf16.msra.mxu0 0
        %2893 = vmatprep.subr.bf16.mxu0 0
        %2894 = vmatpush1.bf16.msra.mxu0 0
        %2895 = vmatprep.subr.bf16.mxu0 0
        %2896 = vmatpush1.bf16.msra.mxu0 0
        %2897 = vmatprep.subr.bf16.mxu0 0
        %2898 = vmatpush1.bf16.msra.mxu0 0
        %2899 = vmatprep.subr.bf16.mxu0 0
        %2900 = vmatpush1.bf16.msra.mxu0 0
        %2901 = vmatprep.subr.bf16.mxu0 0
        %2902 = vmatpush1.bf16.msra.mxu0 0
        %2903 = vmatprep.subr.bf16.mxu0 0
        %2904 = vmatpush1.bf16.msra.mxu0 0
        %2905 = vmatprep.subr.bf16.mxu0 0
        %2906 = vmatpush1.bf16.msra.mxu0 0
        %2907 = vmatprep.subr.bf16.mxu0 0
        %2908 = vmatpush1.bf16.msra.mxu0 0
        %2909 = vmatprep.subr.bf16.mxu0 0
        %2910 = vmatpush1.bf16.msra.mxu0 0
        %2911 = vmatprep.subr.bf16.mxu0 0
        %2912 = vmatpush1.bf16.msra.mxu0 0
        %2913 = vmatprep.subr.bf16.mxu0 0
        %2914 = vmatpush1.bf16.msra.mxu0 0
        %2915 = vmatprep.subr.bf16.mxu0 0
        %2916 = vmatpush1.bf16.msra.mxu0 0
        %2917 = vmatprep.mubr.bf16.mxu0 0
        %2918 = vmatmul.mubr.bf16.gmra.mrb[0].mxu0 %v2801
        %v2919 = vpop.f32.mrb[0].mxu0
        %v2920 = vadd.f32 %v2712, %v2919
        %v2921 = vpop.f32.mrb[0].mxu0
        %v2922 = vadd.f32 %v2714, %v2921
        %v2923 = vpop.f32.mrb[0].mxu0
        %v2924 = vpop.f32.mrb[0].mxu0
        %2925 = vdwg.mxu0
        %2926 = vmatprep.subr.bf16.mxu0 %v2790
        %2927 = vmatpush1.bf16.msra.mxu0 %v2789
        %2928 = vmatprep.subr.bf16.mxu0 0
        %2929 = vmatpush1.bf16.msra.mxu0 0
        %2930 = vmatprep.subr.bf16.mxu0 0
        %2931 = vmatpush1.bf16.msra.mxu0 0
        %2932 = vmatprep.subr.bf16.mxu0 0
        %2933 = vmatpush1.bf16.msra.mxu0 0
        %2934 = vmatprep.subr.bf16.mxu0 0
        %2935 = vmatpush1.bf16.msra.mxu0 0
        %2936 = vmatprep.subr.bf16.mxu0 0
        %2937 = vmatpush1.bf16.msra.mxu0 0
        %2938 = vmatprep.subr.bf16.mxu0 0
        %2939 = vmatpush1.bf16.msra.mxu0 0
        %2940 = vmatprep.subr.bf16.mxu0 0
        %2941 = vmatpush1.bf16.msra.mxu0 0
        %2942 = vmatprep.subr.bf16.mxu0 0
        %2943 = vmatpush1.bf16.msra.mxu0 0
        %2944 = vmatprep.subr.bf16.mxu0 0
        %2945 = vmatpush1.bf16.msra.mxu0 0
        %2946 = vmatprep.subr.bf16.mxu0 0
        %2947 = vmatpush1.bf16.msra.mxu0 0
        %2948 = vmatprep.subr.bf16.mxu0 0
        %2949 = vmatpush1.bf16.msra.mxu0 0
        %2950 = vmatprep.subr.bf16.mxu0 0
        %2951 = vmatpush1.bf16.msra.mxu0 0
        %2952 = vmatprep.subr.bf16.mxu0 0
        %2953 = vmatpush1.bf16.msra.mxu0 0
        %2954 = vmatprep.subr.bf16.mxu0 0
        %2955 = vmatpush1.bf16.msra.mxu0 0
        %2956 = vmatprep.subr.bf16.mxu0 0
        %2957 = vmatpush1.bf16.msra.mxu0 0
        %2958 = vmatprep.mubr.bf16.mxu0 0
        %2959 = vmatmul.mubr.bf16.gmra.mrb[0].mxu0 %v2801
        %v2960 = vpop.f32.mrb[0].mxu0
        %v2961 = vadd.f32 %v2753, %v2960
        %v2962 = vpop.f32.mrb[0].mxu0
        %v2963 = vadd.f32 %v2755, %v2962
        %v2964 = vpop.f32.mrb[0].mxu0
        %v2965 = vpop.f32.mrb[0].mxu0
        %2966 = vdwg.mxu0
        %v2967 = vld [vmem:[%s11] sm:$0xff]
        %v2969 = vlaneseq
        %v2970 = vshrl.u32 %v2969, 7
        %v2971 = vsub.s32 0, %v2970
        %v2972 = vrot.slane %v2967, %v2971
        %v2973 = vlaneseq
        %v2974 = vshrl.u32 %v2973, 7
        %v2975 = vsub.s32 1, %v2974
        %v2976 = vrot.slane %v2967, %v2975
        %v2977 = vlaneseq
        %v2978 = vshrl.u32 %v2977, 7
        %v2979 = vsub.s32 2, %v2978
        %v2980 = vrot.slane %v2967, %v2979
        %v2981 = vlaneseq
        %v2982 = vshrl.u32 %v2981, 7
        %v2983 = vsub.s32 3, %v2982
        %v2984 = vrot.slane %v2967, %v2983
        %v2985 = vlaneseq
        %v2986 = vshrl.u32 %v2985, 7
        %v2987 = vsub.s32 4, %v2986
        %v2988 = vrot.slane %v2967, %v2987
        %v2989 = vlaneseq
        %v2990 = vshrl.u32 %v2989, 7
        %v2991 = vsub.s32 5, %v2990
        %v2992 = vrot.slane %v2967, %v2991
        %v2993 = vlaneseq
        %v2994 = vshrl.u32 %v2993, 7
        %v2995 = vsub.s32 6, %v2994
        %v2996 = vrot.slane %v2967, %v2995
        %v2997 = vlaneseq
        %v2998 = vshrl.u32 %v2997, 7
        %v2999 = vsub.s32 7, %v2998
        %v3000 = vrot.slane %v2967, %v2999
        %v3009 = vadd.f32 %v2838, %v2972
        %v3010 = vadd.f32 %v2840, %v2976
        %v3011 = vadd.f32 %v2879, %v2980
        %v3012 = vadd.f32 %v2881, %v2984
        %v3013 = vadd.f32 %v2920, %v2988
        %v3014 = vadd.f32 %v2922, %v2992
        %v3015 = vadd.f32 %v2961, %v2996
        %v3016 = vadd.f32 %v2963, %v3000
        %v3017 = vmax.f32 %v3009, 0.0
        %v3018 = vmax.f32 %v3010, 0.0
        %v3019 = vmax.f32 %v3011, 0.0
        %v3020 = vmax.f32 %v3012, 0.0
        %v3021 = vmax.f32 %v3013, 0.0
        %v3022 = vmax.f32 %v3014, 0.0
        %v3023 = vmax.f32 %v3015, 0.0
        %v3024 = vmax.f32 %v3016, 0.0
        %v3027 = vcombine.low %v3017, %v3018
        %v3029 = vunpack.c.l.s4 1966171168
        %v3030 = vunpack.c.0.s8 %v3029
        %v3031 = vlaneseq
        %v3032 = vshrl.u32 %v3031, 7
        %v3033 = vsub.s32 %v3030, %v3032
        %v3034 = vrot.slane %v3027, %v3033
        %v3036 = vunpack.c.l.s4 1966171168
        %v3037 = vunpack.c.0.s8 %v3036
        %v3038 = vlaneseq
        %v3039 = vshrl.u32 %v3038, 7
        %v3040 = vsub.s32 %v3037, %v3039
        %v3041 = vrot.slane %v3034, %v3040
        %3043 = vst.msk [vmem:[#allocation2] ss:$8 sm:$0x3] %vm1036, %v3041
        %3044 = vst.msk [vmem:[#allocation2] ss:$8 sm:$0x0] %vm1036, %v3041
        %v3047 = vcombine.low %v3019, %v3020
        %v3049 = vunpack.c.l.s4 1966171168
        %v3050 = vunpack.c.0.s8 %v3049
        %v3051 = vlaneseq
        %v3052 = vshrl.u32 %v3051, 7
        %v3053 = vsub.s32 %v3050, %v3052
        %v3054 = vrot.slane %v3047, %v3053
        %v3056 = vunpack.c.l.s4 1966171168
        %v3057 = vunpack.c.0.s8 %v3056
        %v3058 = vlaneseq
        %v3059 = vshrl.u32 %v3058, 7
        %v3060 = vsub.s32 %v3057, %v3059
        %v3061 = vrot.slane %v3054, %v3060
        %s3063 = scalar_lea.vmem [#allocation2], 1
        %3064 = vst.msk [vmem:[%s3063] ss:$8 sm:$0x3] %vm1036, %v3061
        %3065 = vst.msk [vmem:[%s3063] ss:$8 sm:$0x0] %vm1036, %v3061
        %v3068 = vcombine.low %v3021, %v3022
        %v3070 = vunpack.c.l.s4 1966171168
        %v3071 = vunpack.c.0.s8 %v3070
        %v3072 = vlaneseq
        %v3073 = vshrl.u32 %v3072, 7
        %v3074 = vsub.s32 %v3071, %v3073
        %v3075 = vrot.slane %v3068, %v3074
        %v3077 = vunpack.c.l.s4 1966171168
        %v3078 = vunpack.c.0.s8 %v3077
        %v3079 = vlaneseq
        %v3080 = vshrl.u32 %v3079, 7
        %v3081 = vsub.s32 %v3078, %v3080
        %v3082 = vrot.slane %v3075, %v3081
        %s3084 = scalar_lea.vmem [#allocation2], 2
        %3085 = vst.msk [vmem:[%s3084] ss:$8 sm:$0x3] %vm1036, %v3082
        %3086 = vst.msk [vmem:[%s3084] ss:$8 sm:$0x0] %vm1036, %v3082
        %v3089 = vcombine.low %v3023, %v3024
        %v3091 = vunpack.c.l.s4 1966171168
        %v3092 = vunpack.c.0.s8 %v3091
        %v3093 = vlaneseq
        %v3094 = vshrl.u32 %v3093, 7
        %v3095 = vsub.s32 %v3092, %v3094
        %v3096 = vrot.slane %v3089, %v3095
        %v3098 = vunpack.c.l.s4 1966171168
        %v3099 = vunpack.c.0.s8 %v3098
        %v3100 = vlaneseq
        %v3101 = vshrl.u32 %v3100, 7
        %v3102 = vsub.s32 %v3099, %v3101
        %v3103 = vrot.slane %v3096, %v3102
        %s3105 = scalar_lea.vmem [#allocation2], 3
        %3106 = vst.msk [vmem:[%s3105] ss:$8 sm:$0x3] %vm1036, %v3103
        %3107 = vst.msk [vmem:[%s3105] ss:$8 sm:$0x0] %vm1036, %v3103
        %s3108 = scalar_lea.vmem [#allocation2], 4
        %3109 = vst.msk [vmem:[%s3108] ss:$8 sm:$0x3] %vm1036, 0.0
        %3110 = vst.msk [vmem:[%s3108] ss:$8 sm:$0x0] %vm1036, 0.0
        %v3111 = vld [vmem:[#allocation2] sm:$0xf]
        %v3112 = vld [vmem:[#allocation2 + $0x8] sm:$0xf]
        %v3113 = vld [vmem:[#allocation2] sm:$0x1e]
        %v3114 = vld [vmem:[#allocation2 + $0x8] sm:$0x1e]
        %v3115 = vld [vmem:[%s13] sm:$0x3]
        %s3116 = scalar_lea.vmem %s12, 256
        %v3117 = vld [vmem:[%s3116] sm:$0xff]
        %v3118 = vld [vmem:[%s3116 + $0x8] sm:$0xff]
        %v3119 = vld [vmem:[%s3116 + $0x10] sm:$0xff]
        %v3120 = vld [vmem:[%s3116 + $0x18] sm:$0xff]
        %v3121 = vld [vmem:[%s3116 + $0x20] sm:$0xff]
        %v3122 = vld [vmem:[%s3116 + $0x28] sm:$0xff]
        %v3123 = vld [vmem:[%s3116 + $0x30] sm:$0xff]
        %v3124 = vld [vmem:[%s3116 + $0x38] sm:$0xff]
        %v3125 = vld [vmem:[%s3116 + $0x40] sm:$0xff]
        %v3126 = vld [vmem:[%s3116 + $0x48] sm:$0xff]
        %v3127 = vld [vmem:[%s3116 + $0x50] sm:$0xff]
        %v3128 = vld [vmem:[%s3116 + $0x58] sm:$0xff]
        %v3129 = vld [vmem:[%s3116 + $0x60] sm:$0xff]
        %v3130 = vld [vmem:[%s3116 + $0x68] sm:$0xff]
        %v3131 = vld [vmem:[%s3116 + $0x70] sm:$0xff]
        %v3132 = vld [vmem:[%s3116 + $0x78] sm:$0xff]
        %v3133 = vld [vmem:[%s3116 + $0x80] sm:$0xff]
        %v3134 = vld [vmem:[%s3116 + $0x88] sm:$0xff]
        %v3135 = vld [vmem:[%s3116 + $0x90] sm:$0xff]
        %v3136 = vld [vmem:[%s3116 + $0x98] sm:$0xff]
        %v3137 = vld [vmem:[%s3116 + $0xa0] sm:$0xff]
        %v3138 = vld [vmem:[%s3116 + $0xa8] sm:$0xff]
        %v3139 = vld [vmem:[%s3116 + $0xb0] sm:$0xff]
        %v3140 = vld [vmem:[%s3116 + $0xb8] sm:$0xff]
        %v3141 = vld [vmem:[%s3116 + $0xc0] sm:$0xff]
        %v3142 = vld [vmem:[%s3116 + $0xc8] sm:$0xff]
        %v3143 = vld [vmem:[%s3116 + $0xd0] sm:$0xff]
        %v3144 = vld [vmem:[%s3116 + $0xd8] sm:$0xff]
        %v3145 = vld [vmem:[%s3116 + $0xe0] sm:$0xff]
        %v3146 = vld [vmem:[%s3116 + $0xe8] sm:$0xff]
        %v3147 = vld [vmem:[%s3116 + $0xf0] sm:$0xff]
        %v3148 = vld [vmem:[%s3116 + $0xf8] sm:$0xff]
        %v3149 = vpack.c.bf16 %v3111, %v3111
        %v3150 = vpack.c.bf16 %v3112, %v3112
        %v3152 = vlaneseq
        %v3153 = vshrl.u32 %v3152, 7
        %v3154 = vsub.s32 0, %v3153
        %v3155 = vrot.slane %v3115, %v3154
        %v3156 = vlaneseq
        %v3157 = vshrl.u32 %v3156, 7
        %v3158 = vsub.s32 1, %v3157
        %v3159 = vrot.slane %v3115, %v3158
        %v3194 = vunpack.c.l.b16 %v3117
        %v3195 = vunpack.c.h.b16 %v3117
        %v3196 = vunpack.c.l.b16 %v3118
        %v3197 = vunpack.c.h.b16 %v3118
        %v3198 = vunpack.c.l.b16 %v3119
        %v3199 = vunpack.c.h.b16 %v3119
        %v3200 = vunpack.c.l.b16 %v3120
        %v3201 = vunpack.c.h.b16 %v3120
        %v3202 = vunpack.c.l.b16 %v3121
        %v3203 = vunpack.c.h.b16 %v3121
        %v3204 = vunpack.c.l.b16 %v3122
        %v3205 = vunpack.c.h.b16 %v3122
        %v3206 = vunpack.c.l.b16 %v3123
        %v3207 = vunpack.c.h.b16 %v3123
        %v3208 = vunpack.c.l.b16 %v3124
        %v3209 = vunpack.c.h.b16 %v3124
        %v3210 = vunpack.c.l.b16 %v3125
        %v3211 = vunpack.c.h.b16 %v3125
        %v3212 = vunpack.c.l.b16 %v3126
        %v3213 = vunpack.c.h.b16 %v3126
        %v3214 = vunpack.c.l.b16 %v3127
        %v3215 = vunpack.c.h.b16 %v3127
        %v3216 = vunpack.c.l.b16 %v3128
        %v3217 = vunpack.c.h.b16 %v3128
        %v3218 = vunpack.c.l.b16 %v3129
        %v3219 = vunpack.c.h.b16 %v3129
        %v3220 = vunpack.c.l.b16 %v3130
        %v3221 = vunpack.c.h.b16 %v3130
        %v3222 = vunpack.c.l.b16 %v3131
        %v3223 = vunpack.c.h.b16 %v3131
        %v3224 = vunpack.c.l.b16 %v3132
        %v3225 = vunpack.c.h.b16 %v3132
        %v3226 = vunpack.c.l.b16 %v3133
        %v3227 = vunpack.c.h.b16 %v3133
        %v3228 = vunpack.c.l.b16 %v3134
        %v3229 = vunpack.c.h.b16 %v3134
        %v3230 = vunpack.c.l.b16 %v3135
        %v3231 = vunpack.c.h.b16 %v3135
        %v3232 = vunpack.c.l.b16 %v3136
        %v3233 = vunpack.c.h.b16 %v3136
        %v3234 = vunpack.c.l.b16 %v3137
        %v3235 = vunpack.c.h.b16 %v3137
        %v3236 = vunpack.c.l.b16 %v3138
        %v3237 = vunpack.c.h.b16 %v3138
        %v3238 = vunpack.c.l.b16 %v3139
        %v3239 = vunpack.c.h.b16 %v3139
        %v3240 = vunpack.c.l.b16 %v3140
        %v3241 = vunpack.c.h.b16 %v3140
        %v3242 = vunpack.c.l.b16 %v3141
        %v3243 = vunpack.c.h.b16 %v3141
        %v3244 = vunpack.c.l.b16 %v3142
        %v3245 = vunpack.c.h.b16 %v3142
        %v3246 = vunpack.c.l.b16 %v3143
        %v3247 = vunpack.c.h.b16 %v3143
        %v3248 = vunpack.c.l.b16 %v3144
        %v3249 = vunpack.c.h.b16 %v3144
        %v3250 = vunpack.c.l.b16 %v3145
        %v3251 = vunpack.c.h.b16 %v3145
        %v3252 = vunpack.c.l.b16 %v3146
        %v3253 = vunpack.c.h.b16 %v3146
        %v3254 = vunpack.c.l.b16 %v3147
        %v3255 = vunpack.c.h.b16 %v3147
        %v3256 = vunpack.c.l.b16 %v3148
        %v3257 = vunpack.c.h.b16 %v3148
        %v3258 = vpack.c.b16 %v3196, %v3194
        %v3259 = vpack.c.b16 %v3197, %v3195
        %v3260 = vpack.c.b16 %v3200, %v3198
        %v3261 = vpack.c.b16 %v3201, %v3199
        %v3262 = vpack.c.b16 %v3204, %v3202
        %v3263 = vpack.c.b16 %v3205, %v3203
        %v3264 = vpack.c.b16 %v3208, %v3206
        %v3265 = vpack.c.b16 %v3209, %v3207
        %v3266 = vpack.c.b16 %v3212, %v3210
        %v3267 = vpack.c.b16 %v3213, %v3211
        %v3268 = vpack.c.b16 %v3216, %v3214
        %v3269 = vpack.c.b16 %v3217, %v3215
        %v3270 = vpack.c.b16 %v3220, %v3218
        %v3271 = vpack.c.b16 %v3221, %v3219
        %v3272 = vpack.c.b16 %v3224, %v3222
        %v3273 = vpack.c.b16 %v3225, %v3223
        %v3274 = vpack.c.b16 %v3228, %v3226
        %v3275 = vpack.c.b16 %v3229, %v3227
        %v3276 = vpack.c.b16 %v3232, %v3230
        %v3277 = vpack.c.b16 %v3233, %v3231
        %v3278 = vpack.c.b16 %v3236, %v3234
        %v3279 = vpack.c.b16 %v3237, %v3235
        %v3280 = vpack.c.b16 %v3240, %v3238
        %v3281 = vpack.c.b16 %v3241, %v3239
        %v3282 = vpack.c.b16 %v3244, %v3242
        %v3283 = vpack.c.b16 %v3245, %v3243
        %v3284 = vpack.c.b16 %v3248, %v3246
        %v3285 = vpack.c.b16 %v3249, %v3247
        %v3286 = vpack.c.b16 %v3252, %v3250
        %v3287 = vpack.c.b16 %v3253, %v3251
        %v3288 = vpack.c.b16 %v3256, %v3254
        %v3289 = vpack.c.b16 %v3257, %v3255
        %3322 = vmatprep.subr.bf16.mxu0 %v3259
        %3323 = vmatpush1.bf16.msra.mxu0 %v3258
        %3324 = vmatprep.subr.bf16.mxu0 %v3261
        %3325 = vmatpush1.bf16.msra.mxu0 %v3260
        %3326 = vmatprep.subr.bf16.mxu0 %v3263
        %3327 = vmatpush1.bf16.msra.mxu0 %v3262
        %3328 = vmatprep.subr.bf16.mxu0 %v3265
        %3329 = vmatpush1.bf16.msra.mxu0 %v3264
        %3330 = vmatprep.subr.bf16.mxu0 %v3267
        %3331 = vmatpush1.bf16.msra.mxu0 %v3266
        %3332 = vmatprep.subr.bf16.mxu0 %v3269
        %3333 = vmatpush1.bf16.msra.mxu0 %v3268
        %3334 = vmatprep.subr.bf16.mxu0 %v3271
        %3335 = vmatpush1.bf16.msra.mxu0 %v3270
        %3336 = vmatprep.subr.bf16.mxu0 %v3273
        %3337 = vmatpush1.bf16.msra.mxu0 %v3272
        %3338 = vmatprep.subr.bf16.mxu0 %v3275
        %3339 = vmatpush1.bf16.msra.mxu0 %v3274
        %3340 = vmatprep.subr.bf16.mxu0 %v3277
        %3341 = vmatpush1.bf16.msra.mxu0 %v3276
        %3342 = vmatprep.subr.bf16.mxu0 %v3279
        %3343 = vmatpush1.bf16.msra.mxu0 %v3278
        %3344 = vmatprep.subr.bf16.mxu0 %v3281
        %3345 = vmatpush1.bf16.msra.mxu0 %v3280
        %3346 = vmatprep.subr.bf16.mxu0 %v3283
        %3347 = vmatpush1.bf16.msra.mxu0 %v3282
        %3348 = vmatprep.subr.bf16.mxu0 %v3285
        %3349 = vmatpush1.bf16.msra.mxu0 %v3284
        %3350 = vmatprep.subr.bf16.mxu0 %v3287
        %3351 = vmatpush1.bf16.msra.mxu0 %v3286
        %3352 = vmatprep.subr.bf16.mxu0 %v3289
        %3353 = vmatpush1.bf16.msra.mxu0 %v3288
        %3354 = vmatprep.mubr.bf16.mxu0 %v3150
        %3355 = vmatmul.mubr.bf16.gmra.mrb[0].mxu0 %v3149
        %v3356 = vpop.f32.mrb[0].mxu0
        %v3357 = vadd.f32 %v3155, %v3356
        %v3358 = vpop.f32.mrb[0].mxu0
        %v3359 = vadd.f32 %v3159, %v3358
        %v3360 = vpop.f32.mrb[0].mxu0
        %v3361 = vpop.f32.mrb[0].mxu0
        %3362 = vdwg.mxu0
        %v3363 = vmax.f32 %v3357, 0.0
        %v3364 = vmax.f32 %v3359, 0.0
        %s3365 = scalar_lea.vmem %s12, 512
        %v3366 = vld [vmem:[%s3365] sm:$0xff]
        %v3367 = vld [vmem:[%s3365 + $0x8] sm:$0xff]
        %v3368 = vld [vmem:[%s3365 + $0x10] sm:$0xff]
        %v3369 = vld [vmem:[%s3365 + $0x18] sm:$0xff]
        %v3370 = vld [vmem:[%s3365 + $0x20] sm:$0xff]
        %v3371 = vld [vmem:[%s3365 + $0x28] sm:$0xff]
        %v3372 = vld [vmem:[%s3365 + $0x30] sm:$0xff]
        %v3373 = vld [vmem:[%s3365 + $0x38] sm:$0xff]
        %v3374 = vld [vmem:[%s3365 + $0x40] sm:$0xff]
        %v3375 = vld [vmem:[%s3365 + $0x48] sm:$0xff]
        %v3376 = vld [vmem:[%s3365 + $0x50] sm:$0xff]
        %v3377 = vld [vmem:[%s3365 + $0x58] sm:$0xff]
        %v3378 = vld [vmem:[%s3365 + $0x60] sm:$0xff]
        %v3379 = vld [vmem:[%s3365 + $0x68] sm:$0xff]
        %v3380 = vld [vmem:[%s3365 + $0x70] sm:$0xff]
        %v3381 = vld [vmem:[%s3365 + $0x78] sm:$0xff]
        %v3382 = vld [vmem:[%s3365 + $0x80] sm:$0xff]
        %v3383 = vld [vmem:[%s3365 + $0x88] sm:$0xff]
        %v3384 = vld [vmem:[%s3365 + $0x90] sm:$0xff]
        %v3385 = vld [vmem:[%s3365 + $0x98] sm:$0xff]
        %v3386 = vld [vmem:[%s3365 + $0xa0] sm:$0xff]
        %v3387 = vld [vmem:[%s3365 + $0xa8] sm:$0xff]
        %v3388 = vld [vmem:[%s3365 + $0xb0] sm:$0xff]
        %v3389 = vld [vmem:[%s3365 + $0xb8] sm:$0xff]
        %v3390 = vld [vmem:[%s3365 + $0xc0] sm:$0xff]
        %v3391 = vld [vmem:[%s3365 + $0xc8] sm:$0xff]
        %v3392 = vld [vmem:[%s3365 + $0xd0] sm:$0xff]
        %v3393 = vld [vmem:[%s3365 + $0xd8] sm:$0xff]
        %v3394 = vld [vmem:[%s3365 + $0xe0] sm:$0xff]
        %v3395 = vld [vmem:[%s3365 + $0xe8] sm:$0xff]
        %v3396 = vld [vmem:[%s3365 + $0xf0] sm:$0xff]
        %v3397 = vld [vmem:[%s3365 + $0xf8] sm:$0xff]
        %v3398 = vld [vmem:[%s12] sm:$0xff]
        %v3399 = vld [vmem:[%s12 + $0x8] sm:$0xff]
        %v3400 = vld [vmem:[%s12 + $0x10] sm:$0xff]
        %v3401 = vld [vmem:[%s12 + $0x18] sm:$0xff]
        %v3402 = vld [vmem:[%s12 + $0x20] sm:$0xff]
        %v3403 = vld [vmem:[%s12 + $0x28] sm:$0xff]
        %v3404 = vld [vmem:[%s12 + $0x30] sm:$0xff]
        %v3405 = vld [vmem:[%s12 + $0x38] sm:$0xff]
        %v3406 = vld [vmem:[%s12 + $0x40] sm:$0xff]
        %v3407 = vld [vmem:[%s12 + $0x48] sm:$0xff]
        %v3408 = vld [vmem:[%s12 + $0x50] sm:$0xff]
        %v3409 = vld [vmem:[%s12 + $0x58] sm:$0xff]
        %v3410 = vld [vmem:[%s12 + $0x60] sm:$0xff]
        %v3411 = vld [vmem:[%s12 + $0x68] sm:$0xff]
        %v3412 = vld [vmem:[%s12 + $0x70] sm:$0xff]
        %v3413 = vld [vmem:[%s12 + $0x78] sm:$0xff]
        %v3414 = vld [vmem:[%s12 + $0x80] sm:$0xff]
        %v3415 = vld [vmem:[%s12 + $0x88] sm:$0xff]
        %v3416 = vld [vmem:[%s12 + $0x90] sm:$0xff]
        %v3417 = vld [vmem:[%s12 + $0x98] sm:$0xff]
        %v3418 = vld [vmem:[%s12 + $0xa0] sm:$0xff]
        %v3419 = vld [vmem:[%s12 + $0xa8] sm:$0xff]
        %v3420 = vld [vmem:[%s12 + $0xb0] sm:$0xff]
        %v3421 = vld [vmem:[%s12 + $0xb8] sm:$0xff]
        %v3422 = vld [vmem:[%s12 + $0xc0] sm:$0xff]
        %v3423 = vld [vmem:[%s12 + $0xc8] sm:$0xff]
        %v3424 = vld [vmem:[%s12 + $0xd0] sm:$0xff]
        %v3425 = vld [vmem:[%s12 + $0xd8] sm:$0xff]
        %v3426 = vld [vmem:[%s12 + $0xe0] sm:$0xff]
        %v3427 = vld [vmem:[%s12 + $0xe8] sm:$0xff]
        %v3428 = vld [vmem:[%s12 + $0xf0] sm:$0xff]
        %v3429 = vld [vmem:[%s12 + $0xf8] sm:$0xff]
        %v3430 = vpack.c.bf16 %v3113, %v3113
        %v3431 = vpack.c.bf16 %v3114, %v3114
        %v3433 = vshrl.u32 %v3430, 16
        %v3435 = vshll.u32 %v3430, 16
        %v3437 = vrot.slane %v3435, 1
        %v3438 = vor.u32 %v3433, %v3437
        %v3440 = vshrl.u32 %v3431, 16
        %v3442 = vshll.u32 %v3431, 16
        %v3444 = vrot.slane %v3442, 1
        %v3445 = vor.u32 %v3440, %v3444
        %v3480 = vunpack.c.l.b16 %v3398
        %v3481 = vunpack.c.h.b16 %v3398
        %v3482 = vunpack.c.l.b16 %v3399
        %v3483 = vunpack.c.h.b16 %v3399
        %v3484 = vunpack.c.l.b16 %v3400
        %v3485 = vunpack.c.h.b16 %v3400
        %v3486 = vunpack.c.l.b16 %v3401
        %v3487 = vunpack.c.h.b16 %v3401
        %v3488 = vunpack.c.l.b16 %v3402
        %v3489 = vunpack.c.h.b16 %v3402
        %v3490 = vunpack.c.l.b16 %v3403
        %v3491 = vunpack.c.h.b16 %v3403
        %v3492 = vunpack.c.l.b16 %v3404
        %v3493 = vunpack.c.h.b16 %v3404
        %v3494 = vunpack.c.l.b16 %v3405
        %v3495 = vunpack.c.h.b16 %v3405
        %v3496 = vunpack.c.l.b16 %v3406
        %v3497 = vunpack.c.h.b16 %v3406
        %v3498 = vunpack.c.l.b16 %v3407
        %v3499 = vunpack.c.h.b16 %v3407
        %v3500 = vunpack.c.l.b16 %v3408
        %v3501 = vunpack.c.h.b16 %v3408
        %v3502 = vunpack.c.l.b16 %v3409
        %v3503 = vunpack.c.h.b16 %v3409
        %v3504 = vunpack.c.l.b16 %v3410
        %v3505 = vunpack.c.h.b16 %v3410
        %v3506 = vunpack.c.l.b16 %v3411
        %v3507 = vunpack.c.h.b16 %v3411
        %v3508 = vunpack.c.l.b16 %v3412
        %v3509 = vunpack.c.h.b16 %v3412
        %v3510 = vunpack.c.l.b16 %v3413
        %v3511 = vunpack.c.h.b16 %v3413
        %v3512 = vunpack.c.l.b16 %v3414
        %v3513 = vunpack.c.h.b16 %v3414
        %v3514 = vunpack.c.l.b16 %v3415
        %v3515 = vunpack.c.h.b16 %v3415
        %v3516 = vunpack.c.l.b16 %v3416
        %v3517 = vunpack.c.h.b16 %v3416
        %v3518 = vunpack.c.l.b16 %v3417
        %v3519 = vunpack.c.h.b16 %v3417
        %v3520 = vunpack.c.l.b16 %v3418
        %v3521 = vunpack.c.h.b16 %v3418
        %v3522 = vunpack.c.l.b16 %v3419
        %v3523 = vunpack.c.h.b16 %v3419
        %v3524 = vunpack.c.l.b16 %v3420
        %v3525 = vunpack.c.h.b16 %v3420
        %v3526 = vunpack.c.l.b16 %v3421
        %v3527 = vunpack.c.h.b16 %v3421
        %v3528 = vunpack.c.l.b16 %v3422
        %v3529 = vunpack.c.h.b16 %v3422
        %v3530 = vunpack.c.l.b16 %v3423
        %v3531 = vunpack.c.h.b16 %v3423
        %v3532 = vunpack.c.l.b16 %v3424
        %v3533 = vunpack.c.h.b16 %v3424
        %v3534 = vunpack.c.l.b16 %v3425
        %v3535 = vunpack.c.h.b16 %v3425
        %v3536 = vunpack.c.l.b16 %v3426
        %v3537 = vunpack.c.h.b16 %v3426
        %v3538 = vunpack.c.l.b16 %v3427
        %v3539 = vunpack.c.h.b16 %v3427
        %v3540 = vunpack.c.l.b16 %v3428
        %v3541 = vunpack.c.h.b16 %v3428
        %v3542 = vunpack.c.l.b16 %v3429
        %v3543 = vunpack.c.h.b16 %v3429
        %v3544 = vpack.c.b16 %v3482, %v3480
        %v3545 = vpack.c.b16 %v3483, %v3481
        %v3546 = vpack.c.b16 %v3486, %v3484
        %v3547 = vpack.c.b16 %v3487, %v3485
        %v3548 = vpack.c.b16 %v3490, %v3488
        %v3549 = vpack.c.b16 %v3491, %v3489
        %v3550 = vpack.c.b16 %v3494, %v3492
        %v3551 = vpack.c.b16 %v3495, %v3493
        %v3552 = vpack.c.b16 %v3498, %v3496
        %v3553 = vpack.c.b16 %v3499, %v3497
        %v3554 = vpack.c.b16 %v3502, %v3500
        %v3555 = vpack.c.b16 %v3503, %v3501
        %v3556 = vpack.c.b16 %v3506, %v3504
        %v3557 = vpack.c.b16 %v3507, %v3505
        %v3558 = vpack.c.b16 %v3510, %v3508
        %v3559 = vpack.c.b16 %v3511, %v3509
        %v3560 = vpack.c.b16 %v3514, %v3512
        %v3561 = vpack.c.b16 %v3515, %v3513
        %v3562 = vpack.c.b16 %v3518, %v3516
        %v3563 = vpack.c.b16 %v3519, %v3517
        %v3564 = vpack.c.b16 %v3522, %v3520
        %v3565 = vpack.c.b16 %v3523, %v3521
        %v3566 = vpack.c.b16 %v3526, %v3524
        %v3567 = vpack.c.b16 %v3527, %v3525
        %v3568 = vpack.c.b16 %v3530, %v3528
        %v3569 = vpack.c.b16 %v3531, %v3529
        %v3570 = vpack.c.b16 %v3534, %v3532
        %v3571 = vpack.c.b16 %v3535, %v3533
        %v3572 = vpack.c.b16 %v3538, %v3536
        %v3573 = vpack.c.b16 %v3539, %v3537
        %v3574 = vpack.c.b16 %v3542, %v3540
        %v3575 = vpack.c.b16 %v3543, %v3541
        %3608 = vmatprep.subr.bf16.mxu0 %v3545
        %3609 = vmatpush1.bf16.msra.mxu0 %v3544
        %3610 = vmatprep.subr.bf16.mxu0 %v3547
        %3611 = vmatpush1.bf16.msra.mxu0 %v3546
        %3612 = vmatprep.subr.bf16.mxu0 %v3549
        %3613 = vmatpush1.bf16.msra.mxu0 %v3548
        %3614 = vmatprep.subr.bf16.mxu0 %v3551
        %3615 = vmatpush1.bf16.msra.mxu0 %v3550
        %3616 = vmatprep.subr.bf16.mxu0 %v3553
        %3617 = vmatpush1.bf16.msra.mxu0 %v3552
        %3618 = vmatprep.subr.bf16.mxu0 %v3555
        %3619 = vmatpush1.bf16.msra.mxu0 %v3554
        %3620 = vmatprep.subr.bf16.mxu0 %v3557
        %3621 = vmatpush1.bf16.msra.mxu0 %v3556
        %3622 = vmatprep.subr.bf16.mxu0 %v3559
        %3623 = vmatpush1.bf16.msra.mxu0 %v3558
        %3624 = vmatprep.subr.bf16.mxu0 %v3561
        %3625 = vmatpush1.bf16.msra.mxu0 %v3560
        %3626 = vmatprep.subr.bf16.mxu0 %v3563
        %3627 = vmatpush1.bf16.msra.mxu0 %v3562
        %3628 = vmatprep.subr.bf16.mxu0 %v3565
        %3629 = vmatpush1.bf16.msra.mxu0 %v3564
        %3630 = vmatprep.subr.bf16.mxu0 %v3567
        %3631 = vmatpush1.bf16.msra.mxu0 %v3566
        %3632 = vmatprep.subr.bf16.mxu0 %v3569
        %3633 = vmatpush1.bf16.msra.mxu0 %v3568
        %3634 = vmatprep.subr.bf16.mxu0 %v3571
        %3635 = vmatpush1.bf16.msra.mxu0 %v3570
        %3636 = vmatprep.subr.bf16.mxu0 %v3573
        %3637 = vmatpush1.bf16.msra.mxu0 %v3572
        %3638 = vmatprep.subr.bf16.mxu0 %v3575
        %3639 = vmatpush1.bf16.msra.mxu0 %v3574
        %3640 = vmatprep.mubr.bf16.mxu0 %v3445
        %3641 = vmatmul.mubr.bf16.gmra.mrb[0].mxu0 %v3438
        %v3642 = vpop.f32.mrb[0].mxu0
        %v3643 = vadd.f32 0.0, %v3642
        %v3644 = vpop.f32.mrb[0].mxu0
        %v3645 = vadd.f32 0.0, %v3644
        %v3646 = vpop.f32.mrb[0].mxu0
        %v3647 = vpop.f32.mrb[0].mxu0
        %3648 = vdwg.mxu0
        %v3681 = vunpack.c.l.b16 %v3366
        %v3682 = vunpack.c.h.b16 %v3366
        %v3683 = vunpack.c.l.b16 %v3367
        %v3684 = vunpack.c.h.b16 %v3367
        %v3685 = vunpack.c.l.b16 %v3368
        %v3686 = vunpack.c.h.b16 %v3368
        %v3687 = vunpack.c.l.b16 %v3369
        %v3688 = vunpack.c.h.b16 %v3369
        %v3689 = vunpack.c.l.b16 %v3370
        %v3690 = vunpack.c.h.b16 %v3370
        %v3691 = vunpack.c.l.b16 %v3371
        %v3692 = vunpack.c.h.b16 %v3371
        %v3693 = vunpack.c.l.b16 %v3372
        %v3694 = vunpack.c.h.b16 %v3372
        %v3695 = vunpack.c.l.b16 %v3373
        %v3696 = vunpack.c.h.b16 %v3373
        %v3697 = vunpack.c.l.b16 %v3374
        %v3698 = vunpack.c.h.b16 %v3374
        %v3699 = vunpack.c.l.b16 %v3375
        %v3700 = vunpack.c.h.b16 %v3375
        %v3701 = vunpack.c.l.b16 %v3376
        %v3702 = vunpack.c.h.b16 %v3376
        %v3703 = vunpack.c.l.b16 %v3377
        %v3704 = vunpack.c.h.b16 %v3377
        %v3705 = vunpack.c.l.b16 %v3378
        %v3706 = vunpack.c.h.b16 %v3378
        %v3707 = vunpack.c.l.b16 %v3379
        %v3708 = vunpack.c.h.b16 %v3379
        %v3709 = vunpack.c.l.b16 %v3380
        %v3710 = vunpack.c.h.b16 %v3380
        %v3711 = vunpack.c.l.b16 %v3381
        %v3712 = vunpack.c.h.b16 %v3381
        %v3713 = vunpack.c.l.b16 %v3382
        %v3714 = vunpack.c.h.b16 %v3382
        %v3715 = vunpack.c.l.b16 %v3383
        %v3716 = vunpack.c.h.b16 %v3383
        %v3717 = vunpack.c.l.b16 %v3384
        %v3718 = vunpack.c.h.b16 %v3384
        %v3719 = vunpack.c.l.b16 %v3385
        %v3720 = vunpack.c.h.b16 %v3385
        %v3721 = vunpack.c.l.b16 %v3386
        %v3722 = vunpack.c.h.b16 %v3386
        %v3723 = vunpack.c.l.b16 %v3387
        %v3724 = vunpack.c.h.b16 %v3387
        %v3725 = vunpack.c.l.b16 %v3388
        %v3726 = vunpack.c.h.b16 %v3388
        %v3727 = vunpack.c.l.b16 %v3389
        %v3728 = vunpack.c.h.b16 %v3389
        %v3729 = vunpack.c.l.b16 %v3390
        %v3730 = vunpack.c.h.b16 %v3390
        %v3731 = vunpack.c.l.b16 %v3391
        %v3732 = vunpack.c.h.b16 %v3391
        %v3733 = vunpack.c.l.b16 %v3392
        %v3734 = vunpack.c.h.b16 %v3392
        %v3735 = vunpack.c.l.b16 %v3393
        %v3736 = vunpack.c.h.b16 %v3393
        %v3737 = vunpack.c.l.b16 %v3394
        %v3738 = vunpack.c.h.b16 %v3394
        %v3739 = vunpack.c.l.b16 %v3395
        %v3740 = vunpack.c.h.b16 %v3395
        %v3741 = vunpack.c.l.b16 %v3396
        %v3742 = vunpack.c.h.b16 %v3396
        %v3743 = vunpack.c.l.b16 %v3397
        %v3744 = vunpack.c.h.b16 %v3397
        %v3745 = vpack.c.b16 %v3683, %v3681
        %v3746 = vpack.c.b16 %v3684, %v3682
        %v3747 = vpack.c.b16 %v3687, %v3685
        %v3748 = vpack.c.b16 %v3688, %v3686
        %v3749 = vpack.c.b16 %v3691, %v3689
        %v3750 = vpack.c.b16 %v3692, %v3690
        %v3751 = vpack.c.b16 %v3695, %v3693
        %v3752 = vpack.c.b16 %v3696, %v3694
        %v3753 = vpack.c.b16 %v3699, %v3697
        %v3754 = vpack.c.b16 %v3700, %v3698
        %v3755 = vpack.c.b16 %v3703, %v3701
        %v3756 = vpack.c.b16 %v3704, %v3702
        %v3757 = vpack.c.b16 %v3707, %v3705
        %v3758 = vpack.c.b16 %v3708, %v3706
        %v3759 = vpack.c.b16 %v3711, %v3709
        %v3760 = vpack.c.b16 %v3712, %v3710
        %v3761 = vpack.c.b16 %v3715, %v3713
        %v3762 = vpack.c.b16 %v3716, %v3714
        %v3763 = vpack.c.b16 %v3719, %v3717
        %v3764 = vpack.c.b16 %v3720, %v3718
        %v3765 = vpack.c.b16 %v3723, %v3721
        %v3766 = vpack.c.b16 %v3724, %v3722
        %v3767 = vpack.c.b16 %v3727, %v3725
        %v3768 = vpack.c.b16 %v3728, %v3726
        %v3769 = vpack.c.b16 %v3731, %v3729
        %v3770 = vpack.c.b16 %v3732, %v3730
        %v3771 = vpack.c.b16 %v3735, %v3733
        %v3772 = vpack.c.b16 %v3736, %v3734
        %v3773 = vpack.c.b16 %v3739, %v3737
        %v3774 = vpack.c.b16 %v3740, %v3738
        %v3775 = vpack.c.b16 %v3743, %v3741
        %v3776 = vpack.c.b16 %v3744, %v3742
        %3809 = vmatprep.subr.bf16.mxu0 %v3746
        %3810 = vmatpush1.bf16.msra.mxu0 %v3745
        %3811 = vmatprep.subr.bf16.mxu0 %v3748
        %3812 = vmatpush1.bf16.msra.mxu0 %v3747
        %3813 = vmatprep.subr.bf16.mxu0 %v3750
        %3814 = vmatpush1.bf16.msra.mxu0 %v3749
        %3815 = vmatprep.subr.bf16.mxu0 %v3752
        %3816 = vmatpush1.bf16.msra.mxu0 %v3751
        %3817 = vmatprep.subr.bf16.mxu0 %v3754
        %3818 = vmatpush1.bf16.msra.mxu0 %v3753
        %3819 = vmatprep.subr.bf16.mxu0 %v3756
        %3820 = vmatpush1.bf16.msra.mxu0 %v3755
        %3821 = vmatprep.subr.bf16.mxu0 %v3758
        %3822 = vmatpush1.bf16.msra.mxu0 %v3757
        %3823 = vmatprep.subr.bf16.mxu0 %v3760
        %3824 = vmatpush1.bf16.msra.mxu0 %v3759
        %3825 = vmatprep.subr.bf16.mxu0 %v3762
        %3826 = vmatpush1.bf16.msra.mxu0 %v3761
        %3827 = vmatprep.subr.bf16.mxu0 %v3764
        %3828 = vmatpush1.bf16.msra.mxu0 %v3763
        %3829 = vmatprep.subr.bf16.mxu0 %v3766
        %3830 = vmatpush1.bf16.msra.mxu0 %v3765
        %3831 = vmatprep.subr.bf16.mxu0 %v3768
        %3832 = vmatpush1.bf16.msra.mxu0 %v3767
        %3833 = vmatprep.subr.bf16.mxu0 %v3770
        %3834 = vmatpush1.bf16.msra.mxu0 %v3769
        %3835 = vmatprep.subr.bf16.mxu0 %v3772
        %3836 = vmatpush1.bf16.msra.mxu0 %v3771
        %3837 = vmatprep.subr.bf16.mxu0 %v3774
        %3838 = vmatpush1.bf16.msra.mxu0 %v3773
        %3839 = vmatprep.subr.bf16.mxu0 %v3776
        %3840 = vmatpush1.bf16.msra.mxu0 %v3775
        %3841 = vmatprep.mubr.bf16.mxu0 %v3150
        %3842 = vmatmul.mubr.bf16.gmra.mrb[0].mxu0 %v3149
        %v3843 = vpop.f32.mrb[0].mxu0
        %v3844 = vadd.f32 %v3643, %v3843
        %v3845 = vpop.f32.mrb[0].mxu0
        %v3846 = vadd.f32 %v3645, %v3845
        %v3847 = vpop.f32.mrb[0].mxu0
        %v3848 = vpop.f32.mrb[0].mxu0
        %3849 = vdwg.mxu0
        %v3850 = vadd.f32 %v3844, %v3155
        %v3851 = vadd.f32 %v3846, %v3159
        %v3852 = vmax.f32 %v3850, 0.0
        %v3853 = vmax.f32 %v3851, 0.0
        %3854 = vst [vmem:[#allocation2] sm:$0xf] %v3363
        %3855 = vst [vmem:[#allocation2 + $0x8] sm:$0xf] %v3364
        %3856 = vst.msk [vmem:[%s3108] ss:$8 sm:$0x3] %vm1036, 0.0
        %3857 = vst.msk [vmem:[%s3108] ss:$8 sm:$0x0] %vm1036, 0.0
        %v3858 = vld [vmem:[#allocation2] sm:$0x1e]
        %v3859 = vld [vmem:[#allocation2 + $0x8] sm:$0x1e]
        %v3860 = vld [vmem:[%s15] sm:$0x1]
        %s3861 = scalar_lea.vmem %s14, 128
        %v3862 = vld [vmem:[%s3861] sm:$0xf]
        %v3863 = vld [vmem:[%s3861 + $0x4] sm:$0xf]
        %v3864 = vld [vmem:[%s3861 + $0x8] sm:$0xf]
        %v3865 = vld [vmem:[%s3861 + $0xc] sm:$0xf]
        %v3866 = vld [vmem:[%s3861 + $0x10] sm:$0xf]
        %v3867 = vld [vmem:[%s3861 + $0x14] sm:$0xf]
        %v3868 = vld [vmem:[%s3861 + $0x18] sm:$0xf]
        %v3869 = vld [vmem:[%s3861 + $0x1c] sm:$0xf]
        %v3870 = vld [vmem:[%s3861 + $0x20] sm:$0xf]
        %v3871 = vld [vmem:[%s3861 + $0x24] sm:$0xf]
        %v3872 = vld [vmem:[%s3861 + $0x28] sm:$0xf]
        %v3873 = vld [vmem:[%s3861 + $0x2c] sm:$0xf]
        %v3874 = vld [vmem:[%s3861 + $0x30] sm:$0xf]
        %v3875 = vld [vmem:[%s3861 + $0x34] sm:$0xf]
        %v3876 = vld [vmem:[%s3861 + $0x38] sm:$0xf]
        %v3877 = vld [vmem:[%s3861 + $0x3c] sm:$0xf]
        %v3878 = vld [vmem:[%s3861 + $0x40] sm:$0xf]
        %v3879 = vld [vmem:[%s3861 + $0x44] sm:$0xf]
        %v3880 = vld [vmem:[%s3861 + $0x48] sm:$0xf]
        %v3881 = vld [vmem:[%s3861 + $0x4c] sm:$0xf]
        %v3882 = vld [vmem:[%s3861 + $0x50] sm:$0xf]
        %v3883 = vld [vmem:[%s3861 + $0x54] sm:$0xf]
        %v3884 = vld [vmem:[%s3861 + $0x58] sm:$0xf]
        %v3885 = vld [vmem:[%s3861 + $0x5c] sm:$0xf]
        %v3886 = vld [vmem:[%s3861 + $0x60] sm:$0xf]
        %v3887 = vld [vmem:[%s3861 + $0x64] sm:$0xf]
        %v3888 = vld [vmem:[%s3861 + $0x68] sm:$0xf]
        %v3889 = vld [vmem:[%s3861 + $0x6c] sm:$0xf]
        %v3890 = vld [vmem:[%s3861 + $0x70] sm:$0xf]
        %v3891 = vld [vmem:[%s3861 + $0x74] sm:$0xf]
        %v3892 = vld [vmem:[%s3861 + $0x78] sm:$0xf]
        %v3893 = vld [vmem:[%s3861 + $0x7c] sm:$0xf]
        %v3894 = vpack.c.bf16 %v3363, %v3363
        %v3895 = vpack.c.bf16 %v3364, %v3364
        %v3897 = vlaneseq
        %v3898 = vshrl.u32 %v3897, 7
        %v3899 = vsub.s32 0, %v3898
        %v3900 = vrot.slane %v3860, %v3899
        %v3934 = vunpack.c.l.b16 %v3862
        %v3935 = vunpack.c.l.b16 %v3863
        %v3936 = vunpack.c.l.b16 %v3864
        %v3937 = vunpack.c.l.b16 %v3865
        %v3938 = vunpack.c.l.b16 %v3866
        %v3939 = vunpack.c.l.b16 %v3867
        %v3940 = vunpack.c.l.b16 %v3868
        %v3941 = vunpack.c.l.b16 %v3869
        %v3942 = vunpack.c.l.b16 %v3870
        %v3943 = vunpack.c.l.b16 %v3871
        %v3944 = vunpack.c.l.b16 %v3872
        %v3945 = vunpack.c.l.b16 %v3873
        %v3946 = vunpack.c.l.b16 %v3874
        %v3947 = vunpack.c.l.b16 %v3875
        %v3948 = vunpack.c.l.b16 %v3876
        %v3949 = vunpack.c.l.b16 %v3877
        %v3950 = vunpack.c.l.b16 %v3878
        %v3951 = vunpack.c.l.b16 %v3879
        %v3952 = vunpack.c.l.b16 %v3880
        %v3953 = vunpack.c.l.b16 %v3881
        %v3954 = vunpack.c.l.b16 %v3882
        %v3955 = vunpack.c.l.b16 %v3883
        %v3956 = vunpack.c.l.b16 %v3884
        %v3957 = vunpack.c.l.b16 %v3885
        %v3958 = vunpack.c.l.b16 %v3886
        %v3959 = vunpack.c.l.b16 %v3887
        %v3960 = vunpack.c.l.b16 %v3888
        %v3961 = vunpack.c.l.b16 %v3889
        %v3962 = vunpack.c.l.b16 %v3890
        %v3963 = vunpack.c.l.b16 %v3891
        %v3964 = vunpack.c.l.b16 %v3892
        %v3965 = vunpack.c.l.b16 %v3893
        %v3966 = vpack.c.b16 %v3935, %v3934
        %v3967 = vpack.c.b16 %v3937, %v3936
        %v3968 = vpack.c.b16 %v3939, %v3938
        %v3969 = vpack.c.b16 %v3941, %v3940
        %v3970 = vpack.c.b16 %v3943, %v3942
        %v3971 = vpack.c.b16 %v3945, %v3944
        %v3972 = vpack.c.b16 %v3947, %v3946
        %v3973 = vpack.c.b16 %v3949, %v3948
        %v3974 = vpack.c.b16 %v3951, %v3950
        %v3975 = vpack.c.b16 %v3953, %v3952
        %v3976 = vpack.c.b16 %v3955, %v3954
        %v3977 = vpack.c.b16 %v3957, %v3956
        %v3978 = vpack.c.b16 %v3959, %v3958
        %v3979 = vpack.c.b16 %v3961, %v3960
        %v3980 = vpack.c.b16 %v3963, %v3962
        %v3981 = vpack.c.b16 %v3965, %v3964
        %3998 = vmatprep.subr.bf16.mxu0 0
        %3999 = vmatpush1.bf16.msra.mxu0 %v3966
        %4000 = vmatprep.subr.bf16.mxu0 0
        %4001 = vmatpush1.bf16.msra.mxu0 %v3967
        %4002 = vmatprep.subr.bf16.mxu0 0
        %4003 = vmatpush1.bf16.msra.mxu0 %v3968
        %4004 = vmatprep.subr.bf16.mxu0 0
        %4005 = vmatpush1.bf16.msra.mxu0 %v3969
        %4006 = vmatprep.subr.bf16.mxu0 0
        %4007 = vmatpush1.bf16.msra.mxu0 %v3970
        %4008 = vmatprep.subr.bf16.mxu0 0
        %4009 = vmatpush1.bf16.msra.mxu0 %v3971
        %4010 = vmatprep.subr.bf16.mxu0 0
        %4011 = vmatpush1.bf16.msra.mxu0 %v3972
        %4012 = vmatprep.subr.bf16.mxu0 0
        %4013 = vmatpush1.bf16.msra.mxu0 %v3973
        %4014 = vmatprep.subr.bf16.mxu0 0
        %4015 = vmatpush1.bf16.msra.mxu0 %v3974
        %4016 = vmatprep.subr.bf16.mxu0 0
        %4017 = vmatpush1.bf16.msra.mxu0 %v3975
        %4018 = vmatprep.subr.bf16.mxu0 0
        %4019 = vmatpush1.bf16.msra.mxu0 %v3976
        %4020 = vmatprep.subr.bf16.mxu0 0
        %4021 = vmatpush1.bf16.msra.mxu0 %v3977
        %4022 = vmatprep.subr.bf16.mxu0 0
        %4023 = vmatpush1.bf16.msra.mxu0 %v3978
        %4024 = vmatprep.subr.bf16.mxu0 0
        %4025 = vmatpush1.bf16.msra.mxu0 %v3979
        %4026 = vmatprep.subr.bf16.mxu0 0
        %4027 = vmatpush1.bf16.msra.mxu0 %v3980
        %4028 = vmatprep.subr.bf16.mxu0 0
        %4029 = vmatpush1.bf16.msra.mxu0 %v3981
        %4030 = vmatprep.mubr.bf16.mxu0 %v3895
        %4031 = vmatmul.mubr.bf16.gmra.mrb[0].mxu0 %v3894
        %v4032 = vpop.f32.mrb[0].mxu0
        %v4033 = vadd.f32 %v3900, %v4032
        %v4034 = vpop.f32.mrb[0].mxu0
        %v4035 = vpop.f32.mrb[0].mxu0
        %v4036 = vpop.f32.mrb[0].mxu0
        %4037 = vdwg.mxu0
        %v4038 = vxor.u32 %v4033, 2147483648
        %v4039 = vmul.f32 %v4038, 1.442695
        %v4040 = vpow.pop %v4039
        %v4041 = vadd.f32 %v4040, 1.0
        %v4042 = vrcp.pop %v4041
        %v4043 = vmul.f32 1.0, %v4042
        %s4044 = scalar_lea.vmem %s14, 256
        %v4045 = vld [vmem:[%s4044] sm:$0xf]
        %v4046 = vld [vmem:[%s4044 + $0x4] sm:$0xf]
        %v4047 = vld [vmem:[%s4044 + $0x8] sm:$0xf]
        %v4048 = vld [vmem:[%s4044 + $0xc] sm:$0xf]
        %v4049 = vld [vmem:[%s4044 + $0x10] sm:$0xf]
        %v4050 = vld [vmem:[%s4044 + $0x14] sm:$0xf]
        %v4051 = vld [vmem:[%s4044 + $0x18] sm:$0xf]
        %v4052 = vld [vmem:[%s4044 + $0x1c] sm:$0xf]
        %v4053 = vld [vmem:[%s4044 + $0x20] sm:$0xf]
        %v4054 = vld [vmem:[%s4044 + $0x24] sm:$0xf]
        %v4055 = vld [vmem:[%s4044 + $0x28] sm:$0xf]
        %v4056 = vld [vmem:[%s4044 + $0x2c] sm:$0xf]
        %v4057 = vld [vmem:[%s4044 + $0x30] sm:$0xf]
        %v4058 = vld [vmem:[%s4044 + $0x34] sm:$0xf]
        %v4059 = vld [vmem:[%s4044 + $0x38] sm:$0xf]
        %v4060 = vld [vmem:[%s4044 + $0x3c] sm:$0xf]
        %v4061 = vld [vmem:[%s4044 + $0x40] sm:$0xf]
        %v4062 = vld [vmem:[%s4044 + $0x44] sm:$0xf]
        %v4063 = vld [vmem:[%s4044 + $0x48] sm:$0xf]
        %v4064 = vld [vmem:[%s4044 + $0x4c] sm:$0xf]
        %v4065 = vld [vmem:[%s4044 + $0x50] sm:$0xf]
        %v4066 = vld [vmem:[%s4044 + $0x54] sm:$0xf]
        %v4067 = vld [vmem:[%s4044 + $0x58] sm:$0xf]
        %v4068 = vld [vmem:[%s4044 + $0x5c] sm:$0xf]
        %v4069 = vld [vmem:[%s4044 + $0x60] sm:$0xf]
        %v4070 = vld [vmem:[%s4044 + $0x64] sm:$0xf]
        %v4071 = vld [vmem:[%s4044 + $0x68] sm:$0xf]
        %v4072 = vld [vmem:[%s4044 + $0x6c] sm:$0xf]
        %v4073 = vld [vmem:[%s4044 + $0x70] sm:$0xf]
        %v4074 = vld [vmem:[%s4044 + $0x74] sm:$0xf]
        %v4075 = vld [vmem:[%s4044 + $0x78] sm:$0xf]
        %v4076 = vld [vmem:[%s4044 + $0x7c] sm:$0xf]
        %v4077 = vld [vmem:[%s14] sm:$0xf]
        %v4078 = vld [vmem:[%s14 + $0x4] sm:$0xf]
        %v4079 = vld [vmem:[%s14 + $0x8] sm:$0xf]
        %v4080 = vld [vmem:[%s14 + $0xc] sm:$0xf]
        %v4081 = vld [vmem:[%s14 + $0x10] sm:$0xf]
        %v4082 = vld [vmem:[%s14 + $0x14] sm:$0xf]
        %v4083 = vld [vmem:[%s14 + $0x18] sm:$0xf]
        %v4084 = vld [vmem:[%s14 + $0x1c] sm:$0xf]
        %v4085 = vld [vmem:[%s14 + $0x20] sm:$0xf]
        %v4086 = vld [vmem:[%s14 + $0x24] sm:$0xf]
        %v4087 = vld [vmem:[%s14 + $0x28] sm:$0xf]
        %v4088 = vld [vmem:[%s14 + $0x2c] sm:$0xf]
        %v4089 = vld [vmem:[%s14 + $0x30] sm:$0xf]
        %v4090 = vld [vmem:[%s14 + $0x34] sm:$0xf]
        %v4091 = vld [vmem:[%s14 + $0x38] sm:$0xf]
        %v4092 = vld [vmem:[%s14 + $0x3c] sm:$0xf]
        %v4093 = vld [vmem:[%s14 + $0x40] sm:$0xf]
        %v4094 = vld [vmem:[%s14 + $0x44] sm:$0xf]
        %v4095 = vld [vmem:[%s14 + $0x48] sm:$0xf]
        %v4096 = vld [vmem:[%s14 + $0x4c] sm:$0xf]
        %v4097 = vld [vmem:[%s14 + $0x50] sm:$0xf]
        %v4098 = vld [vmem:[%s14 + $0x54] sm:$0xf]
        %v4099 = vld [vmem:[%s14 + $0x58] sm:$0xf]
        %v4100 = vld [vmem:[%s14 + $0x5c] sm:$0xf]
        %v4101 = vld [vmem:[%s14 + $0x60] sm:$0xf]
        %v4102 = vld [vmem:[%s14 + $0x64] sm:$0xf]
        %v4103 = vld [vmem:[%s14 + $0x68] sm:$0xf]
        %v4104 = vld [vmem:[%s14 + $0x6c] sm:$0xf]
        %v4105 = vld [vmem:[%s14 + $0x70] sm:$0xf]
        %v4106 = vld [vmem:[%s14 + $0x74] sm:$0xf]
        %v4107 = vld [vmem:[%s14 + $0x78] sm:$0xf]
        %v4108 = vld [vmem:[%s14 + $0x7c] sm:$0xf]
        %v4109 = vpack.c.bf16 %v3852, %v3852
        %v4110 = vpack.c.bf16 %v3853, %v3853
        %v4143 = vunpack.c.l.b16 %v4077
        %v4144 = vunpack.c.l.b16 %v4078
        %v4145 = vunpack.c.l.b16 %v4079
        %v4146 = vunpack.c.l.b16 %v4080
        %v4147 = vunpack.c.l.b16 %v4081
        %v4148 = vunpack.c.l.b16 %v4082
        %v4149 = vunpack.c.l.b16 %v4083
        %v4150 = vunpack.c.l.b16 %v4084
        %v4151 = vunpack.c.l.b16 %v4085
        %v4152 = vunpack.c.l.b16 %v4086
        %v4153 = vunpack.c.l.b16 %v4087
        %v4154 = vunpack.c.l.b16 %v4088
        %v4155 = vunpack.c.l.b16 %v4089
        %v4156 = vunpack.c.l.b16 %v4090
        %v4157 = vunpack.c.l.b16 %v4091
        %v4158 = vunpack.c.l.b16 %v4092
        %v4159 = vunpack.c.l.b16 %v4093
        %v4160 = vunpack.c.l.b16 %v4094
        %v4161 = vunpack.c.l.b16 %v4095
        %v4162 = vunpack.c.l.b16 %v4096
        %v4163 = vunpack.c.l.b16 %v4097
        %v4164 = vunpack.c.l.b16 %v4098
        %v4165 = vunpack.c.l.b16 %v4099
        %v4166 = vunpack.c.l.b16 %v4100
        %v4167 = vunpack.c.l.b16 %v4101
        %v4168 = vunpack.c.l.b16 %v4102
        %v4169 = vunpack.c.l.b16 %v4103
        %v4170 = vunpack.c.l.b16 %v4104
        %v4171 = vunpack.c.l.b16 %v4105
        %v4172 = vunpack.c.l.b16 %v4106
        %v4173 = vunpack.c.l.b16 %v4107
        %v4174 = vunpack.c.l.b16 %v4108
        %v4175 = vpack.c.b16 %v4144, %v4143
        %v4176 = vpack.c.b16 %v4146, %v4145
        %v4177 = vpack.c.b16 %v4148, %v4147
        %v4178 = vpack.c.b16 %v4150, %v4149
        %v4179 = vpack.c.b16 %v4152, %v4151
        %v4180 = vpack.c.b16 %v4154, %v4153
        %v4181 = vpack.c.b16 %v4156, %v4155
        %v4182 = vpack.c.b16 %v4158, %v4157
        %v4183 = vpack.c.b16 %v4160, %v4159
        %v4184 = vpack.c.b16 %v4162, %v4161
        %v4185 = vpack.c.b16 %v4164, %v4163
        %v4186 = vpack.c.b16 %v4166, %v4165
        %v4187 = vpack.c.b16 %v4168, %v4167
        %v4188 = vpack.c.b16 %v4170, %v4169
        %v4189 = vpack.c.b16 %v4172, %v4171
        %v4190 = vpack.c.b16 %v4174, %v4173
        %4207 = vmatprep.subr.bf16.mxu0 0
        %4208 = vmatpush1.bf16.msra.mxu0 %v4175
        %4209 = vmatprep.subr.bf16.mxu0 0
        %4210 = vmatpush1.bf16.msra.mxu0 %v4176
        %4211 = vmatprep.subr.bf16.mxu0 0
        %4212 = vmatpush1.bf16.msra.mxu0 %v4177
        %4213 = vmatprep.subr.bf16.mxu0 0
        %4214 = vmatpush1.bf16.msra.mxu0 %v4178
        %4215 = vmatprep.subr.bf16.mxu0 0
        %4216 = vmatpush1.bf16.msra.mxu0 %v4179
        %4217 = vmatprep.subr.bf16.mxu0 0
        %4218 = vmatpush1.bf16.msra.mxu0 %v4180
        %4219 = vmatprep.subr.bf16.mxu0 0
        %4220 = vmatpush1.bf16.msra.mxu0 %v4181
        %4221 = vmatprep.subr.bf16.mxu0 0
        %4222 = vmatpush1.bf16.msra.mxu0 %v4182
        %4223 = vmatprep.subr.bf16.mxu0 0
        %4224 = vmatpush1.bf16.msra.mxu0 %v4183
        %4225 = vmatprep.subr.bf16.mxu0 0
        %4226 = vmatpush1.bf16.msra.mxu0 %v4184
        %4227 = vmatprep.subr.bf16.mxu0 0
        %4228 = vmatpush1.bf16.msra.mxu0 %v4185
        %4229 = vmatprep.subr.bf16.mxu0 0
        %4230 = vmatpush1.bf16.msra.mxu0 %v4186
        %4231 = vmatprep.subr.bf16.mxu0 0
        %4232 = vmatpush1.bf16.msra.mxu0 %v4187
        %4233 = vmatprep.subr.bf16.mxu0 0
        %4234 = vmatpush1.bf16.msra.mxu0 %v4188
        %4235 = vmatprep.subr.bf16.mxu0 0
        %4236 = vmatpush1.bf16.msra.mxu0 %v4189
        %4237 = vmatprep.subr.bf16.mxu0 0
        %4238 = vmatpush1.bf16.msra.mxu0 %v4190
        %4239 = vmatprep.mubr.bf16.mxu0 %v4110
        %4240 = vmatmul.mubr.bf16.gmra.mrb[0].mxu0 %v4109
        %v4241 = vpop.f32.mrb[0].mxu0
        %v4242 = vadd.f32 0.0, %v4241
        %v4243 = vpop.f32.mrb[0].mxu0
        %v4244 = vpop.f32.mrb[0].mxu0
        %v4245 = vpop.f32.mrb[0].mxu0
        %4246 = vdwg.mxu0
        %v4279 = vunpack.c.l.b16 %v4045
        %v4280 = vunpack.c.l.b16 %v4046
        %v4281 = vunpack.c.l.b16 %v4047
        %v4282 = vunpack.c.l.b16 %v4048
        %v4283 = vunpack.c.l.b16 %v4049
        %v4284 = vunpack.c.l.b16 %v4050
        %v4285 = vunpack.c.l.b16 %v4051
        %v4286 = vunpack.c.l.b16 %v4052
        %v4287 = vunpack.c.l.b16 %v4053
        %v4288 = vunpack.c.l.b16 %v4054
        %v4289 = vunpack.c.l.b16 %v4055
        %v4290 = vunpack.c.l.b16 %v4056
        %v4291 = vunpack.c.l.b16 %v4057
        %v4292 = vunpack.c.l.b16 %v4058
        %v4293 = vunpack.c.l.b16 %v4059
        %v4294 = vunpack.c.l.b16 %v4060
        %v4295 = vunpack.c.l.b16 %v4061
        %v4296 = vunpack.c.l.b16 %v4062
        %v4297 = vunpack.c.l.b16 %v4063
        %v4298 = vunpack.c.l.b16 %v4064
        %v4299 = vunpack.c.l.b16 %v4065
        %v4300 = vunpack.c.l.b16 %v4066
        %v4301 = vunpack.c.l.b16 %v4067
        %v4302 = vunpack.c.l.b16 %v4068
        %v4303 = vunpack.c.l.b16 %v4069
        %v4304 = vunpack.c.l.b16 %v4070
        %v4305 = vunpack.c.l.b16 %v4071
        %v4306 = vunpack.c.l.b16 %v4072
        %v4307 = vunpack.c.l.b16 %v4073
        %v4308 = vunpack.c.l.b16 %v4074
        %v4309 = vunpack.c.l.b16 %v4075
        %v4310 = vunpack.c.l.b16 %v4076
        %v4311 = vpack.c.b16 %v4280, %v4279
        %v4312 = vpack.c.b16 %v4282, %v4281
        %v4313 = vpack.c.b16 %v4284, %v4283
        %v4314 = vpack.c.b16 %v4286, %v4285
        %v4315 = vpack.c.b16 %v4288, %v4287
        %v4316 = vpack.c.b16 %v4290, %v4289
        %v4317 = vpack.c.b16 %v4292, %v4291
        %v4318 = vpack.c.b16 %v4294, %v4293
        %v4319 = vpack.c.b16 %v4296, %v4295
        %v4320 = vpack.c.b16 %v4298, %v4297
        %v4321 = vpack.c.b16 %v4300, %v4299
        %v4322 = vpack.c.b16 %v4302, %v4301
        %v4323 = vpack.c.b16 %v4304, %v4303
        %v4324 = vpack.c.b16 %v4306, %v4305
        %v4325 = vpack.c.b16 %v4308, %v4307
        %v4326 = vpack.c.b16 %v4310, %v4309
        %4343 = vmatprep.subr.bf16.mxu0 0
        %4344 = vmatpush1.bf16.msra.mxu0 %v4311
        %4345 = vmatprep.subr.bf16.mxu0 0
        %4346 = vmatpush1.bf16.msra.mxu0 %v4312
        %4347 = vmatprep.subr.bf16.mxu0 0
        %4348 = vmatpush1.bf16.msra.mxu0 %v4313
        %4349 = vmatprep.subr.bf16.mxu0 0
        %4350 = vmatpush1.bf16.msra.mxu0 %v4314
        %4351 = vmatprep.subr.bf16.mxu0 0
        %4352 = vmatpush1.bf16.msra.mxu0 %v4315
        %4353 = vmatprep.subr.bf16.mxu0 0
        %4354 = vmatpush1.bf16.msra.mxu0 %v4316
        %4355 = vmatprep.subr.bf16.mxu0 0
        %4356 = vmatpush1.bf16.msra.mxu0 %v4317
        %4357 = vmatprep.subr.bf16.mxu0 0
        %4358 = vmatpush1.bf16.msra.mxu0 %v4318
        %4359 = vmatprep.subr.bf16.mxu0 0
        %4360 = vmatpush1.bf16.msra.mxu0 %v4319
        %4361 = vmatprep.subr.bf16.mxu0 0
        %4362 = vmatpush1.bf16.msra.mxu0 %v4320
        %4363 = vmatprep.subr.bf16.mxu0 0
        %4364 = vmatpush1.bf16.msra.mxu0 %v4321
        %4365 = vmatprep.subr.bf16.mxu0 0
        %4366 = vmatpush1.bf16.msra.mxu0 %v4322
        %4367 = vmatprep.subr.bf16.mxu0 0
        %4368 = vmatpush1.bf16.msra.mxu0 %v4323
        %4369 = vmatprep.subr.bf16.mxu0 0
        %4370 = vmatpush1.bf16.msra.mxu0 %v4324
        %4371 = vmatprep.subr.bf16.mxu0 0
        %4372 = vmatpush1.bf16.msra.mxu0 %v4325
        %4373 = vmatprep.subr.bf16.mxu0 0
        %4374 = vmatpush1.bf16.msra.mxu0 %v4326
        %4375 = vmatprep.mubr.bf16.mxu0 %v3895
        %4376 = vmatmul.mubr.bf16.gmra.mrb[0].mxu0 %v3894
        %v4377 = vpop.f32.mrb[0].mxu0
        %v4378 = vadd.f32 %v4242, %v4377
        %v4379 = vpop.f32.mrb[0].mxu0
        %v4380 = vpop.f32.mrb[0].mxu0
        %v4381 = vpop.f32.mrb[0].mxu0
        %4382 = vdwg.mxu0
        %v4383 = vadd.f32 %v4378, %v3900
        %v4384 = vxor.u32 %v4383, 2147483648
        %v4385 = vmul.f32 %v4384, 1.442695
        %v4386 = vpow.pop %v4385
        %v4387 = vadd.f32 %v4386, 1.0
        %v4388 = vrcp.pop %v4387
        %v4389 = vmul.f32 1.0, %v4388
        %4390 = vmatprep.subr.bf16.mxu0 0
        %4391 = vmatpush1.bf16.msra.mxu0 %v3966
        %4392 = vmatprep.subr.bf16.mxu0 0
        %4393 = vmatpush1.bf16.msra.mxu0 %v3967
        %4394 = vmatprep.subr.bf16.mxu0 0
        %4395 = vmatpush1.bf16.msra.mxu0 %v3968
        %4396 = vmatprep.subr.bf16.mxu0 0
        %4397 = vmatpush1.bf16.msra.mxu0 %v3969
        %4398 = vmatprep.subr.bf16.mxu0 0
        %4399 = vmatpush1.bf16.msra.mxu0 %v3970
        %4400 = vmatprep.subr.bf16.mxu0 0
        %4401 = vmatpush1.bf16.msra.mxu0 %v3971
        %4402 = vmatprep.subr.bf16.mxu0 0
        %4403 = vmatpush1.bf16.msra.mxu0 %v3972
        %4404 = vmatprep.subr.bf16.mxu0 0
        %4405 = vmatpush1.bf16.msra.mxu0 %v3973
        %4406 = vmatprep.subr.bf16.mxu0 0
        %4407 = vmatpush1.bf16.msra.mxu0 %v3974
        %4408 = vmatprep.subr.bf16.mxu0 0
        %4409 = vmatpush1.bf16.msra.mxu0 %v3975
        %4410 = vmatprep.subr.bf16.mxu0 0
        %4411 = vmatpush1.bf16.msra.mxu0 %v3976
        %4412 = vmatprep.subr.bf16.mxu0 0
        %4413 = vmatpush1.bf16.msra.mxu0 %v3977
        %4414 = vmatprep.subr.bf16.mxu0 0
        %4415 = vmatpush1.bf16.msra.mxu0 %v3978
        %4416 = vmatprep.subr.bf16.mxu0 0
        %4417 = vmatpush1.bf16.msra.mxu0 %v3979
        %4418 = vmatprep.subr.bf16.mxu0 0
        %4419 = vmatpush1.bf16.msra.mxu0 %v3980
        %4420 = vmatprep.subr.bf16.mxu0 0
        %4421 = vmatpush1.bf16.msra.mxu0 %v3981
        %4422 = vmatprep.mubr.bf16.mxu0 %v4110
        %4423 = vmatmul.mubr.bf16.gmra.mrb[0].mxu0 %v4109
        %v4424 = vpop.f32.mrb[0].mxu0
        %v4425 = vadd.f32 %v3900, %v4424
        %v4426 = vpop.f32.mrb[0].mxu0
        %v4427 = vpop.f32.mrb[0].mxu0
        %v4428 = vpop.f32.mrb[0].mxu0
        %4429 = vdwg.mxu0
        %v4430 = vxor.u32 %v4425, 2147483648
        %v4431 = vmul.f32 %v4430, 1.442695
        %v4432 = vpow.pop %v4431
        %v4433 = vadd.f32 %v4432, 1.0
        %v4434 = vrcp.pop %v4433
        %v4435 = vmul.f32 1.0, %v4434
        %v4436 = vpack.c.bf16 %v3858, %v3858
        %v4437 = vpack.c.bf16 %v3859, %v3859
        %v4439 = vshrl.u32 %v4436, 16
        %v4441 = vshll.u32 %v4436, 16
        %v4443 = vrot.slane %v4441, 1
        %v4444 = vor.u32 %v4439, %v4443
        %v4446 = vshrl.u32 %v4437, 16
        %v4448 = vshll.u32 %v4437, 16
        %v4450 = vrot.slane %v4448, 1
        %v4451 = vor.u32 %v4446, %v4450
        %4454 = vmatprep.subr.bf16.mxu0 0
        %4455 = vmatpush1.bf16.msra.mxu0 %v4175
        %4456 = vmatprep.subr.bf16.mxu0 0
        %4457 = vmatpush1.bf16.msra.mxu0 %v4176
        %4458 = vmatprep.subr.bf16.mxu0 0
        %4459 = vmatpush1.bf16.msra.mxu0 %v4177
        %4460 = vmatprep.subr.bf16.mxu0 0
        %4461 = vmatpush1.bf16.msra.mxu0 %v4178
        %4462 = vmatprep.subr.bf16.mxu0 0
        %4463 = vmatpush1.bf16.msra.mxu0 %v4179
        %4464 = vmatprep.subr.bf16.mxu0 0
        %4465 = vmatpush1.bf16.msra.mxu0 %v4180
        %4466 = vmatprep.subr.bf16.mxu0 0
        %4467 = vmatpush1.bf16.msra.mxu0 %v4181
        %4468 = vmatprep.subr.bf16.mxu0 0
        %4469 = vmatpush1.bf16.msra.mxu0 %v4182
        %4470 = vmatprep.subr.bf16.mxu0 0
        %4471 = vmatpush1.bf16.msra.mxu0 %v4183
        %4472 = vmatprep.subr.bf16.mxu0 0
        %4473 = vmatpush1.bf16.msra.mxu0 %v4184
        %4474 = vmatprep.subr.bf16.mxu0 0
        %4475 = vmatpush1.bf16.msra.mxu0 %v4185
        %4476 = vmatprep.subr.bf16.mxu0 0
        %4477 = vmatpush1.bf16.msra.mxu0 %v4186
        %4478 = vmatprep.subr.bf16.mxu0 0
        %4479 = vmatpush1.bf16.msra.mxu0 %v4187
        %4480 = vmatprep.subr.bf16.mxu0 0
        %4481 = vmatpush1.bf16.msra.mxu0 %v4188
        %4482 = vmatprep.subr.bf16.mxu0 0
        %4483 = vmatpush1.bf16.msra.mxu0 %v4189
        %4484 = vmatprep.subr.bf16.mxu0 0
        %4485 = vmatpush1.bf16.msra.mxu0 %v4190
        %4486 = vmatprep.mubr.bf16.mxu0 %v4451
        %4487 = vmatmul.mubr.bf16.gmra.mrb[0].mxu0 %v4444
        %v4488 = vpop.f32.mrb[0].mxu0
        %v4489 = vadd.f32 0.0, %v4488
        %v4490 = vpop.f32.mrb[0].mxu0
        %v4491 = vpop.f32.mrb[0].mxu0
        %v4492 = vpop.f32.mrb[0].mxu0
        %4493 = vdwg.mxu0
        %4494 = vmatprep.subr.bf16.mxu0 0
        %4495 = vmatpush1.bf16.msra.mxu0 %v4311
        %4496 = vmatprep.subr.bf16.mxu0 0
        %4497 = vmatpush1.bf16.msra.mxu0 %v4312
        %4498 = vmatprep.subr.bf16.mxu0 0
        %4499 = vmatpush1.bf16.msra.mxu0 %v4313
        %4500 = vmatprep.subr.bf16.mxu0 0
        %4501 = vmatpush1.bf16.msra.mxu0 %v4314
        %4502 = vmatprep.subr.bf16.mxu0 0
        %4503 = vmatpush1.bf16.msra.mxu0 %v4315
        %4504 = vmatprep.subr.bf16.mxu0 0
        %4505 = vmatpush1.bf16.msra.mxu0 %v4316
        %4506 = vmatprep.subr.bf16.mxu0 0
        %4507 = vmatpush1.bf16.msra.mxu0 %v4317
        %4508 = vmatprep.subr.bf16.mxu0 0
        %4509 = vmatpush1.bf16.msra.mxu0 %v4318
        %4510 = vmatprep.subr.bf16.mxu0 0
        %4511 = vmatpush1.bf16.msra.mxu0 %v4319
        %4512 = vmatprep.subr.bf16.mxu0 0
        %4513 = vmatpush1.bf16.msra.mxu0 %v4320
        %4514 = vmatprep.subr.bf16.mxu0 0
        %4515 = vmatpush1.bf16.msra.mxu0 %v4321
        %4516 = vmatprep.subr.bf16.mxu0 0
        %4517 = vmatpush1.bf16.msra.mxu0 %v4322
        %4518 = vmatprep.subr.bf16.mxu0 0
        %4519 = vmatpush1.bf16.msra.mxu0 %v4323
        %4520 = vmatprep.subr.bf16.mxu0 0
        %4521 = vmatpush1.bf16.msra.mxu0 %v4324
        %4522 = vmatprep.subr.bf16.mxu0 0
        %4523 = vmatpush1.bf16.msra.mxu0 %v4325
        %4524 = vmatprep.subr.bf16.mxu0 0
        %4525 = vmatpush1.bf16.msra.mxu0 %v4326
        %4526 = vmatprep.mubr.bf16.mxu0 %v4110
        %4527 = vmatmul.mubr.bf16.gmra.mrb[0].mxu0 %v4109
        %v4528 = vpop.f32.mrb[0].mxu0
        %v4529 = vadd.f32 %v4489, %v4528
        %v4530 = vpop.f32.mrb[0].mxu0
        %v4531 = vpop.f32.mrb[0].mxu0
        %v4532 = vpop.f32.mrb[0].mxu0
        %4533 = vdwg.mxu0
        %v4534 = vadd.f32 %v4529, %v3900
        %v4535 = vxor.u32 %v4534, 2147483648
        %v4536 = vmul.f32 %v4535, 1.442695
        %v4537 = vpow.pop %v4536
        %v4538 = vadd.f32 %v4537, 1.0
        %v4539 = vrcp.pop %v4538
        %v4540 = vmul.f32 1.0, %v4539
        %vm4541 = vcmask 519168
        %4542 = vst.msk [vmem:[%s576] sm:$0xf] %vm4541, %v4043
        %4543 = vst.msk [vmem:[%s576 + $0x4] sm:$0xf] %vm4541, %v4389
        %4544 = vst.msk [vmem:[%s576 + $0x8] sm:$0xf] %vm4541, %v4435
        %4545 = vst.msk [vmem:[%s576 + $0xc] sm:$0xf] %vm4541, %v4540
        %s4546 = smul.u32 2, %s30
        %p4547 = scmp.lt.s32.totalorder %s4546, 3
        %s4548 = scalar_select %p4547, %s4546, 3
        %s4549 = smul.addr %s4548, 8
        %s4550 = scalar_lea.vmem %s16, %s4549
        // Predicated region
        $region101: #{cae_forward.1} parent=83 // pred_check
          %p4551 = pneg %p389
        $region102: #{cae_forward.1} parent=83 // pred_check_branch
          %4553 = sbr.rel (%p4551) target = $region104
        $region103: #{cae_forward.1} parent=83 // pred_region
          %s4554 = smul.u32 2, %s30
        $region104: #{cae_forward.1} parent=83 // pred_fallthru
          _
      $region84: #{cae_forward.1} parent=5 // pred_fallthru
        _
      %p4555 = scmp.le.s32.totalorder 2, %s25
      // Predicated region
      $region105: #{cae_forward.1} parent=5 // pred_check
        %p4556 = pneg %p4555
      $region106: #{cae_forward.1} parent=5 // pred_check_branch
        %4558 = sbr.rel (%p4556) target = $region108
      $region107: #{cae_forward.1} parent=5 // pred_region
        %s4559 = ssub.s32 %s25, 2
        // Predicated region
        $region109: #{cae_forward.1} parent=107 // pred_check
          %p4560 = pneg %p395
        $region110: #{cae_forward.1} parent=107 // pred_check_branch
          %4562 = sbr.rel (%p4560) target = $region112
        $region111: #{cae_forward.1} parent=107 // pred_region
          %s4563 = smul.u32 2, %s31
          %p4564 = scmp.lt.s32.totalorder %s4563, 3
          %s4565 = scalar_select %p4564, %s4563, 3
          %s4566 = smul.addr %s4565, 8
          %s4567 = scalar_lea.vmem %s16, %s4566
        $region112: #{cae_forward.1} parent=107 // pred_fallthru
          _
      $region108: #{cae_forward.1} parent=5 // pred_fallthru
        _
    $region6: #{cae_forward.1} parent=1 // loop_footer
      %s29 = sadd.s32 1, %s25
    $region7: #{cae_forward.1} parent=1 // loop_footer_branch
      %24 = sbr.rel target = $region3
    $region8: #{cae_forward.1} parent=1 // loop_exit
      _
    %4568 = vsyncpa [#allocation4], 1
    %s4569 = scalar_lea.sflag [#allocation4], 1
    %4570 = vsyncpa %s4569, 1
    %4571 = vsyncpa [#allocation6], 1
    %4572 = vsyncpa [#allocation9], 1

</llo_original>
